<compile_context>
chip_gen: v6e
topology: v6e:2x2x1
jax: 0.10.0
libtpu: 0.0.40
codegen_flags: <defaults>
</compile_context>

<pallas_src>
import jax
import jax.numpy as jnp
from jax.experimental import pallas as pl
from jax.experimental.pallas import tpu as pltpu

# ----------------------------- small synthetic config -----------------------------
BATCH = 2
FRAMES = 4
CHANNELS = 3
IMG = 16
TUBELET = (2, 4, 4)                 # (t, h, w) tubelet size == Conv3d kernel == stride
HIDDEN = 32
NUM_HEADS = 4
HEAD_DIM = HIDDEN // NUM_HEADS
INTERMEDIATE = 64
NUM_LAYERS = 2
OUT_FEATURES = 5
OUT_PAD = 128                       # lane-dense classifier output (sliced back in wrapper)
LN_EPS = 1e-6

NUM_PATCHES = (FRAMES // TUBELET[0]) * (IMG // TUBELET[1]) * (IMG // TUBELET[2])  # 32
SEQ = NUM_PATCHES + 1                                                              # 33 (patches + CLS)
PATCH_DIM = CHANNELS * TUBELET[0] * TUBELET[1] * TUBELET[2]                        # 96

# Row indices inside the packed small-parameter slabs.
G_PATCH_B, G_CLS_POS, G_FLN_G, G_FLN_B, G_CLS_B = 0, 1, 2, 3, 4
L_LN1G, L_LN1B, L_LN2G, L_LN2B, L_BQKV, L_BO, L_BI, L_BOUT = 0, 1, 2, 3, 4, 5, 6, 7


def _gelu_fast(x):
    # HF "gelu_fast" (tanh approximation), the Vivit default hidden_act.
    # TODO(synk): if the target checkpoint uses exact-erf "gelu", swap this for jax.nn.gelu(approximate=False).
    return 0.5 * x * (1.0 + jnp.tanh(0.7978845608028654 * x * (1.0 + 0.044715 * x * x)))


def _layer_norm(v, gamma, beta):
    mu = jnp.mean(v, axis=-1, keepdims=True)
    var = jnp.mean((v - mu) ** 2, axis=-1, keepdims=True)
    return (v - mu) * jax.lax.rsqrt(var + LN_EPS) * gamma + beta


# ----------------------------------- fused kernel ---------------------------------
def _vivit_kernel(
    patches_ref,     # (1, NUM_PATCHES, PATCH_DIM) f32   per-batch block
    patch_w_ref,     # (PATCH_DIM, HIDDEN)         bf16  resident
    pos_patch_ref,   # (NUM_PATCHES, HIDDEN)       f32   resident
    gsmall_ref,      # (8, 128)                    f32   packed global small params
    cls_w_ref,       # (HIDDEN, OUT_PAD)           bf16  classifier weight (lane-dense)
    wqkv_ref,        # (L, HIDDEN, 3*HIDDEN)       bf16  fused QKV weights
    wo_ref,          # (L, HIDDEN, HIDDEN)         bf16
    wi_ref,          # (L, HIDDEN, INTERMEDIATE)   bf16
    wout_ref,        # (L, INTERMEDIATE, HIDDEN)   bf16
    lsmall_ref,      # (L, 8, 128)                 f32   packed per-layer small params
    logits_ref,      # (1, 1, OUT_PAD)             f32   per-batch output block
):
    g = gsmall_ref[...]                                         # one vreg
    patch_b = g[G_PATCH_B:G_PATCH_B + 1, :HIDDEN]               # (1, H)
    cls_pos = g[G_CLS_POS:G_CLS_POS + 1, :HIDDEN]               # (1, H)  cls_token + pos[0]

    # ---- tubelet "Conv3d" embedding + positional embedding; CLS token stored LAST ----
    emb = (
        jnp.dot(patches_ref[0].astype(jnp.bfloat16), patch_w_ref[...],
                preferred_element_type=jnp.float32)
        + patch_b + pos_patch_ref[...]
    )                                                           # (NUM_PATCHES, HIDDEN)
    x = jnp.concatenate([emb, cls_pos], axis=0)                 # (SEQ, HIDDEN)

    scale = 1.0 / (HEAD_DIM ** 0.5)

    # ---- encoder layers, fully unrolled (NUM_LAYERS = 2), weights resident in VMEM ----
    for layer in range(NUM_LAYERS):
        ls = lsmall_ref[layer]                                  # (8, 128) — one vreg
        ln1_g = ls[L_LN1G:L_LN1G + 1, :HIDDEN]
        ln1_b = ls[L_LN1B:L_LN1B + 1, :HIDDEN]
        ln2_g = ls[L_LN2G:L_LN2G + 1, :HIDDEN]
        ln2_b = ls[L_LN2B:L_LN2B + 1, :HIDDEN]
        bqkv = ls[L_BQKV:L_BQKV + 1, :3 * HIDDEN]
        bo = ls[L_BO:L_BO + 1, :HIDDEN]
        bi = ls[L_BI:L_BI + 1, :INTERMEDIATE]
        bout = ls[L_BOUT:L_BOUT + 1, :HIDDEN]

        # --- pre-LN self-attention ---
        h = _layer_norm(x, ln1_g, ln1_b)
        qkv = jnp.dot(h.astype(jnp.bfloat16), wqkv_ref[layer],
                      preferred_element_type=jnp.float32) + bqkv     # (SEQ, 3*HIDDEN)

        # Per-head scores/softmax/context: only one (SEQ, SEQ) block live at a time.
        ctx_heads = []
        for n in range(NUM_HEADS):
            q_n = qkv[:, n * HEAD_DIM:(n + 1) * HEAD_DIM]
            k_n = qkv[:, HIDDEN + n * HEAD_DIM:HIDDEN + (n + 1) * HEAD_DIM]
            v_n = qkv[:, 2 * HIDDEN + n * HEAD_DIM:2 * HIDDEN + (n + 1) * HEAD_DIM]
            s = jax.lax.dot_general(q_n, k_n, (((1,), (1,)), ((), ())),
                                    preferred_element_type=jnp.float32) * scale   # (SEQ, SEQ)
            s = s - jnp.max(s, axis=-1, keepdims=True)
            e = jnp.exp(s)
            p = e * pl.reciprocal(jnp.sum(e, axis=-1, keepdims=True), approx=True)
            ctx_heads.append(jnp.dot(p, v_n, preferred_element_type=jnp.float32))  # (SEQ, HD)
        ctx = jnp.concatenate(ctx_heads, axis=-1)                    # (SEQ, HIDDEN) merged heads

        attn = jnp.dot(ctx.astype(jnp.bfloat16), wo_ref[layer],
                       preferred_element_type=jnp.float32) + bo
        x = x + attn                                                 # residual

        # --- pre-LN MLP ---
        h2 = _layer_norm(x, ln2_g, ln2_b)
        m = _gelu_fast(jnp.dot(h2.astype(jnp.bfloat16), wi_ref[layer],
                               preferred_element_type=jnp.float32) + bi)
        m = jnp.dot(m.astype(jnp.bfloat16), wout_ref[layer],
                    preferred_element_type=jnp.float32) + bout
        x = x + m                                                    # residual

    # ---- final LayerNorm on the CLS token (last row) + Linear classifier ----
    cls_tok = x[SEQ - 1:SEQ, :]
    cln = _layer_norm(cls_tok,
                      g[G_FLN_G:G_FLN_G + 1, :HIDDEN],
                      g[G_FLN_B:G_FLN_B + 1, :HIDDEN])
    logits_ref[0] = (
        jnp.dot(cln.astype(jnp.bfloat16), cls_w_ref[...], preferred_element_type=jnp.float32)
        + g[G_CLS_B:G_CLS_B + 1, :]
    )


# ------------------------------- pallas_call wrapper -------------------------------
def _resident(arr):
    nd = arr.ndim
    return pl.BlockSpec(arr.shape, lambda b: (0,) * nd)


def _row128(v):
    v = jnp.asarray(v, jnp.float32).reshape(-1)
    return jnp.zeros((128,), jnp.float32).at[: v.shape[0]].set(v)


def vivit_forward(x, params):
    """x: (B, T, C, H, W) float32 -> logits (B, OUT_FEATURES)."""
    B = x.shape[0]
    tt, th, tw = TUBELET

    # Tubelet "Conv3d" embedding: stride == kernel, so it is patchify + matmul.
    # Flatten order per patch is (C, t, h, w) to match the Conv3d weight flattening.
    xt = jnp.transpose(x, (0, 2, 1, 3, 4))  # (B, C, T, H, W)
    xt = xt.reshape(B, CHANNELS, FRAMES // tt, tt, IMG // th, th, IMG // tw, tw)
    xt = jnp.transpose(xt, (0, 2, 4, 6, 1, 3, 5, 7))  # (B, T', H', W', C, tt, th, tw)
    patches = xt.reshape(B, NUM_PATCHES, PATCH_DIM)

    layers = params["layers"]

    # Dense weight slabs: lane-dense 2-D, stacked on a leading L axis, bf16 MXU operands.
    wqkv = jnp.stack([jnp.concatenate([lp["wq"], lp["wk"], lp["wv"]], axis=1)
                      for lp in layers]).astype(jnp.bfloat16)        # (L, H, 3H)
    wo = jnp.stack([lp["wo"] for lp in layers]).astype(jnp.bfloat16)      # (L, H, H)
    wi = jnp.stack([lp["wi"] for lp in layers]).astype(jnp.bfloat16)      # (L, H, I)
    wout = jnp.stack([lp["wout"] for lp in layers]).astype(jnp.bfloat16)  # (L, I, H)

    # Packed per-layer small params: (L, 8, 128).
    lsmall = jnp.stack([
        jnp.stack([
            _row128(lp["ln1_g"]), _row128(lp["ln1_b"]),
            _row128(lp["ln2_g"]), _row128(lp["ln2_b"]),
            _row128(jnp.concatenate([lp["bq"].reshape(-1), lp["bk"].reshape(-1),
                                     lp["bv"].reshape(-1)])),
            _row128(lp["bo"]), _row128(lp["bi"]), _row128(lp["bout"]),
        ])
        for lp in layers
    ])                                                                # (L, 8, 128)

    # Packed global small params: (8, 128).
    zeros = jnp.zeros((128,), jnp.float32)
    gsmall = jnp.stack([
        _row128(params["patch_b"]),
        _row128(params["cls_token"] + params["pos_emb"][0:1, :]),     # CLS token + its pos emb
        _row128(params["ln_g"]),
        _row128(params["ln_b"]),
        _row128(params["cls_b"]),
        zeros, zeros, zeros,
    ])                                                                # (8, 128)

    patch_w = params["patch_w"].astype(jnp.bfloat16)                  # (PATCH_DIM, H)
    pos_patch = params["pos_emb"][1:, :]                              # (NUM_PATCHES, H)
    cls_w = (jnp.zeros((HIDDEN, OUT_PAD), jnp.float32)
             .at[:, :OUT_FEATURES].set(params["cls_w"])).astype(jnp.bfloat16)

    inputs = [patches, patch_w, pos_patch, gsmall, cls_w, wqkv, wo, wi, wout, lsmall]
    in_specs = [
        pl.BlockSpec((1, NUM_PATCHES, PATCH_DIM), lambda b: (b, 0, 0)),   # per-batch patches
        _resident(patch_w), _resident(pos_patch), _resident(gsmall), _resident(cls_w),
        _resident(wqkv), _resident(wo), _resident(wi), _resident(wout), _resident(lsmall),
    ]

    logits_pad = pl.pallas_call(
        _vivit_kernel,
        out_shape=jax.ShapeDtypeStruct((B, 1, OUT_PAD), jnp.float32),
        grid=(B,),
        in_specs=in_specs,
        out_specs=pl.BlockSpec((1, 1, OUT_PAD), lambda b: (b, 0, 0)),
        compiler_params=pltpu.CompilerParams(
            dimension_semantics=("parallel",),       # batch across TCs on v7x; cheap loop on v5e/v6e
        ),
    )(*inputs)

    return logits_pad[:, 0, :OUT_FEATURES]


# --------------------------------- parameter init ----------------------------------
def init_params(key):
    keys = iter(jax.random.split(key, 64))

    def nrm(shape, scale=0.02):
        return (scale * jax.random.normal(next(keys), shape)).astype(jnp.float32)

    params = {
        "patch_w": nrm((PATCH_DIM, HIDDEN)),              # Conv3d weight, flattened (C, t, h, w)
        "patch_b": jnp.zeros((1, HIDDEN), jnp.float32),   # Conv3d bias
        "cls_token": nrm((1, HIDDEN)),
        "pos_emb": nrm((SEQ, HIDDEN)),
        "ln_g": jnp.ones((1, HIDDEN), jnp.float32),       # final layernorm
        "ln_b": jnp.zeros((1, HIDDEN), jnp.float32),
        "cls_w": nrm((HIDDEN, OUT_FEATURES)),             # classifier
        "cls_b": jnp.zeros((1, OUT_FEATURES), jnp.float32),
        "layers": [],
    }
    for _ in range(NUM_LAYERS):
        lp = {
            "ln1_g": jnp.ones((1, HIDDEN), jnp.float32),
            "ln1_b": jnp.zeros((1, HIDDEN), jnp.float32),
            "wq": nrm((HIDDEN, HIDDEN)), "bq": jnp.zeros((1, HIDDEN), jnp.float32),
            "wk": nrm((HIDDEN, HIDDEN)), "bk": jnp.zeros((1, HIDDEN), jnp.float32),
            "wv": nrm((HIDDEN, HIDDEN)), "bv": jnp.zeros((1, HIDDEN), jnp.float32),
            "wo": nrm((HIDDEN, HIDDEN)), "bo": jnp.zeros((1, HIDDEN), jnp.float32),
            "ln2_g": jnp.ones((1, HIDDEN), jnp.float32),
            "ln2_b": jnp.zeros((1, HIDDEN), jnp.float32),
            "wi": nrm((HIDDEN, INTERMEDIATE)), "bi": jnp.zeros((1, INTERMEDIATE), jnp.float32),
            "wout": nrm((INTERMEDIATE, HIDDEN)), "bout": jnp.zeros((1, HIDDEN), jnp.float32),
        }
        params["layers"].append(lp)
    return params


if __name__ == "__main__":
    key = jax.random.PRNGKey(0)
    pkey, xkey = jax.random.split(key)
    params = init_params(pkey)
    x = jax.random.normal(xkey, (BATCH, FRAMES, CHANNELS, IMG, IMG), dtype=jnp.float32)

    logits = jax.jit(vivit_forward)(x, params)
    logits = jax.block_until_ready(logits)

    assert logits.shape == (BATCH, OUT_FEATURES)
    assert bool(jnp.all(jnp.isfinite(logits)))
    print("KERNEL_OK")
</pallas_src>

<mosaic_0001>
module attributes {stable_mosaic.version = 11 : i64} {
  func.func @_vivit_kernel(%arg0: i32, %arg1: memref<1x32x96xf32, #tpu.memory_space<vmem>>, %arg2: memref<96x32xbf16, #tpu.memory_space<vmem>>, %arg3: memref<32x32xf32, #tpu.memory_space<vmem>>, %arg4: memref<8x128xf32, #tpu.memory_space<vmem>>, %arg5: memref<32x128xbf16, #tpu.memory_space<vmem>>, %arg6: memref<2x32x96xbf16, #tpu.memory_space<vmem>>, %arg7: memref<2x32x32xbf16, #tpu.memory_space<vmem>>, %arg8: memref<2x32x64xbf16, #tpu.memory_space<vmem>>, %arg9: memref<2x64x32xbf16, #tpu.memory_space<vmem>>, %arg10: memref<2x8x128xf32, #tpu.memory_space<vmem>>, %arg11: memref<1x1x128xf32, #tpu.memory_space<vmem>>) attributes {dimension_semantics = [#tpu.dimension_semantics<parallel>], iteration_bounds = array<i64: 2>, scalar_prefetch = 0 : i64, scratch_operands = 0 : i64, tpu.core_type = #tpu.core_type<tc>, window_params = [{transform_indices = @transform_0, window_bounds = array<i64: 1, 32, 96>}, {pipeline_mode = #tpu.pipeline_mode<synchronous>, transform_indices = @transform_1, window_bounds = array<i64: 96, 32>}, {pipeline_mode = #tpu.pipeline_mode<synchronous>, transform_indices = @transform_2, window_bounds = array<i64: 32, 32>}, {pipeline_mode = #tpu.pipeline_mode<synchronous>, transform_indices = @transform_3, window_bounds = array<i64: 8, 128>}, {pipeline_mode = #tpu.pipeline_mode<synchronous>, transform_indices = @transform_4, window_bounds = array<i64: 32, 128>}, {pipeline_mode = #tpu.pipeline_mode<synchronous>, transform_indices = @transform_5, window_bounds = array<i64: 2, 32, 96>}, {pipeline_mode = #tpu.pipeline_mode<synchronous>, transform_indices = @transform_6, window_bounds = array<i64: 2, 32, 32>}, {pipeline_mode = #tpu.pipeline_mode<synchronous>, transform_indices = @transform_7, window_bounds = array<i64: 2, 32, 64>}, {pipeline_mode = #tpu.pipeline_mode<synchronous>, transform_indices = @transform_8, window_bounds = array<i64: 2, 64, 32>}, {pipeline_mode = #tpu.pipeline_mode<synchronous>, transform_indices = @transform_9, window_bounds = array<i64: 2, 8, 128>}, {transform_indices = @transform_10, window_bounds = array<i64: 1, 1, 128>}]} {
    %c0 = arith.constant 0 : index
    %c0_0 = arith.constant 0 : index
    %0 = vector.load %arg4[%c0, %c0_0] : memref<8x128xf32, #tpu.memory_space<vmem>>, vector<8x128xf32>
    %1 = vector.extract_strided_slice %0 {offsets = [0, 0], sizes = [1, 32], strides = [1, 1]} : vector<8x128xf32> to vector<1x32xf32>
    %2 = vector.extract_strided_slice %0 {offsets = [1, 0], sizes = [1, 32], strides = [1, 1]} : vector<8x128xf32> to vector<1x32xf32>
    %c0_1 = arith.constant 0 : index
    %c0_2 = arith.constant 0 : index
    %c0_3 = arith.constant 0 : index
    %3 = vector.load %arg1[%c0_1, %c0_2, %c0_3] : memref<1x32x96xf32, #tpu.memory_space<vmem>>, vector<1x32x96xf32>
    %4 = vector.shape_cast %3 : vector<1x32x96xf32> to vector<32x96xf32>
    %5 = arith.truncf %4 : vector<32x96xf32> to vector<32x96xbf16>
    %c0_4 = arith.constant 0 : index
    %c0_5 = arith.constant 0 : index
    %6 = vector.load %arg2[%c0_4, %c0_5] : memref<96x32xbf16, #tpu.memory_space<vmem>>, vector<96x32xbf16>
    %cst = arith.constant dense<0.000000e+00> : vector<32x32xf32>
    %7 = tpu.matmul %5, %6, %cst {dimension_numbers = #tpu.dot_dimension_numbers<[1], [0], [0], [1], [0, 0, 1, 1], [], []>} : vector<32x96xbf16>, vector<96x32xbf16>, vector<32x32xf32> -> vector<32x32xf32>
    %8 = vector.broadcast %1 : vector<1x32xf32> to vector<32x32xf32>
    %9 = arith.addf %7, %8 : vector<32x32xf32>
    %c0_6 = arith.constant 0 : index
    %c0_7 = arith.constant 0 : index
    %10 = vector.load %arg3[%c0_6, %c0_7] : memref<32x32xf32, #tpu.memory_space<vmem>>, vector<32x32xf32>
    %11 = arith.addf %9, %10 : vector<32x32xf32>
    %12 = tpu.concatenate %11, %2 in 0 : vector<32x32xf32>, vector<1x32xf32> -> vector<33x32xf32>
    %c0_8 = arith.constant 0 : index
    %c0_9 = arith.constant 0 : index
    %c0_10 = arith.constant 0 : index
    %13 = vector.load %arg10[%c0_8, %c0_9, %c0_10] : memref<2x8x128xf32, #tpu.memory_space<vmem>>, vector<1x8x128xf32>
    %14 = vector.shape_cast %13 : vector<1x8x128xf32> to vector<8x128xf32>
    %15 = vector.extract_strided_slice %14 {offsets = [0, 0], sizes = [1, 32], strides = [1, 1]} : vector<8x128xf32> to vector<1x32xf32>
    %16 = vector.extract_strided_slice %14 {offsets = [1, 0], sizes = [1, 32], strides = [1, 1]} : vector<8x128xf32> to vector<1x32xf32>
    %17 = vector.extract_strided_slice %14 {offsets = [2, 0], sizes = [1, 32], strides = [1, 1]} : vector<8x128xf32> to vector<1x32xf32>
    %18 = vector.extract_strided_slice %14 {offsets = [3, 0], sizes = [1, 32], strides = [1, 1]} : vector<8x128xf32> to vector<1x32xf32>
    %19 = vector.extract_strided_slice %14 {offsets = [4, 0], sizes = [1, 96], strides = [1, 1]} : vector<8x128xf32> to vector<1x96xf32>
    %20 = vector.extract_strided_slice %14 {offsets = [5, 0], sizes = [1, 32], strides = [1, 1]} : vector<8x128xf32> to vector<1x32xf32>
    %21 = vector.extract_strided_slice %14 {offsets = [6, 0], sizes = [1, 64], strides = [1, 1]} : vector<8x128xf32> to vector<1x64xf32>
    %22 = vector.extract_strided_slice %14 {offsets = [7, 0], sizes = [1, 32], strides = [1, 1]} : vector<8x128xf32> to vector<1x32xf32>
    %cst_11 = arith.constant dense<0.000000e+00> : vector<33xf32>
    %23 = vector.multi_reduction <add>, %12, %cst_11 [1] : vector<33x32xf32> to vector<33xf32>
    %24 = vector.shape_cast %23 : vector<33xf32> to vector<33x1xf32>
    %cst_12 = arith.constant 3.200000e+01 : f32
    %25 = vector.broadcast %cst_12 : f32 to vector<33x1xf32>
    %26 = arith.divf %24, %25 : vector<33x1xf32>
    %27 = vector.broadcast %26 : vector<33x1xf32> to vector<33x32xf32>
    %28 = arith.subf %12, %27 : vector<33x32xf32>
    %29 = arith.mulf %28, %28 : vector<33x32xf32>
    %cst_13 = arith.constant dense<0.000000e+00> : vector<33xf32>
    %30 = vector.multi_reduction <add>, %29, %cst_13 [1] : vector<33x32xf32> to vector<33xf32>
    %31 = vector.shape_cast %30 : vector<33xf32> to vector<33x1xf32>
    %cst_14 = arith.constant 3.200000e+01 : f32
    %32 = vector.broadcast %cst_14 : f32 to vector<33x1xf32>
    %33 = arith.divf %31, %32 : vector<33x1xf32>
    %34 = vector.broadcast %26 : vector<33x1xf32> to vector<33x32xf32>
    %35 = arith.subf %12, %34 : vector<33x32xf32>
    %cst_15 = arith.constant 9.99999997E-7 : f32
    %36 = vector.broadcast %cst_15 : f32 to vector<33x1xf32>
    %37 = arith.addf %33, %36 : vector<33x1xf32>
    %38 = math.rsqrt %37 : vector<33x1xf32>
    %39 = vector.broadcast %38 : vector<33x1xf32> to vector<33x32xf32>
    %40 = arith.mulf %35, %39 : vector<33x32xf32>
    %41 = vector.broadcast %15 : vector<1x32xf32> to vector<33x32xf32>
    %42 = arith.mulf %40, %41 : vector<33x32xf32>
    %43 = vector.broadcast %16 : vector<1x32xf32> to vector<33x32xf32>
    %44 = arith.addf %42, %43 : vector<33x32xf32>
    %45 = arith.truncf %44 : vector<33x32xf32> to vector<33x32xbf16>
    %c0_16 = arith.constant 0 : index
    %c0_17 = arith.constant 0 : index
    %c0_18 = arith.constant 0 : index
    %46 = vector.load %arg6[%c0_16, %c0_17, %c0_18] : memref<2x32x96xbf16, #tpu.memory_space<vmem>>, vector<1x32x96xbf16>
    %47 = vector.shape_cast %46 : vector<1x32x96xbf16> to vector<32x96xbf16>
    %cst_19 = arith.constant dense<0.000000e+00> : vector<33x96xf32>
    %48 = tpu.matmul %45, %47, %cst_19 {dimension_numbers = #tpu.dot_dimension_numbers<[1], [0], [0], [1], [0, 0, 1, 1], [], []>} : vector<33x32xbf16>, vector<32x96xbf16>, vector<33x96xf32> -> vector<33x96xf32>
    %49 = vector.broadcast %19 : vector<1x96xf32> to vector<33x96xf32>
    %50 = arith.addf %48, %49 : vector<33x96xf32>
    %51 = vector.extract_strided_slice %50 {offsets = [0, 0], sizes = [33, 8], strides = [1, 1]} : vector<33x96xf32> to vector<33x8xf32>
    %52 = vector.extract_strided_slice %50 {offsets = [0, 32], sizes = [33, 8], strides = [1, 1]} : vector<33x96xf32> to vector<33x8xf32>
    %53 = vector.extract_strided_slice %50 {offsets = [0, 64], sizes = [33, 8], strides = [1, 1]} : vector<33x96xf32> to vector<33x8xf32>
    %cst_20 = arith.constant dense<0.000000e+00> : vector<33x33xf32>
    %54 = tpu.matmul %51, %52, %cst_20 {dimension_numbers = #tpu.dot_dimension_numbers<[1], [1], [0], [0], [0, 0, 1, 0], [], []>} : vector<33x8xf32>, vector<33x8xf32>, vector<33x33xf32> -> vector<33x33xf32>
    %cst_21 = arith.constant 0.353553385 : f32
    %55 = vector.broadcast %cst_21 : f32 to vector<33x33xf32>
    %56 = arith.mulf %54, %55 : vector<33x33xf32>
    %cst_22 = arith.constant dense<0xFF800000> : vector<33xf32>
    %57 = vector.multi_reduction <maximumf>, %56, %cst_22 [1] : vector<33x33xf32> to vector<33xf32>
    %58 = vector.shape_cast %57 : vector<33xf32> to vector<33x1xf32>
    %59 = vector.broadcast %58 : vector<33x1xf32> to vector<33x33xf32>
    %60 = arith.subf %56, %59 : vector<33x33xf32>
    %61 = math.exp %60 : vector<33x33xf32>
    %cst_23 = arith.constant dense<0.000000e+00> : vector<33xf32>
    %62 = vector.multi_reduction <add>, %61, %cst_23 [1] : vector<33x33xf32> to vector<33xf32>
    %63 = vector.shape_cast %62 : vector<33xf32> to vector<33x1xf32>
    %64 = tpu.reciprocal %63 {approx = true} : vector<33x1xf32> -> vector<33x1xf32>
    %65 = vector.broadcast %64 : vector<33x1xf32> to vector<33x33xf32>
    %66 = arith.mulf %61, %65 : vector<33x33xf32>
    %cst_24 = arith.constant dense<0.000000e+00> : vector<33x8xf32>
    %67 = tpu.matmul %66, %53, %cst_24 {dimension_numbers = #tpu.dot_dimension_numbers<[1], [0], [0], [1], [0, 0, 1, 1], [], []>} : vector<33x33xf32>, vector<33x8xf32>, vector<33x8xf32> -> vector<33x8xf32>
    %68 = vector.extract_strided_slice %50 {offsets = [0, 8], sizes = [33, 8], strides = [1, 1]} : vector<33x96xf32> to vector<33x8xf32>
    %69 = vector.extract_strided_slice %50 {offsets = [0, 40], sizes = [33, 8], strides = [1, 1]} : vector<33x96xf32> to vector<33x8xf32>
    %70 = vector.extract_strided_slice %50 {offsets = [0, 72], sizes = [33, 8], strides = [1, 1]} : vector<33x96xf32> to vector<33x8xf32>
    %cst_25 = arith.constant dense<0.000000e+00> : vector<33x33xf32>
    %71 = tpu.matmul %68, %69, %cst_25 {dimension_numbers = #tpu.dot_dimension_numbers<[1], [1], [0], [0], [0, 0, 1, 0], [], []>} : vector<33x8xf32>, vector<33x8xf32>, vector<33x33xf32> -> vector<33x33xf32>
    %cst_26 = arith.constant 0.353553385 : f32
    %72 = vector.broadcast %cst_26 : f32 to vector<33x33xf32>
    %73 = arith.mulf %71, %72 : vector<33x33xf32>
    %cst_27 = arith.constant dense<0xFF800000> : vector<33xf32>
    %74 = vector.multi_reduction <maximumf>, %73, %cst_27 [1] : vector<33x33xf32> to vector<33xf32>
    %75 = vector.shape_cast %74 : vector<33xf32> to vector<33x1xf32>
    %76 = vector.broadcast %75 : vector<33x1xf32> to vector<33x33xf32>
    %77 = arith.subf %73, %76 : vector<33x33xf32>
    %78 = math.exp %77 : vector<33x33xf32>
    %cst_28 = arith.constant dense<0.000000e+00> : vector<33xf32>
    %79 = vector.multi_reduction <add>, %78, %cst_28 [1] : vector<33x33xf32> to vector<33xf32>
    %80 = vector.shape_cast %79 : vector<33xf32> to vector<33x1xf32>
    %81 = tpu.reciprocal %80 {approx = true} : vector<33x1xf32> -> vector<33x1xf32>
    %82 = vector.broadcast %81 : vector<33x1xf32> to vector<33x33xf32>
    %83 = arith.mulf %78, %82 : vector<33x33xf32>
    %cst_29 = arith.constant dense<0.000000e+00> : vector<33x8xf32>
    %84 = tpu.matmul %83, %70, %cst_29 {dimension_numbers = #tpu.dot_dimension_numbers<[1], [0], [0], [1], [0, 0, 1, 1], [], []>} : vector<33x33xf32>, vector<33x8xf32>, vector<33x8xf32> -> vector<33x8xf32>
    %85 = vector.extract_strided_slice %50 {offsets = [0, 16], sizes = [33, 8], strides = [1, 1]} : vector<33x96xf32> to vector<33x8xf32>
    %86 = vector.extract_strided_slice %50 {offsets = [0, 48], sizes = [33, 8], strides = [1, 1]} : vector<33x96xf32> to vector<33x8xf32>
    %87 = vector.extract_strided_slice %50 {offsets = [0, 80], sizes = [33, 8], strides = [1, 1]} : vector<33x96xf32> to vector<33x8xf32>
    %cst_30 = arith.constant dense<0.000000e+00> : vector<33x33xf32>
    %88 = tpu.matmul %85, %86, %cst_30 {dimension_numbers = #tpu.dot_dimension_numbers<[1], [1], [0], [0], [0, 0, 1, 0], [], []>} : vector<33x8xf32>, vector<33x8xf32>, vector<33x33xf32> -> vector<33x33xf32>
    %cst_31 = arith.constant 0.353553385 : f32
    %89 = vector.broadcast %cst_31 : f32 to vector<33x33xf32>
    %90 = arith.mulf %88, %89 : vector<33x33xf32>
    %cst_32 = arith.constant dense<0xFF800000> : vector<33xf32>
    %91 = vector.multi_reduction <maximumf>, %90, %cst_32 [1] : vector<33x33xf32> to vector<33xf32>
    %92 = vector.shape_cast %91 : vector<33xf32> to vector<33x1xf32>
    %93 = vector.broadcast %92 : vector<33x1xf32> to vector<33x33xf32>
    %94 = arith.subf %90, %93 : vector<33x33xf32>
    %95 = math.exp %94 : vector<33x33xf32>
    %cst_33 = arith.constant dense<0.000000e+00> : vector<33xf32>
    %96 = vector.multi_reduction <add>, %95, %cst_33 [1] : vector<33x33xf32> to vector<33xf32>
    %97 = vector.shape_cast %96 : vector<33xf32> to vector<33x1xf32>
    %98 = tpu.reciprocal %97 {approx = true} : vector<33x1xf32> -> vector<33x1xf32>
    %99 = vector.broadcast %98 : vector<33x1xf32> to vector<33x33xf32>
    %100 = arith.mulf %95, %99 : vector<33x33xf32>
    %cst_34 = arith.constant dense<0.000000e+00> : vector<33x8xf32>
    %101 = tpu.matmul %100, %87, %cst_34 {dimension_numbers = #tpu.dot_dimension_numbers<[1], [0], [0], [1], [0, 0, 1, 1], [], []>} : vector<33x33xf32>, vector<33x8xf32>, vector<33x8xf32> -> vector<33x8xf32>
    %102 = vector.extract_strided_slice %50 {offsets = [0, 24], sizes = [33, 8], strides = [1, 1]} : vector<33x96xf32> to vector<33x8xf32>
    %103 = vector.extract_strided_slice %50 {offsets = [0, 56], sizes = [33, 8], strides = [1, 1]} : vector<33x96xf32> to vector<33x8xf32>
    %104 = vector.extract_strided_slice %50 {offsets = [0, 88], sizes = [33, 8], strides = [1, 1]} : vector<33x96xf32> to vector<33x8xf32>
    %cst_35 = arith.constant dense<0.000000e+00> : vector<33x33xf32>
    %105 = tpu.matmul %102, %103, %cst_35 {dimension_numbers = #tpu.dot_dimension_numbers<[1], [1], [0], [0], [0, 0, 1, 0], [], []>} : vector<33x8xf32>, vector<33x8xf32>, vector<33x33xf32> -> vector<33x33xf32>
    %cst_36 = arith.constant 0.353553385 : f32
    %106 = vector.broadcast %cst_36 : f32 to vector<33x33xf32>
    %107 = arith.mulf %105, %106 : vector<33x33xf32>
    %cst_37 = arith.constant dense<0xFF800000> : vector<33xf32>
    %108 = vector.multi_reduction <maximumf>, %107, %cst_37 [1] : vector<33x33xf32> to vector<33xf32>
    %109 = vector.shape_cast %108 : vector<33xf32> to vector<33x1xf32>
    %110 = vector.broadcast %109 : vector<33x1xf32> to vector<33x33xf32>
    %111 = arith.subf %107, %110 : vector<33x33xf32>
    %112 = math.exp %111 : vector<33x33xf32>
    %cst_38 = arith.constant dense<0.000000e+00> : vector<33xf32>
    %113 = vector.multi_reduction <add>, %112, %cst_38 [1] : vector<33x33xf32> to vector<33xf32>
    %114 = vector.shape_cast %113 : vector<33xf32> to vector<33x1xf32>
    %115 = tpu.reciprocal %114 {approx = true} : vector<33x1xf32> -> vector<33x1xf32>
    %116 = vector.broadcast %115 : vector<33x1xf32> to vector<33x33xf32>
    %117 = arith.mulf %112, %116 : vector<33x33xf32>
    %cst_39 = arith.constant dense<0.000000e+00> : vector<33x8xf32>
    %118 = tpu.matmul %117, %104, %cst_39 {dimension_numbers = #tpu.dot_dimension_numbers<[1], [0], [0], [1], [0, 0, 1, 1], [], []>} : vector<33x33xf32>, vector<33x8xf32>, vector<33x8xf32> -> vector<33x8xf32>
    %119 = tpu.concatenate %67, %84, %101, %118 in 1 : vector<33x8xf32>, vector<33x8xf32>, vector<33x8xf32>, vector<33x8xf32> -> vector<33x32xf32>
    %120 = arith.truncf %119 : vector<33x32xf32> to vector<33x32xbf16>
    %c0_40 = arith.constant 0 : index
    %c0_41 = arith.constant 0 : index
    %c0_42 = arith.constant 0 : index
    %121 = vector.load %arg7[%c0_40, %c0_41, %c0_42] : memref<2x32x32xbf16, #tpu.memory_space<vmem>>, vector<1x32x32xbf16>
    %122 = vector.shape_cast %121 : vector<1x32x32xbf16> to vector<32x32xbf16>
    %cst_43 = arith.constant dense<0.000000e+00> : vector<33x32xf32>
    %123 = tpu.matmul %120, %122, %cst_43 {dimension_numbers = #tpu.dot_dimension_numbers<[1], [0], [0], [1], [0, 0, 1, 1], [], []>} : vector<33x32xbf16>, vector<32x32xbf16>, vector<33x32xf32> -> vector<33x32xf32>
    %124 = vector.broadcast %20 : vector<1x32xf32> to vector<33x32xf32>
    %125 = arith.addf %123, %124 : vector<33x32xf32>
    %126 = arith.addf %12, %125 : vector<33x32xf32>
    %cst_44 = arith.constant dense<0.000000e+00> : vector<33xf32>
    %127 = vector.multi_reduction <add>, %126, %cst_44 [1] : vector<33x32xf32> to vector<33xf32>
    %128 = vector.shape_cast %127 : vector<33xf32> to vector<33x1xf32>
    %cst_45 = arith.constant 3.200000e+01 : f32
    %129 = vector.broadcast %cst_45 : f32 to vector<33x1xf32>
    %130 = arith.divf %128, %129 : vector<33x1xf32>
    %131 = vector.broadcast %130 : vector<33x1xf32> to vector<33x32xf32>
    %132 = arith.subf %126, %131 : vector<33x32xf32>
    %133 = arith.mulf %132, %132 : vector<33x32xf32>
    %cst_46 = arith.constant dense<0.000000e+00> : vector<33xf32>
    %134 = vector.multi_reduction <add>, %133, %cst_46 [1] : vector<33x32xf32> to vector<33xf32>
    %135 = vector.shape_cast %134 : vector<33xf32> to vector<33x1xf32>
    %cst_47 = arith.constant 3.200000e+01 : f32
    %136 = vector.broadcast %cst_47 : f32 to vector<33x1xf32>
    %137 = arith.divf %135, %136 : vector<33x1xf32>
    %138 = vector.broadcast %130 : vector<33x1xf32> to vector<33x32xf32>
    %139 = arith.subf %126, %138 : vector<33x32xf32>
    %cst_48 = arith.constant 9.99999997E-7 : f32
    %140 = vector.broadcast %cst_48 : f32 to vector<33x1xf32>
    %141 = arith.addf %137, %140 : vector<33x1xf32>
    %142 = math.rsqrt %141 : vector<33x1xf32>
    %143 = vector.broadcast %142 : vector<33x1xf32> to vector<33x32xf32>
    %144 = arith.mulf %139, %143 : vector<33x32xf32>
    %145 = vector.broadcast %17 : vector<1x32xf32> to vector<33x32xf32>
    %146 = arith.mulf %144, %145 : vector<33x32xf32>
    %147 = vector.broadcast %18 : vector<1x32xf32> to vector<33x32xf32>
    %148 = arith.addf %146, %147 : vector<33x32xf32>
    %149 = arith.truncf %148 : vector<33x32xf32> to vector<33x32xbf16>
    %c0_49 = arith.constant 0 : index
    %c0_50 = arith.constant 0 : index
    %c0_51 = arith.constant 0 : index
    %150 = vector.load %arg8[%c0_49, %c0_50, %c0_51] : memref<2x32x64xbf16, #tpu.memory_space<vmem>>, vector<1x32x64xbf16>
    %151 = vector.shape_cast %150 : vector<1x32x64xbf16> to vector<32x64xbf16>
    %cst_52 = arith.constant dense<0.000000e+00> : vector<33x64xf32>
    %152 = tpu.matmul %149, %151, %cst_52 {dimension_numbers = #tpu.dot_dimension_numbers<[1], [0], [0], [1], [0, 0, 1, 1], [], []>} : vector<33x32xbf16>, vector<32x64xbf16>, vector<33x64xf32> -> vector<33x64xf32>
    %153 = vector.broadcast %21 : vector<1x64xf32> to vector<33x64xf32>
    %154 = arith.addf %152, %153 : vector<33x64xf32>
    %cst_53 = arith.constant 5.000000e-01 : f32
    %155 = vector.broadcast %cst_53 : f32 to vector<33x64xf32>
    %156 = arith.mulf %155, %154 : vector<33x64xf32>
    %cst_54 = arith.constant 0.797884583 : f32
    %157 = vector.broadcast %cst_54 : f32 to vector<33x64xf32>
    %158 = arith.mulf %157, %154 : vector<33x64xf32>
    %cst_55 = arith.constant 4.471500e-02 : f32
    %159 = vector.broadcast %cst_55 : f32 to vector<33x64xf32>
    %160 = arith.mulf %159, %154 : vector<33x64xf32>
    %161 = arith.mulf %160, %154 : vector<33x64xf32>
    %cst_56 = arith.constant 1.000000e+00 : f32
    %162 = vector.broadcast %cst_56 : f32 to vector<33x64xf32>
    %163 = arith.addf %162, %161 : vector<33x64xf32>
    %164 = arith.mulf %158, %163 : vector<33x64xf32>
    %165 = math.tanh %164 : vector<33x64xf32>
    %cst_57 = arith.constant 1.000000e+00 : f32
    %166 = vector.broadcast %cst_57 : f32 to vector<33x64xf32>
    %167 = arith.addf %166, %165 : vector<33x64xf32>
    %168 = arith.mulf %156, %167 : vector<33x64xf32>
    %169 = arith.truncf %168 : vector<33x64xf32> to vector<33x64xbf16>
    %c0_58 = arith.constant 0 : index
    %c0_59 = arith.constant 0 : index
    %c0_60 = arith.constant 0 : index
    %170 = vector.load %arg9[%c0_58, %c0_59, %c0_60] : memref<2x64x32xbf16, #tpu.memory_space<vmem>>, vector<1x64x32xbf16>
    %171 = vector.shape_cast %170 : vector<1x64x32xbf16> to vector<64x32xbf16>
    %cst_61 = arith.constant dense<0.000000e+00> : vector<33x32xf32>
    %172 = tpu.matmul %169, %171, %cst_61 {dimension_numbers = #tpu.dot_dimension_numbers<[1], [0], [0], [1], [0, 0, 1, 1], [], []>} : vector<33x64xbf16>, vector<64x32xbf16>, vector<33x32xf32> -> vector<33x32xf32>
    %173 = vector.broadcast %22 : vector<1x32xf32> to vector<33x32xf32>
    %174 = arith.addf %172, %173 : vector<33x32xf32>
    %175 = arith.addf %126, %174 : vector<33x32xf32>
    %c1 = arith.constant 1 : index
    %c0_62 = arith.constant 0 : index
    %c0_63 = arith.constant 0 : index
    %176 = vector.load %arg10[%c1, %c0_62, %c0_63] : memref<2x8x128xf32, #tpu.memory_space<vmem>>, vector<1x8x128xf32>
    %177 = vector.shape_cast %176 : vector<1x8x128xf32> to vector<8x128xf32>
    %178 = vector.extract_strided_slice %177 {offsets = [0, 0], sizes = [1, 32], strides = [1, 1]} : vector<8x128xf32> to vector<1x32xf32>
    %179 = vector.extract_strided_slice %177 {offsets = [1, 0], sizes = [1, 32], strides = [1, 1]} : vector<8x128xf32> to vector<1x32xf32>
    %180 = vector.extract_strided_slice %177 {offsets = [2, 0], sizes = [1, 32], strides = [1, 1]} : vector<8x128xf32> to vector<1x32xf32>
    %181 = vector.extract_strided_slice %177 {offsets = [3, 0], sizes = [1, 32], strides = [1, 1]} : vector<8x128xf32> to vector<1x32xf32>
    %182 = vector.extract_strided_slice %177 {offsets = [4, 0], sizes = [1, 96], strides = [1, 1]} : vector<8x128xf32> to vector<1x96xf32>
    %183 = vector.extract_strided_slice %177 {offsets = [5, 0], sizes = [1, 32], strides = [1, 1]} : vector<8x128xf32> to vector<1x32xf32>
    %184 = vector.extract_strided_slice %177 {offsets = [6, 0], sizes = [1, 64], strides = [1, 1]} : vector<8x128xf32> to vector<1x64xf32>
    %185 = vector.extract_strided_slice %177 {offsets = [7, 0], sizes = [1, 32], strides = [1, 1]} : vector<8x128xf32> to vector<1x32xf32>
    %cst_64 = arith.constant dense<0.000000e+00> : vector<33xf32>
    %186 = vector.multi_reduction <add>, %175, %cst_64 [1] : vector<33x32xf32> to vector<33xf32>
    %187 = vector.shape_cast %186 : vector<33xf32> to vector<33x1xf32>
    %cst_65 = arith.constant 3.200000e+01 : f32
    %188 = vector.broadcast %cst_65 : f32 to vector<33x1xf32>
    %189 = arith.divf %187, %188 : vector<33x1xf32>
    %190 = vector.broadcast %189 : vector<33x1xf32> to vector<33x32xf32>
    %191 = arith.subf %175, %190 : vector<33x32xf32>
    %192 = arith.mulf %191, %191 : vector<33x32xf32>
    %cst_66 = arith.constant dense<0.000000e+00> : vector<33xf32>
    %193 = vector.multi_reduction <add>, %192, %cst_66 [1] : vector<33x32xf32> to vector<33xf32>
    %194 = vector.shape_cast %193 : vector<33xf32> to vector<33x1xf32>
    %cst_67 = arith.constant 3.200000e+01 : f32
    %195 = vector.broadcast %cst_67 : f32 to vector<33x1xf32>
    %196 = arith.divf %194, %195 : vector<33x1xf32>
    %197 = vector.broadcast %189 : vector<33x1xf32> to vector<33x32xf32>
    %198 = arith.subf %175, %197 : vector<33x32xf32>
    %cst_68 = arith.constant 9.99999997E-7 : f32
    %199 = vector.broadcast %cst_68 : f32 to vector<33x1xf32>
    %200 = arith.addf %196, %199 : vector<33x1xf32>
    %201 = math.rsqrt %200 : vector<33x1xf32>
    %202 = vector.broadcast %201 : vector<33x1xf32> to vector<33x32xf32>
    %203 = arith.mulf %198, %202 : vector<33x32xf32>
    %204 = vector.broadcast %178 : vector<1x32xf32> to vector<33x32xf32>
    %205 = arith.mulf %203, %204 : vector<33x32xf32>
    %206 = vector.broadcast %179 : vector<1x32xf32> to vector<33x32xf32>
    %207 = arith.addf %205, %206 : vector<33x32xf32>
    %208 = arith.truncf %207 : vector<33x32xf32> to vector<33x32xbf16>
    %c1_69 = arith.constant 1 : index
    %c0_70 = arith.constant 0 : index
    %c0_71 = arith.constant 0 : index
    %209 = vector.load %arg6[%c1_69, %c0_70, %c0_71] : memref<2x32x96xbf16, #tpu.memory_space<vmem>>, vector<1x32x96xbf16>
    %210 = vector.shape_cast %209 : vector<1x32x96xbf16> to vector<32x96xbf16>
    %cst_72 = arith.constant dense<0.000000e+00> : vector<33x96xf32>
    %211 = tpu.matmul %208, %210, %cst_72 {dimension_numbers = #tpu.dot_dimension_numbers<[1], [0], [0], [1], [0, 0, 1, 1], [], []>} : vector<33x32xbf16>, vector<32x96xbf16>, vector<33x96xf32> -> vector<33x96xf32>
    %212 = vector.broadcast %182 : vector<1x96xf32> to vector<33x96xf32>
    %213 = arith.addf %211, %212 : vector<33x96xf32>
    %214 = vector.extract_strided_slice %213 {offsets = [0, 0], sizes = [33, 8], strides = [1, 1]} : vector<33x96xf32> to vector<33x8xf32>
    %215 = vector.extract_strided_slice %213 {offsets = [0, 32], sizes = [33, 8], strides = [1, 1]} : vector<33x96xf32> to vector<33x8xf32>
    %216 = vector.extract_strided_slice %213 {offsets = [0, 64], sizes = [33, 8], strides = [1, 1]} : vector<33x96xf32> to vector<33x8xf32>
    %cst_73 = arith.constant dense<0.000000e+00> : vector<33x33xf32>
    %217 = tpu.matmul %214, %215, %cst_73 {dimension_numbers = #tpu.dot_dimension_numbers<[1], [1], [0], [0], [0, 0, 1, 0], [], []>} : vector<33x8xf32>, vector<33x8xf32>, vector<33x33xf32> -> vector<33x33xf32>
    %cst_74 = arith.constant 0.353553385 : f32
    %218 = vector.broadcast %cst_74 : f32 to vector<33x33xf32>
    %219 = arith.mulf %217, %218 : vector<33x33xf32>
    %cst_75 = arith.constant dense<0xFF800000> : vector<33xf32>
    %220 = vector.multi_reduction <maximumf>, %219, %cst_75 [1] : vector<33x33xf32> to vector<33xf32>
    %221 = vector.shape_cast %220 : vector<33xf32> to vector<33x1xf32>
    %222 = vector.broadcast %221 : vector<33x1xf32> to vector<33x33xf32>
    %223 = arith.subf %219, %222 : vector<33x33xf32>
    %224 = math.exp %223 : vector<33x33xf32>
    %cst_76 = arith.constant dense<0.000000e+00> : vector<33xf32>
    %225 = vector.multi_reduction <add>, %224, %cst_76 [1] : vector<33x33xf32> to vector<33xf32>
    %226 = vector.shape_cast %225 : vector<33xf32> to vector<33x1xf32>
    %227 = tpu.reciprocal %226 {approx = true} : vector<33x1xf32> -> vector<33x1xf32>
    %228 = vector.broadcast %227 : vector<33x1xf32> to vector<33x33xf32>
    %229 = arith.mulf %224, %228 : vector<33x33xf32>
    %cst_77 = arith.constant dense<0.000000e+00> : vector<33x8xf32>
    %230 = tpu.matmul %229, %216, %cst_77 {dimension_numbers = #tpu.dot_dimension_numbers<[1], [0], [0], [1], [0, 0, 1, 1], [], []>} : vector<33x33xf32>, vector<33x8xf32>, vector<33x8xf32> -> vector<33x8xf32>
    %231 = vector.extract_strided_slice %213 {offsets = [0, 8], sizes = [33, 8], strides = [1, 1]} : vector<33x96xf32> to vector<33x8xf32>
    %232 = vector.extract_strided_slice %213 {offsets = [0, 40], sizes = [33, 8], strides = [1, 1]} : vector<33x96xf32> to vector<33x8xf32>
    %233 = vector.extract_strided_slice %213 {offsets = [0, 72], sizes = [33, 8], strides = [1, 1]} : vector<33x96xf32> to vector<33x8xf32>
    %cst_78 = arith.constant dense<0.000000e+00> : vector<33x33xf32>
    %234 = tpu.matmul %231, %232, %cst_78 {dimension_numbers = #tpu.dot_dimension_numbers<[1], [1], [0], [0], [0, 0, 1, 0], [], []>} : vector<33x8xf32>, vector<33x8xf32>, vector<33x33xf32> -> vector<33x33xf32>
    %cst_79 = arith.constant 0.353553385 : f32
    %235 = vector.broadcast %cst_79 : f32 to vector<33x33xf32>
    %236 = arith.mulf %234, %235 : vector<33x33xf32>
    %cst_80 = arith.constant dense<0xFF800000> : vector<33xf32>
    %237 = vector.multi_reduction <maximumf>, %236, %cst_80 [1] : vector<33x33xf32> to vector<33xf32>
    %238 = vector.shape_cast %237 : vector<33xf32> to vector<33x1xf32>
    %239 = vector.broadcast %238 : vector<33x1xf32> to vector<33x33xf32>
    %240 = arith.subf %236, %239 : vector<33x33xf32>
    %241 = math.exp %240 : vector<33x33xf32>
    %cst_81 = arith.constant dense<0.000000e+00> : vector<33xf32>
    %242 = vector.multi_reduction <add>, %241, %cst_81 [1] : vector<33x33xf32> to vector<33xf32>
    %243 = vector.shape_cast %242 : vector<33xf32> to vector<33x1xf32>
    %244 = tpu.reciprocal %243 {approx = true} : vector<33x1xf32> -> vector<33x1xf32>
    %245 = vector.broadcast %244 : vector<33x1xf32> to vector<33x33xf32>
    %246 = arith.mulf %241, %245 : vector<33x33xf32>
    %cst_82 = arith.constant dense<0.000000e+00> : vector<33x8xf32>
    %247 = tpu.matmul %246, %233, %cst_82 {dimension_numbers = #tpu.dot_dimension_numbers<[1], [0], [0], [1], [0, 0, 1, 1], [], []>} : vector<33x33xf32>, vector<33x8xf32>, vector<33x8xf32> -> vector<33x8xf32>
    %248 = vector.extract_strided_slice %213 {offsets = [0, 16], sizes = [33, 8], strides = [1, 1]} : vector<33x96xf32> to vector<33x8xf32>
    %249 = vector.extract_strided_slice %213 {offsets = [0, 48], sizes = [33, 8], strides = [1, 1]} : vector<33x96xf32> to vector<33x8xf32>
    %250 = vector.extract_strided_slice %213 {offsets = [0, 80], sizes = [33, 8], strides = [1, 1]} : vector<33x96xf32> to vector<33x8xf32>
    %cst_83 = arith.constant dense<0.000000e+00> : vector<33x33xf32>
    %251 = tpu.matmul %248, %249, %cst_83 {dimension_numbers = #tpu.dot_dimension_numbers<[1], [1], [0], [0], [0, 0, 1, 0], [], []>} : vector<33x8xf32>, vector<33x8xf32>, vector<33x33xf32> -> vector<33x33xf32>
    %cst_84 = arith.constant 0.353553385 : f32
    %252 = vector.broadcast %cst_84 : f32 to vector<33x33xf32>
    %253 = arith.mulf %251, %252 : vector<33x33xf32>
    %cst_85 = arith.constant dense<0xFF800000> : vector<33xf32>
    %254 = vector.multi_reduction <maximumf>, %253, %cst_85 [1] : vector<33x33xf32> to vector<33xf32>
    %255 = vector.shape_cast %254 : vector<33xf32> to vector<33x1xf32>
    %256 = vector.broadcast %255 : vector<33x1xf32> to vector<33x33xf32>
    %257 = arith.subf %253, %256 : vector<33x33xf32>
    %258 = math.exp %257 : vector<33x33xf32>
    %cst_86 = arith.constant dense<0.000000e+00> : vector<33xf32>
    %259 = vector.multi_reduction <add>, %258, %cst_86 [1] : vector<33x33xf32> to vector<33xf32>
    %260 = vector.shape_cast %259 : vector<33xf32> to vector<33x1xf32>
    %261 = tpu.reciprocal %260 {approx = true} : vector<33x1xf32> -> vector<33x1xf32>
    %262 = vector.broadcast %261 : vector<33x1xf32> to vector<33x33xf32>
    %263 = arith.mulf %258, %262 : vector<33x33xf32>
    %cst_87 = arith.constant dense<0.000000e+00> : vector<33x8xf32>
    %264 = tpu.matmul %263, %250, %cst_87 {dimension_numbers = #tpu.dot_dimension_numbers<[1], [0], [0], [1], [0, 0, 1, 1], [], []>} : vector<33x33xf32>, vector<33x8xf32>, vector<33x8xf32> -> vector<33x8xf32>
    %265 = vector.extract_strided_slice %213 {offsets = [0, 24], sizes = [33, 8], strides = [1, 1]} : vector<33x96xf32> to vector<33x8xf32>
    %266 = vector.extract_strided_slice %213 {offsets = [0, 56], sizes = [33, 8], strides = [1, 1]} : vector<33x96xf32> to vector<33x8xf32>
    %267 = vector.extract_strided_slice %213 {offsets = [0, 88], sizes = [33, 8], strides = [1, 1]} : vector<33x96xf32> to vector<33x8xf32>
    %cst_88 = arith.constant dense<0.000000e+00> : vector<33x33xf32>
    %268 = tpu.matmul %265, %266, %cst_88 {dimension_numbers = #tpu.dot_dimension_numbers<[1], [1], [0], [0], [0, 0, 1, 0], [], []>} : vector<33x8xf32>, vector<33x8xf32>, vector<33x33xf32> -> vector<33x33xf32>
    %cst_89 = arith.constant 0.353553385 : f32
    %269 = vector.broadcast %cst_89 : f32 to vector<33x33xf32>
    %270 = arith.mulf %268, %269 : vector<33x33xf32>
    %cst_90 = arith.constant dense<0xFF800000> : vector<33xf32>
    %271 = vector.multi_reduction <maximumf>, %270, %cst_90 [1] : vector<33x33xf32> to vector<33xf32>
    %272 = vector.shape_cast %271 : vector<33xf32> to vector<33x1xf32>
    %273 = vector.broadcast %272 : vector<33x1xf32> to vector<33x33xf32>
    %274 = arith.subf %270, %273 : vector<33x33xf32>
    %275 = math.exp %274 : vector<33x33xf32>
    %cst_91 = arith.constant dense<0.000000e+00> : vector<33xf32>
    %276 = vector.multi_reduction <add>, %275, %cst_91 [1] : vector<33x33xf32> to vector<33xf32>
    %277 = vector.shape_cast %276 : vector<33xf32> to vector<33x1xf32>
    %278 = tpu.reciprocal %277 {approx = true} : vector<33x1xf32> -> vector<33x1xf32>
    %279 = vector.broadcast %278 : vector<33x1xf32> to vector<33x33xf32>
    %280 = arith.mulf %275, %279 : vector<33x33xf32>
    %cst_92 = arith.constant dense<0.000000e+00> : vector<33x8xf32>
    %281 = tpu.matmul %280, %267, %cst_92 {dimension_numbers = #tpu.dot_dimension_numbers<[1], [0], [0], [1], [0, 0, 1, 1], [], []>} : vector<33x33xf32>, vector<33x8xf32>, vector<33x8xf32> -> vector<33x8xf32>
    %282 = tpu.concatenate %230, %247, %264, %281 in 1 : vector<33x8xf32>, vector<33x8xf32>, vector<33x8xf32>, vector<33x8xf32> -> vector<33x32xf32>
    %283 = arith.truncf %282 : vector<33x32xf32> to vector<33x32xbf16>
    %c1_93 = arith.constant 1 : index
    %c0_94 = arith.constant 0 : index
    %c0_95 = arith.constant 0 : index
    %284 = vector.load %arg7[%c1_93, %c0_94, %c0_95] : memref<2x32x32xbf16, #tpu.memory_space<vmem>>, vector<1x32x32xbf16>
    %285 = vector.shape_cast %284 : vector<1x32x32xbf16> to vector<32x32xbf16>
    %cst_96 = arith.constant dense<0.000000e+00> : vector<33x32xf32>
    %286 = tpu.matmul %283, %285, %cst_96 {dimension_numbers = #tpu.dot_dimension_numbers<[1], [0], [0], [1], [0, 0, 1, 1], [], []>} : vector<33x32xbf16>, vector<32x32xbf16>, vector<33x32xf32> -> vector<33x32xf32>
    %287 = vector.broadcast %183 : vector<1x32xf32> to vector<33x32xf32>
    %288 = arith.addf %286, %287 : vector<33x32xf32>
    %289 = arith.addf %175, %288 : vector<33x32xf32>
    %cst_97 = arith.constant dense<0.000000e+00> : vector<33xf32>
    %290 = vector.multi_reduction <add>, %289, %cst_97 [1] : vector<33x32xf32> to vector<33xf32>
    %291 = vector.shape_cast %290 : vector<33xf32> to vector<33x1xf32>
    %cst_98 = arith.constant 3.200000e+01 : f32
    %292 = vector.broadcast %cst_98 : f32 to vector<33x1xf32>
    %293 = arith.divf %291, %292 : vector<33x1xf32>
    %294 = vector.broadcast %293 : vector<33x1xf32> to vector<33x32xf32>
    %295 = arith.subf %289, %294 : vector<33x32xf32>
    %296 = arith.mulf %295, %295 : vector<33x32xf32>
    %cst_99 = arith.constant dense<0.000000e+00> : vector<33xf32>
    %297 = vector.multi_reduction <add>, %296, %cst_99 [1] : vector<33x32xf32> to vector<33xf32>
    %298 = vector.shape_cast %297 : vector<33xf32> to vector<33x1xf32>
    %cst_100 = arith.constant 3.200000e+01 : f32
    %299 = vector.broadcast %cst_100 : f32 to vector<33x1xf32>
    %300 = arith.divf %298, %299 : vector<33x1xf32>
    %301 = vector.broadcast %293 : vector<33x1xf32> to vector<33x32xf32>
    %302 = arith.subf %289, %301 : vector<33x32xf32>
    %cst_101 = arith.constant 9.99999997E-7 : f32
    %303 = vector.broadcast %cst_101 : f32 to vector<33x1xf32>
    %304 = arith.addf %300, %303 : vector<33x1xf32>
    %305 = math.rsqrt %304 : vector<33x1xf32>
    %306 = vector.broadcast %305 : vector<33x1xf32> to vector<33x32xf32>
    %307 = arith.mulf %302, %306 : vector<33x32xf32>
    %308 = vector.broadcast %180 : vector<1x32xf32> to vector<33x32xf32>
    %309 = arith.mulf %307, %308 : vector<33x32xf32>
    %310 = vector.broadcast %181 : vector<1x32xf32> to vector<33x32xf32>
    %311 = arith.addf %309, %310 : vector<33x32xf32>
    %312 = arith.truncf %311 : vector<33x32xf32> to vector<33x32xbf16>
    %c1_102 = arith.constant 1 : index
    %c0_103 = arith.constant 0 : index
    %c0_104 = arith.constant 0 : index
    %313 = vector.load %arg8[%c1_102, %c0_103, %c0_104] : memref<2x32x64xbf16, #tpu.memory_space<vmem>>, vector<1x32x64xbf16>
    %314 = vector.shape_cast %313 : vector<1x32x64xbf16> to vector<32x64xbf16>
    %cst_105 = arith.constant dense<0.000000e+00> : vector<33x64xf32>
    %315 = tpu.matmul %312, %314, %cst_105 {dimension_numbers = #tpu.dot_dimension_numbers<[1], [0], [0], [1], [0, 0, 1, 1], [], []>} : vector<33x32xbf16>, vector<32x64xbf16>, vector<33x64xf32> -> vector<33x64xf32>
    %316 = vector.broadcast %184 : vector<1x64xf32> to vector<33x64xf32>
    %317 = arith.addf %315, %316 : vector<33x64xf32>
    %cst_106 = arith.constant 5.000000e-01 : f32
    %318 = vector.broadcast %cst_106 : f32 to vector<33x64xf32>
    %319 = arith.mulf %318, %317 : vector<33x64xf32>
    %cst_107 = arith.constant 0.797884583 : f32
    %320 = vector.broadcast %cst_107 : f32 to vector<33x64xf32>
    %321 = arith.mulf %320, %317 : vector<33x64xf32>
    %cst_108 = arith.constant 4.471500e-02 : f32
    %322 = vector.broadcast %cst_108 : f32 to vector<33x64xf32>
    %323 = arith.mulf %322, %317 : vector<33x64xf32>
    %324 = arith.mulf %323, %317 : vector<33x64xf32>
    %cst_109 = arith.constant 1.000000e+00 : f32
    %325 = vector.broadcast %cst_109 : f32 to vector<33x64xf32>
    %326 = arith.addf %325, %324 : vector<33x64xf32>
    %327 = arith.mulf %321, %326 : vector<33x64xf32>
    %328 = math.tanh %327 : vector<33x64xf32>
    %cst_110 = arith.constant 1.000000e+00 : f32
    %329 = vector.broadcast %cst_110 : f32 to vector<33x64xf32>
    %330 = arith.addf %329, %328 : vector<33x64xf32>
    %331 = arith.mulf %319, %330 : vector<33x64xf32>
    %332 = arith.truncf %331 : vector<33x64xf32> to vector<33x64xbf16>
    %c1_111 = arith.constant 1 : index
    %c0_112 = arith.constant 0 : index
    %c0_113 = arith.constant 0 : index
    %333 = vector.load %arg9[%c1_111, %c0_112, %c0_113] : memref<2x64x32xbf16, #tpu.memory_space<vmem>>, vector<1x64x32xbf16>
    %334 = vector.shape_cast %333 : vector<1x64x32xbf16> to vector<64x32xbf16>
    %cst_114 = arith.constant dense<0.000000e+00> : vector<33x32xf32>
    %335 = tpu.matmul %332, %334, %cst_114 {dimension_numbers = #tpu.dot_dimension_numbers<[1], [0], [0], [1], [0, 0, 1, 1], [], []>} : vector<33x64xbf16>, vector<64x32xbf16>, vector<33x32xf32> -> vector<33x32xf32>
    %336 = vector.broadcast %185 : vector<1x32xf32> to vector<33x32xf32>
    %337 = arith.addf %335, %336 : vector<33x32xf32>
    %338 = arith.addf %289, %337 : vector<33x32xf32>
    %339 = vector.extract_strided_slice %338 {offsets = [32, 0], sizes = [1, 32], strides = [1, 1]} : vector<33x32xf32> to vector<1x32xf32>
    %340 = vector.extract_strided_slice %0 {offsets = [2, 0], sizes = [1, 32], strides = [1, 1]} : vector<8x128xf32> to vector<1x32xf32>
    %341 = vector.extract_strided_slice %0 {offsets = [3, 0], sizes = [1, 32], strides = [1, 1]} : vector<8x128xf32> to vector<1x32xf32>
    %cst_115 = arith.constant dense<0.000000e+00> : vector<1xf32>
    %342 = vector.multi_reduction <add>, %339, %cst_115 [1] : vector<1x32xf32> to vector<1xf32>
    %343 = vector.shape_cast %342 : vector<1xf32> to vector<1x1xf32>
    %cst_116 = arith.constant 3.200000e+01 : f32
    %344 = vector.broadcast %cst_116 : f32 to vector<1x1xf32>
    %345 = arith.divf %343, %344 : vector<1x1xf32>
    %346 = vector.broadcast %345 : vector<1x1xf32> to vector<1x32xf32>
    %347 = arith.subf %339, %346 : vector<1x32xf32>
    %348 = arith.mulf %347, %347 : vector<1x32xf32>
    %cst_117 = arith.constant dense<0.000000e+00> : vector<1xf32>
    %349 = vector.multi_reduction <add>, %348, %cst_117 [1] : vector<1x32xf32> to vector<1xf32>
    %350 = vector.shape_cast %349 : vector<1xf32> to vector<1x1xf32>
    %cst_118 = arith.constant 3.200000e+01 : f32
    %351 = vector.broadcast %cst_118 : f32 to vector<1x1xf32>
    %352 = arith.divf %350, %351 : vector<1x1xf32>
    %353 = vector.broadcast %345 : vector<1x1xf32> to vector<1x32xf32>
    %354 = arith.subf %339, %353 : vector<1x32xf32>
    %cst_119 = arith.constant 9.99999997E-7 : f32
    %355 = vector.broadcast %cst_119 : f32 to vector<1x1xf32>
    %356 = arith.addf %352, %355 : vector<1x1xf32>
    %357 = math.rsqrt %356 : vector<1x1xf32>
    %358 = vector.broadcast %357 : vector<1x1xf32> to vector<1x32xf32>
    %359 = arith.mulf %354, %358 : vector<1x32xf32>
    %360 = arith.mulf %359, %340 : vector<1x32xf32>
    %361 = arith.addf %360, %341 : vector<1x32xf32>
    %362 = arith.truncf %361 : vector<1x32xf32> to vector<1x32xbf16>
    %c0_120 = arith.constant 0 : index
    %c0_121 = arith.constant 0 : index
    %363 = vector.load %arg5[%c0_120, %c0_121] : memref<32x128xbf16, #tpu.memory_space<vmem>>, vector<32x128xbf16>
    %cst_122 = arith.constant dense<0.000000e+00> : vector<1x128xf32>
    %364 = tpu.matmul %362, %363, %cst_122 {dimension_numbers = #tpu.dot_dimension_numbers<[1], [0], [0], [1], [0, 0, 1, 1], [], []>} : vector<1x32xbf16>, vector<32x128xbf16>, vector<1x128xf32> -> vector<1x128xf32>
    %365 = vector.extract_strided_slice %0 {offsets = [4, 0], sizes = [1, 128], strides = [1, 1]} : vector<8x128xf32> to vector<1x128xf32>
    %366 = arith.addf %364, %365 : vector<1x128xf32>
    %c0_123 = arith.constant 0 : index
    %c0_124 = arith.constant 0 : index
    %c0_125 = arith.constant 0 : index
    %367 = vector.load %arg11[%c0_123, %c0_124, %c0_125] : memref<1x1x128xf32, #tpu.memory_space<vmem>>, vector<1x1x128xf32>
    %368 = vector.shape_cast %367 : vector<1x1x128xf32> to vector<1x128xf32>
    %369 = vector.shape_cast %366 : vector<1x128xf32> to vector<1x1x128xf32>
    tpu.vector_store %arg11[%c0_123, %c0_124, %c0_125], %369 {strides = array<i32>} : memref<1x1x128xf32, #tpu.memory_space<vmem>>, vector<1x1x128xf32>,
    return
  }
  func.func @transform_0(%arg0: i32) -> (i32, i32, i32) {
    %c0_i32 = arith.constant 0 : i32
    %c0_i32_0 = arith.constant 0 : i32
    %c0_i32_1 = arith.constant 0 : i32
    return %arg0, %c0_i32, %c0_i32_0 : i32, i32, i32
  }
  func.func @transform_1(%arg0: i32) -> (i32, i32) {
    %c0_i32 = arith.constant 0 : i32
    %c0_i32_0 = arith.constant 0 : i32
    %c0_i32_1 = arith.constant 0 : i32
    return %c0_i32, %c0_i32_0 : i32, i32
  }
  func.func @transform_2(%arg0: i32) -> (i32, i32) {
    %c0_i32 = arith.constant 0 : i32
    %c0_i32_0 = arith.constant 0 : i32
    %c0_i32_1 = arith.constant 0 : i32
    return %c0_i32, %c0_i32_0 : i32, i32
  }
  func.func @transform_3(%arg0: i32) -> (i32, i32) {
    %c0_i32 = arith.constant 0 : i32
    %c0_i32_0 = arith.constant 0 : i32
    %c0_i32_1 = arith.constant 0 : i32
    return %c0_i32, %c0_i32_0 : i32, i32
  }
  func.func @transform_4(%arg0: i32) -> (i32, i32) {
    %c0_i32 = arith.constant 0 : i32
    %c0_i32_0 = arith.constant 0 : i32
    %c0_i32_1 = arith.constant 0 : i32
    return %c0_i32, %c0_i32_0 : i32, i32
  }
  func.func @transform_5(%arg0: i32) -> (i32, i32, i32) {
    %c0_i32 = arith.constant 0 : i32
    %c0_i32_0 = arith.constant 0 : i32
    %c0_i32_1 = arith.constant 0 : i32
    %c0_i32_2 = arith.constant 0 : i32
    return %c0_i32, %c0_i32_0, %c0_i32_1 : i32, i32, i32
  }
  func.func @transform_6(%arg0: i32) -> (i32, i32, i32) {
    %c0_i32 = arith.constant 0 : i32
    %c0_i32_0 = arith.constant 0 : i32
    %c0_i32_1 = arith.constant 0 : i32
    %c0_i32_2 = arith.constant 0 : i32
    return %c0_i32, %c0_i32_0, %c0_i32_1 : i32, i32, i32
  }
  func.func @transform_7(%arg0: i32) -> (i32, i32, i32) {
    %c0_i32 = arith.constant 0 : i32
    %c0_i32_0 = arith.constant 0 : i32
    %c0_i32_1 = arith.constant 0 : i32
    %c0_i32_2 = arith.constant 0 : i32
    return %c0_i32, %c0_i32_0, %c0_i32_1 : i32, i32, i32
  }
  func.func @transform_8(%arg0: i32) -> (i32, i32, i32) {
    %c0_i32 = arith.constant 0 : i32
    %c0_i32_0 = arith.constant 0 : i32
    %c0_i32_1 = arith.constant 0 : i32
    %c0_i32_2 = arith.constant 0 : i32
    return %c0_i32, %c0_i32_0, %c0_i32_1 : i32, i32, i32
  }
  func.func @transform_9(%arg0: i32) -> (i32, i32, i32) {
    %c0_i32 = arith.constant 0 : i32
    %c0_i32_0 = arith.constant 0 : i32
    %c0_i32_1 = arith.constant 0 : i32
    %c0_i32_2 = arith.constant 0 : i32
    return %c0_i32, %c0_i32_0, %c0_i32_1 : i32, i32, i32
  }
  func.func @transform_10(%arg0: i32) -> (i32, i32, i32) {
    %c0_i32 = arith.constant 0 : i32
    %c0_i32_0 = arith.constant 0 : i32
    %c0_i32_1 = arith.constant 0 : i32
    return %arg0, %c0_i32, %c0_i32_0 : i32, i32, i32
  }
}

</mosaic_0001>

<llo_original>
// kernel: vivit_forward.1
$region0: #{vivit_forward.1}
  #allocation0 [shape = 'u32[]', space=smem, size = 0x4, offset = 0x4, fixed_abs, tag = 'smem constant byte address 0x4 - core index']
  #allocation1 [shape = 'u32[144,128]{1,0:T(1,128)}', space=vmem, size = 0x12000, scoped, tag = 'internal scratch']
  %s0 = inlined_call_operand.vmem [shape: f32[2,32,96], index: 0, kind: input, shape index: {}]
  %s1 = inlined_call_operand.vmem [shape: bf16[96,32], index: 1, kind: input, shape index: {}]
  %s2 = inlined_call_operand.vmem [shape: f32[32,32], index: 2, kind: input, shape index: {}]
  %s3 = inlined_call_operand.vmem [shape: f32[8,128], index: 3, kind: input, shape index: {}]
  %s4 = inlined_call_operand.vmem [shape: bf16[32,128], index: 4, kind: input, shape index: {}]
  %s5 = inlined_call_operand.vmem [shape: bf16[2,32,96], index: 5, kind: input, shape index: {}]
  %s6 = inlined_call_operand.vmem [shape: bf16[2,32,32], index: 6, kind: input, shape index: {}]
  %s7 = inlined_call_operand.vmem [shape: bf16[2,32,64], index: 7, kind: input, shape index: {}]
  %s8 = inlined_call_operand.vmem [shape: bf16[2,64,32], index: 8, kind: input, shape index: {}]
  %s9 = inlined_call_operand.vmem [shape: f32[2,8,128], index: 9, kind: input, shape index: {}]
  %s10 = inlined_call_operand.hbm [shape: f32[2,1,128], index: 10, kind: output, shape index: {}]
  %s11 = sld [smem:[#allocation0]]
  $region73: #{vivit_forward.1} parent=0
    _
  %s13 = ssub.s32 1, %s11
  %s14 = scalar_select 0, %s13, %s11
  $region1: #{vivit_forward.1} parent=0
    #allocation2 [shape = 'u8[1024]{0}', space=vmem, size = 0x400, scoped, tag = 'output window, operand 0']
    #allocation3 [shape = 's32[2]{0}', space=sflag, size = 0x8, scoped, tag = 'scoped memory for vivit_forward.1']
    %15 = vsyncpa [#allocation3], 0
    %s16 = scalar_lea.sflag [#allocation3], 1
    %17 = vsyncpa %s16, 0
    loop: start=0, step=1, limit=4
    $region2: #{vivit_forward.1} parent=1 // loop_pre_header
      _
    $region3: #{vivit_forward.1} parent=1 // loop_header
      %s19 = sphi 0, %s23
      %p20 = scmp.ge.s32.totalorder %s19, 4
      %s29 = sphi 0, %s31
      %s32 = sphi 0, %s29
      %s33 = sphi 0, %s32
      %s49 = sphi 0, %s33
      %s53 = sphi 0, %s53
      %s55 = sphi 0, %s53
      %s56 = sphi 0, %s55
      %s70 = sphi 0, %s56
      %s74 = sphi 0, %s74
      %s76 = sphi 0, %s74
      %s77 = sphi 0, %s76
      %s91 = sphi 0, %s77
      %s95 = sphi 0, %s95
      %s97 = sphi 0, %s95
      %s98 = sphi 0, %s97
      %s112 = sphi 0, %s98
      %s116 = sphi 0, %s116
      %s118 = sphi 0, %s116
      %s119 = sphi 0, %s118
      %s133 = sphi 0, %s119
      %s137 = sphi 0, %s137
      %s139 = sphi 0, %s137
      %s140 = sphi 0, %s139
      %s154 = sphi 0, %s140
      %s158 = sphi 0, %s158
      %s160 = sphi 0, %s158
      %s161 = sphi 0, %s160
      %s175 = sphi 0, %s161
      %s179 = sphi 0, %s179
      %s181 = sphi 0, %s179
      %s182 = sphi 0, %s181
      %s196 = sphi 0, %s182
      %s200 = sphi 0, %s200
      %s202 = sphi 0, %s200
      %s203 = sphi 0, %s202
      %s217 = sphi 0, %s203
      %s221 = sphi 0, %s221
      %s223 = sphi 0, %s221
      %s224 = sphi 0, %s223
      %s238 = sphi 0, %s224
      %s244 = sphi 0, %s246
      %s247 = sphi 0, %s244
      %s248 = sphi 0, %s247
      %s264 = sphi 0, %s248
    $region4: #{vivit_forward.1} parent=1 // loop_header_branch
      %22 = sbr.rel (%p20) target = $region8
    $region5: #{vivit_forward.1} parent=1 // loop_body
      %s24 = ssub.s32 %s19, 1
      %s25 = ssub.s32 %s19, 2
      %s26 = sadd.s32 %s19, 1
      %s27 = ssub.s32 %s19, %s26
      %p28 = scmp.eq.s32.totalorder %s27, 0
      %s30 = sadd.s32 %s29, 1
      %s31 = scalar_select %p28, %s29, %s30
      %p34 = pneg %p28
      %p35 = scmp.eq.s32.totalorder %s19, 1
      %p36 = por %p34, %p35
      %p37 = scmp.ne.s32.totalorder %s29, %s32
      %p38 = scmp.eq.s32.totalorder %s19, 0
      %p39 = por %p37, %p38
      %p40 = scmp.ne.s32.totalorder %s29, %s32
      %p41 = scmp.eq.s32.totalorder %s24, 1
      %p42 = por %p40, %p41
      %p43 = scmp.ne.s32.totalorder %s32, %s33
      %p44 = scmp.eq.s32.totalorder %s24, 0
      %p45 = por %p43, %p44
      %p46 = scmp.ne.s32.totalorder %s32, %s33
      %p47 = scmp.eq.s32.totalorder %s25, 1
      %p48 = por %p46, %p47
      %p50 = scmp.ne.s32.totalorder %s33, %s49
      %p51 = scmp.eq.s32.totalorder %s25, 0
      %p52 = por %p50, %p51
      %s54 = sadd.s32 %s53, 1
      %p57 = scmp.eq.s32.totalorder %s19, 1
      %p58 = scmp.ne.s32.totalorder %s53, %s55
      %p59 = scmp.eq.s32.totalorder %s19, 0
      %p60 = por %p58, %p59
      %p61 = scmp.ne.s32.totalorder %s53, %s55
      %p62 = scmp.eq.s32.totalorder %s24, 1
      %p63 = por %p61, %p62
      %p64 = scmp.ne.s32.totalorder %s55, %s56
      %p65 = scmp.eq.s32.totalorder %s24, 0
      %p66 = por %p64, %p65
      %p67 = scmp.ne.s32.totalorder %s55, %s56
      %p68 = scmp.eq.s32.totalorder %s25, 1
      %p69 = por %p67, %p68
      %p71 = scmp.ne.s32.totalorder %s56, %s70
      %p72 = scmp.eq.s32.totalorder %s25, 0
      %p73 = por %p71, %p72
      %s75 = sadd.s32 %s74, 1
      %p78 = scmp.eq.s32.totalorder %s19, 1
      %p79 = scmp.ne.s32.totalorder %s74, %s76
      %p80 = scmp.eq.s32.totalorder %s19, 0
      %p81 = por %p79, %p80
      %p82 = scmp.ne.s32.totalorder %s74, %s76
      %p83 = scmp.eq.s32.totalorder %s24, 1
      %p84 = por %p82, %p83
      %p85 = scmp.ne.s32.totalorder %s76, %s77
      %p86 = scmp.eq.s32.totalorder %s24, 0
      %p87 = por %p85, %p86
      %p88 = scmp.ne.s32.totalorder %s76, %s77
      %p89 = scmp.eq.s32.totalorder %s25, 1
      %p90 = por %p88, %p89
      %p92 = scmp.ne.s32.totalorder %s77, %s91
      %p93 = scmp.eq.s32.totalorder %s25, 0
      %p94 = por %p92, %p93
      %s96 = sadd.s32 %s95, 1
      %p99 = scmp.eq.s32.totalorder %s19, 1
      %p100 = scmp.ne.s32.totalorder %s95, %s97
      %p101 = scmp.eq.s32.totalorder %s19, 0
      %p102 = por %p100, %p101
      %p103 = scmp.ne.s32.totalorder %s95, %s97
      %p104 = scmp.eq.s32.totalorder %s24, 1
      %p105 = por %p103, %p104
      %p106 = scmp.ne.s32.totalorder %s97, %s98
      %p107 = scmp.eq.s32.totalorder %s24, 0
      %p108 = por %p106, %p107
      %p109 = scmp.ne.s32.totalorder %s97, %s98
      %p110 = scmp.eq.s32.totalorder %s25, 1
      %p111 = por %p109, %p110
      %p113 = scmp.ne.s32.totalorder %s98, %s112
      %p114 = scmp.eq.s32.totalorder %s25, 0
      %p115 = por %p113, %p114
      %s117 = sadd.s32 %s116, 1
      %p120 = scmp.eq.s32.totalorder %s19, 1
      %p121 = scmp.ne.s32.totalorder %s116, %s118
      %p122 = scmp.eq.s32.totalorder %s19, 0
      %p123 = por %p121, %p122
      %p124 = scmp.ne.s32.totalorder %s116, %s118
      %p125 = scmp.eq.s32.totalorder %s24, 1
      %p126 = por %p124, %p125
      %p127 = scmp.ne.s32.totalorder %s118, %s119
      %p128 = scmp.eq.s32.totalorder %s24, 0
      %p129 = por %p127, %p128
      %p130 = scmp.ne.s32.totalorder %s118, %s119
      %p131 = scmp.eq.s32.totalorder %s25, 1
      %p132 = por %p130, %p131
      %p134 = scmp.ne.s32.totalorder %s119, %s133
      %p135 = scmp.eq.s32.totalorder %s25, 0
      %p136 = por %p134, %p135
      %s138 = sadd.s32 %s137, 1
      %p141 = scmp.eq.s32.totalorder %s19, 1
      %p142 = scmp.ne.s32.totalorder %s137, %s139
      %p143 = scmp.eq.s32.totalorder %s19, 0
      %p144 = por %p142, %p143
      %p145 = scmp.ne.s32.totalorder %s137, %s139
      %p146 = scmp.eq.s32.totalorder %s24, 1
      %p147 = por %p145, %p146
      %p148 = scmp.ne.s32.totalorder %s139, %s140
      %p149 = scmp.eq.s32.totalorder %s24, 0
      %p150 = por %p148, %p149
      %p151 = scmp.ne.s32.totalorder %s139, %s140
      %p152 = scmp.eq.s32.totalorder %s25, 1
      %p153 = por %p151, %p152
      %p155 = scmp.ne.s32.totalorder %s140, %s154
      %p156 = scmp.eq.s32.totalorder %s25, 0
      %p157 = por %p155, %p156
      %s159 = sadd.s32 %s158, 1
      %p162 = scmp.eq.s32.totalorder %s19, 1
      %p163 = scmp.ne.s32.totalorder %s158, %s160
      %p164 = scmp.eq.s32.totalorder %s19, 0
      %p165 = por %p163, %p164
      %p166 = scmp.ne.s32.totalorder %s158, %s160
      %p167 = scmp.eq.s32.totalorder %s24, 1
      %p168 = por %p166, %p167
      %p169 = scmp.ne.s32.totalorder %s160, %s161
      %p170 = scmp.eq.s32.totalorder %s24, 0
      %p171 = por %p169, %p170
      %p172 = scmp.ne.s32.totalorder %s160, %s161
      %p173 = scmp.eq.s32.totalorder %s25, 1
      %p174 = por %p172, %p173
      %p176 = scmp.ne.s32.totalorder %s161, %s175
      %p177 = scmp.eq.s32.totalorder %s25, 0
      %p178 = por %p176, %p177
      %s180 = sadd.s32 %s179, 1
      %p183 = scmp.eq.s32.totalorder %s19, 1
      %p184 = scmp.ne.s32.totalorder %s179, %s181
      %p185 = scmp.eq.s32.totalorder %s19, 0
      %p186 = por %p184, %p185
      %p187 = scmp.ne.s32.totalorder %s179, %s181
      %p188 = scmp.eq.s32.totalorder %s24, 1
      %p189 = por %p187, %p188
      %p190 = scmp.ne.s32.totalorder %s181, %s182
      %p191 = scmp.eq.s32.totalorder %s24, 0
      %p192 = por %p190, %p191
      %p193 = scmp.ne.s32.totalorder %s181, %s182
      %p194 = scmp.eq.s32.totalorder %s25, 1
      %p195 = por %p193, %p194
      %p197 = scmp.ne.s32.totalorder %s182, %s196
      %p198 = scmp.eq.s32.totalorder %s25, 0
      %p199 = por %p197, %p198
      %s201 = sadd.s32 %s200, 1
      %p204 = scmp.eq.s32.totalorder %s19, 1
      %p205 = scmp.ne.s32.totalorder %s200, %s202
      %p206 = scmp.eq.s32.totalorder %s19, 0
      %p207 = por %p205, %p206
      %p208 = scmp.ne.s32.totalorder %s200, %s202
      %p209 = scmp.eq.s32.totalorder %s24, 1
      %p210 = por %p208, %p209
      %p211 = scmp.ne.s32.totalorder %s202, %s203
      %p212 = scmp.eq.s32.totalorder %s24, 0
      %p213 = por %p211, %p212
      %p214 = scmp.ne.s32.totalorder %s202, %s203
      %p215 = scmp.eq.s32.totalorder %s25, 1
      %p216 = por %p214, %p215
      %p218 = scmp.ne.s32.totalorder %s203, %s217
      %p219 = scmp.eq.s32.totalorder %s25, 0
      %p220 = por %p218, %p219
      %s222 = sadd.s32 %s221, 1
      %p225 = scmp.eq.s32.totalorder %s19, 1
      %p226 = scmp.ne.s32.totalorder %s221, %s223
      %p227 = scmp.eq.s32.totalorder %s19, 0
      %p228 = por %p226, %p227
      %p229 = scmp.ne.s32.totalorder %s221, %s223
      %p230 = scmp.eq.s32.totalorder %s24, 1
      %p231 = por %p229, %p230
      %p232 = scmp.ne.s32.totalorder %s223, %s224
      %p233 = scmp.eq.s32.totalorder %s24, 0
      %p234 = por %p232, %p233
      %p235 = scmp.ne.s32.totalorder %s223, %s224
      %p236 = scmp.eq.s32.totalorder %s25, 1
      %p237 = por %p235, %p236
      %p239 = scmp.ne.s32.totalorder %s224, %s238
      %p240 = scmp.eq.s32.totalorder %s25, 0
      %p241 = por %p239, %p240
      %s242 = ssub.s32 %s19, %s26
      %p243 = scmp.eq.s32.totalorder %s242, 0
      %s245 = sadd.s32 %s244, 1
      %s246 = scalar_select %p243, %s244, %s245
      %p249 = pneg %p243
      %p250 = scmp.eq.s32.totalorder %s19, 1
      %p251 = por %p249, %p250
      %p252 = scmp.ne.s32.totalorder %s244, %s247
      %p253 = scmp.eq.s32.totalorder %s19, 0
      %p254 = por %p252, %p253
      %p255 = scmp.ne.s32.totalorder %s244, %s247
      %p256 = scmp.eq.s32.totalorder %s24, 1
      %p257 = por %p255, %p256
      %p258 = scmp.ne.s32.totalorder %s247, %s248
      %p259 = scmp.eq.s32.totalorder %s24, 0
      %p260 = por %p258, %p259
      %p261 = scmp.ne.s32.totalorder %s247, %s248
      %p262 = scmp.eq.s32.totalorder %s25, 1
      %p263 = por %p261, %p262
      %p265 = scmp.ne.s32.totalorder %s248, %s264
      %p266 = scmp.eq.s32.totalorder %s25, 0
      %p267 = por %p265, %p266
      %p268 = scmp.le.s32.totalorder 1, %s19
      %p269 = scmp.lt.s32.totalorder %s19, 3
      %p270 = pnand %p268, %p269
      %p271 = pneg %p270
      // Predicated region
      $region9: #{vivit_forward.1} parent=5 // pred_check
        _
      $region10: #{vivit_forward.1} parent=5 // pred_check_branch
        %273 = sbr.rel (%p270) target = $region12
      $region11: #{vivit_forward.1} parent=5 // pred_region
        %s274 = ssub.s32 %s19, 1
        // Predicated region
        $region13: #{vivit_forward.1} parent=11 // pred_check
          %p275 = pneg %p66
        $region14: #{vivit_forward.1} parent=11 // pred_check_branch
          %277 = sbr.rel (%p275) target = $region16
        $region15: #{vivit_forward.1} parent=11 // pred_region
          _
        $region16: #{vivit_forward.1} parent=11 // pred_fallthru
          _
        // Predicated region
        $region17: #{vivit_forward.1} parent=11 // pred_check
          %p278 = pneg %p87
        $region18: #{vivit_forward.1} parent=11 // pred_check_branch
          %280 = sbr.rel (%p278) target = $region20
        $region19: #{vivit_forward.1} parent=11 // pred_region
          _
        $region20: #{vivit_forward.1} parent=11 // pred_fallthru
          _
        // Predicated region
        $region21: #{vivit_forward.1} parent=11 // pred_check
          %p281 = pneg %p108
        $region22: #{vivit_forward.1} parent=11 // pred_check_branch
          %283 = sbr.rel (%p281) target = $region24
        $region23: #{vivit_forward.1} parent=11 // pred_region
          _
        $region24: #{vivit_forward.1} parent=11 // pred_fallthru
          _
        // Predicated region
        $region25: #{vivit_forward.1} parent=11 // pred_check
          %p284 = pneg %p129
        $region26: #{vivit_forward.1} parent=11 // pred_check_branch
          %286 = sbr.rel (%p284) target = $region28
        $region27: #{vivit_forward.1} parent=11 // pred_region
          _
        $region28: #{vivit_forward.1} parent=11 // pred_fallthru
          _
        // Predicated region
        $region29: #{vivit_forward.1} parent=11 // pred_check
          %p287 = pneg %p150
        $region30: #{vivit_forward.1} parent=11 // pred_check_branch
          %289 = sbr.rel (%p287) target = $region32
        $region31: #{vivit_forward.1} parent=11 // pred_region
          _
        $region32: #{vivit_forward.1} parent=11 // pred_fallthru
          _
        // Predicated region
        $region33: #{vivit_forward.1} parent=11 // pred_check
          %p290 = pneg %p171
        $region34: #{vivit_forward.1} parent=11 // pred_check_branch
          %292 = sbr.rel (%p290) target = $region36
        $region35: #{vivit_forward.1} parent=11 // pred_region
          _
        $region36: #{vivit_forward.1} parent=11 // pred_fallthru
          _
        // Predicated region
        $region37: #{vivit_forward.1} parent=11 // pred_check
          %p293 = pneg %p192
        $region38: #{vivit_forward.1} parent=11 // pred_check_branch
          %295 = sbr.rel (%p293) target = $region40
        $region39: #{vivit_forward.1} parent=11 // pred_region
          _
        $region40: #{vivit_forward.1} parent=11 // pred_fallthru
          _
        // Predicated region
        $region41: #{vivit_forward.1} parent=11 // pred_check
          %p296 = pneg %p213
        $region42: #{vivit_forward.1} parent=11 // pred_check_branch
          %298 = sbr.rel (%p296) target = $region44
        $region43: #{vivit_forward.1} parent=11 // pred_region
          _
        $region44: #{vivit_forward.1} parent=11 // pred_fallthru
          _
        // Predicated region
        $region45: #{vivit_forward.1} parent=11 // pred_check
          %p299 = pneg %p234
        $region46: #{vivit_forward.1} parent=11 // pred_check_branch
          %301 = sbr.rel (%p299) target = $region48
        $region47: #{vivit_forward.1} parent=11 // pred_region
          _
        $region48: #{vivit_forward.1} parent=11 // pred_fallthru
          _
      $region12: #{vivit_forward.1} parent=5 // pred_fallthru
        _
      %p302 = scmp.lt.s32.totalorder %s19, 2
      // Predicated region
      $region49: #{vivit_forward.1} parent=5 // pred_check
        %p303 = pneg %p302
      $region50: #{vivit_forward.1} parent=5 // pred_check_branch
        %305 = sbr.rel (%p303) target = $region52
      $region51: #{vivit_forward.1} parent=5 // pred_region
        // Predicated region
        $region53: #{vivit_forward.1} parent=51 // pred_check
          %p306 = pneg %p39
        $region54: #{vivit_forward.1} parent=51 // pred_check_branch
          %308 = sbr.rel (%p306) target = $region56
        $region55: #{vivit_forward.1} parent=51 // pred_region
          %p309 = scmp.lt.s32.totalorder %s19, 1
          %s310 = scalar_select %p309, %s19, 1
          %s311 = smul.addr %s310, 4
          %s312 = smul.addr %s311, 8
          %s313 = scalar_lea.vmem %s0, %s312
        $region56: #{vivit_forward.1} parent=51 // pred_fallthru
          _
      $region52: #{vivit_forward.1} parent=5 // pred_fallthru
        _
      %p314 = scmp.le.s32.totalorder 1, %s19
      %p315 = scmp.lt.s32.totalorder %s19, 3
      %p316 = pnand %p314, %p315
      %p317 = pneg %p316
      // Predicated region
      $region57: #{vivit_forward.1} parent=5 // pred_check
        _
      $region58: #{vivit_forward.1} parent=5 // pred_check_branch
        %319 = sbr.rel (%p316) target = $region60
      $region59: #{vivit_forward.1} parent=5 // pred_region
        %s320 = ssub.s32 %s19, 1
        %p321 = scmp.lt.s32.totalorder %s24, 1
        %s322 = scalar_select %p321, %s24, 1
        %s323 = smul.addr %s322, 4
        %s324 = smul.addr %s323, 8
        %s325 = scalar_lea.vmem %s0, %s324
        %p326 = pneg %p45
        %p327 = pneg %p42
        %p328 = pneg %p66
        %p329 = pneg %p63
        %p330 = pneg %p87
        %p331 = pneg %p84
        %p332 = pneg %p108
        %p333 = pneg %p105
        %p334 = pneg %p129
        %p335 = pneg %p126
        %p336 = pneg %p150
        %p337 = pneg %p147
        %p338 = pneg %p171
        %p339 = pneg %p168
        %p340 = pneg %p192
        %p341 = pneg %p189
        %p342 = pneg %p213
        %p343 = pneg %p210
        %p344 = pneg %p234
        %p345 = pneg %p231
        %p346 = pneg %p260
        %p347 = pneg %p257
        %s348 = sand.u32 %s247, 1
        %s349 = scalar_lea.sflag [#allocation3], %s348
        %s350 = sand.u32 %s247, 1
        %s351 = scalar_lea.vmem [#allocation2], %s350
        %p352 = scmp.lt.s32.totalorder %s24, 1
        %s353 = scalar_select %p352, %s24, 1
        %s354 = smul.addr %s353, 4
        %s355 = smul.addr %s354, 8
        %s356 = scalar_lea.vmem %s0, %s355
        %v358 = vld [vmem:[%s3] sm:$0xff]
        %v359 = vld [vmem:[%s356] sm:$0xff]
        %v360 = vld [vmem:[%s356 + $0x8] sm:$0xff]
        %v361 = vld [vmem:[%s356 + $0x10] sm:$0xff]
        %v362 = vld [vmem:[%s356 + $0x18] sm:$0xff]
        %v363 = vpack.c.bf16 %v360, %v359
        %v364 = vpack.c.bf16 %v362, %v361
        %v365 = vld [vmem:[%s1] sm:$0xf]
        %v366 = vld [vmem:[%s1 + $0x4] sm:$0xf]
        %v367 = vld [vmem:[%s1 + $0x8] sm:$0xf]
        %v368 = vld [vmem:[%s1 + $0xc] sm:$0xf]
        %v369 = vld [vmem:[%s1 + $0x10] sm:$0xf]
        %v370 = vld [vmem:[%s1 + $0x14] sm:$0xf]
        %v371 = vld [vmem:[%s1 + $0x18] sm:$0xf]
        %v372 = vld [vmem:[%s1 + $0x1c] sm:$0xf]
        %v373 = vld [vmem:[%s1 + $0x20] sm:$0xf]
        %v374 = vld [vmem:[%s1 + $0x24] sm:$0xf]
        %v375 = vld [vmem:[%s1 + $0x28] sm:$0xf]
        %v376 = vld [vmem:[%s1 + $0x2c] sm:$0xf]
        %v377 = vlaneseq
        %v378 = vshrl.u32 %v377, 7
        %v379 = vsub.s32 0, %v378
        %v380 = vrot.slane %v358, %v379
        %v393 = vunpack.c.l.b16 %v365
        %v394 = vunpack.c.l.b16 %v366
        %v395 = vunpack.c.l.b16 %v367
        %v396 = vunpack.c.l.b16 %v368
        %v397 = vunpack.c.l.b16 %v369
        %v398 = vunpack.c.l.b16 %v370
        %v399 = vunpack.c.l.b16 %v371
        %v400 = vunpack.c.l.b16 %v372
        %v401 = vunpack.c.l.b16 %v373
        %v402 = vunpack.c.l.b16 %v374
        %v403 = vunpack.c.l.b16 %v375
        %v404 = vunpack.c.l.b16 %v376
        %v405 = vpack.c.b16 %v394, %v393
        %v406 = vpack.c.b16 %v396, %v395
        %v407 = vpack.c.b16 %v398, %v397
        %v408 = vpack.c.b16 %v400, %v399
        %v409 = vpack.c.b16 %v402, %v401
        %v410 = vpack.c.b16 %v404, %v403
        %vm417 = vcmask 785408
        %v419 = vsel %vm417, %v363, 0
        %v422 = vsel %vm417, %v364, 0
        %424 = vmatprep.subr.bf16.mxu0 0
        %425 = vmatpush1.bf16.msra.mxu0 0
        %426 = vmatprep.subr.bf16.mxu0 0
        %427 = vmatpush1.bf16.msra.mxu0 0
        %428 = vmatprep.subr.bf16.mxu0 0
        %429 = vmatpush1.bf16.msra.mxu0 %v410
        %430 = vmatprep.subr.bf16.mxu0 0
        %431 = vmatpush1.bf16.msra.mxu0 %v409
        %432 = vmatprep.subr.bf16.mxu0 0
        %433 = vmatpush1.bf16.msra.mxu0 %v408
        %434 = vmatprep.subr.bf16.mxu0 0
        %435 = vmatpush1.bf16.msra.mxu0 %v407
        %436 = vmatprep.subr.bf16.mxu0 0
        %437 = vmatpush1.bf16.msra.mxu0 %v406
        %438 = vmatprep.subr.bf16.mxu0 0
        %439 = vmatpush1.bf16.msra.mxu0 %v405
        %440 = vmatprep.subr.bf16.mxu0 0
        %441 = vmatpush2.bf16.msra.mxu0 0
        %442 = vmatprep.subr.bf16.mxu0 0
        %443 = vmatpush2.bf16.msra.mxu0 0
        %444 = vmatprep.subr.bf16.mxu0 0
        %445 = vmatpush2.bf16.msra.mxu0 0
        %446 = vmatprep.subr.bf16.mxu0 0
        %447 = vmatpush2.bf16.msra.mxu0 0
        %448 = vmatprep.subr.bf16.mxu0 0
        %449 = vmatpush2.bf16.msra.mxu0 0
        %450 = vmatprep.subr.bf16.mxu0 0
        %451 = vmatpush2.bf16.msra.mxu0 0
        %452 = vmatprep.subr.bf16.mxu0 0
        %453 = vmatpush2.bf16.msra.mxu0 0
        %454 = vmatprep.subr.bf16.mxu0 0
        %455 = vmatpush2.bf16.msra.mxu0 0
        %456 = vmatprep.mubr.bf16.mxu0 0
        %457 = vmatmul.mubr.bf16.gmra.mxu0 %v419
        %v458 = vpop.f32.mrf.mxu0
        %v459 = vadd.f32 %v380, %v458
        %v460 = vpop.f32.mrf.mxu0
        %v461 = vpop.f32.mrf.mxu0
        %v462 = vadd.f32 %v380, %v461
        %v463 = vpop.f32.mrf.mxu0
        %464 = vmatprep.mubr.bf16.mxu0 0
        %465 = vmatmul.mubr.bf16.gmra.mxu0 %v422
        %v466 = vpop.f32.mrf.mxu0
        %v467 = vadd.f32 %v380, %v466
        %v468 = vpop.f32.mrf.mxu0
        %v469 = vpop.f32.mrf.mxu0
        %v470 = vadd.f32 %v380, %v469
        %v471 = vpop.f32.mrf.mxu0
        %472 = vdwg.mxu0
        %v473 = vld [vmem:[%s2] sm:$0xff]
        %v474 = vld [vmem:[%s2 + $0x8] sm:$0xff]
        %v475 = vld [vmem:[%s2 + $0x10] sm:$0xff]
        %v476 = vld [vmem:[%s2 + $0x18] sm:$0xff]
        %v477 = vadd.f32 %v459, %v473
        %v478 = vadd.f32 %v462, %v474
        %v479 = vadd.f32 %v467, %v475
        %v480 = vadd.f32 %v470, %v476
        %v482 = vrot.slane %v358, 1
        %v484 = vld [vmem:[%s9] sm:$0xff]
        %vm485 = vcmask 261120
        %v486 = vsel %vm485, %v477, 0.0
        %487 = vadd.xlane.f32.xlu0 %v486
        %v488 = vpop.xlane.xlu0 %487
        %v489 = vsel %vm485, %v478, 0.0
        %490 = vadd.xlane.f32.xlu0 %v489
        %v491 = vpop.xlane.xlu0 %490
        %v492 = vsel %vm485, %v479, 0.0
        %493 = vadd.xlane.f32.xlu0 %v492
        %v494 = vpop.xlane.xlu0 %493
        %v495 = vsel %vm485, %v480, 0.0
        %496 = vadd.xlane.f32.xlu0 %v495
        %v497 = vpop.xlane.xlu0 %496
        %vm498 = vcmask 253952
        %v499 = vsel %vm498, %v482, 0.0
        %500 = vadd.xlane.f32.xlu0 %v499
        %v501 = vpop.xlane.xlu0 %500
        %v502 = vrcp.pop 32.0
        %v503 = vmul.f32 %v488, %v502
        %v504 = vmul.f32 %v491, %v502
        %v505 = vmul.f32 %v494, %v502
        %v506 = vmul.f32 %v497, %v502
        %v507 = vmul.f32 %v501, %v502
        %v508 = vsub.f32 %v477, %v503
        %v509 = vsub.f32 %v478, %v504
        %v510 = vsub.f32 %v479, %v505
        %v511 = vsub.f32 %v480, %v506
        %v512 = vsub.f32 %v482, %v507
        %v513 = vmul.f32 %v508, %v508
        %v514 = vmul.f32 %v509, %v509
        %v515 = vmul.f32 %v510, %v510
        %v516 = vmul.f32 %v511, %v511
        %v517 = vmul.f32 %v512, %v512
        %v518 = vsel %vm485, %v513, 0.0
        %519 = vadd.xlane.f32.xlu0 %v518
        %v520 = vpop.xlane.xlu0 %519
        %v521 = vsel %vm485, %v514, 0.0
        %522 = vadd.xlane.f32.xlu0 %v521
        %v523 = vpop.xlane.xlu0 %522
        %v524 = vsel %vm485, %v515, 0.0
        %525 = vadd.xlane.f32.xlu0 %v524
        %v526 = vpop.xlane.xlu0 %525
        %v527 = vsel %vm485, %v516, 0.0
        %528 = vadd.xlane.f32.xlu0 %v527
        %v529 = vpop.xlane.xlu0 %528
        %v530 = vsel %vm498, %v517, 0.0
        %531 = vadd.xlane.f32.xlu0 %v530
        %v532 = vpop.xlane.xlu0 %531
        %v533 = vmul.f32 %v520, %v502
        %v534 = vmul.f32 %v523, %v502
        %v535 = vmul.f32 %v526, %v502
        %v536 = vmul.f32 %v529, %v502
        %v537 = vmul.f32 %v532, %v502
        %v538 = vadd.f32 %v533, 1e-06
        %v539 = vadd.f32 %v534, 1e-06
        %v540 = vadd.f32 %v535, 1e-06
        %v541 = vadd.f32 %v536, 1e-06
        %v542 = vadd.f32 %v537, 1e-06
        %v543 = vrsqrt.pop %v538
        %v544 = vrsqrt.pop %v539
        %v545 = vrsqrt.pop %v540
        %v546 = vrsqrt.pop %v541
        %v547 = vrsqrt.pop %v542
        %v548 = vmul.f32 %v508, %v543
        %v549 = vmul.f32 %v509, %v544
        %v550 = vmul.f32 %v510, %v545
        %v551 = vmul.f32 %v511, %v546
        %v552 = vmul.f32 %v512, %v547
        %v553 = vlaneseq
        %v554 = vshrl.u32 %v553, 7
        %v555 = vsub.s32 0, %v554
        %v556 = vrot.slane %v484, %v555
        %v557 = vmul.f32 %v548, %v556
        %v558 = vmul.f32 %v549, %v556
        %v559 = vmul.f32 %v550, %v556
        %v560 = vmul.f32 %v551, %v556
        %v561 = vmul.f32 %v552, %v556
        %v562 = vlaneseq
        %v563 = vshrl.u32 %v562, 7
        %v564 = vsub.s32 1, %v563
        %v565 = vrot.slane %v484, %v564
        %v566 = vadd.f32 %v557, %v565
        %v567 = vadd.f32 %v558, %v565
        %v568 = vadd.f32 %v559, %v565
        %v569 = vadd.f32 %v560, %v565
        %v570 = vadd.f32 %v561, %v565
        %v571 = vpack.c.bf16 %v567, %v566
        %v572 = vpack.c.bf16 %v569, %v568
        %v573 = vpack.c.bf16 %v570, %v570
        %v574 = vld [vmem:[%s5] sm:$0xf]
        %v575 = vld [vmem:[%s5 + $0x4] sm:$0xf]
        %v576 = vld [vmem:[%s5 + $0x8] sm:$0xf]
        %v577 = vld [vmem:[%s5 + $0xc] sm:$0xf]
        %v578 = vlaneseq
        %v579 = vshrl.u32 %v578, 7
        %v580 = vsub.s32 4, %v579
        %v581 = vrot.slane %v484, %v580
        %v586 = vunpack.c.l.b16 %v574
        %v587 = vunpack.c.l.b16 %v575
        %v588 = vunpack.c.l.b16 %v576
        %v589 = vunpack.c.l.b16 %v577
        %v590 = vpack.c.b16 %v587, %v586
        %v591 = vpack.c.b16 %v589, %v588
        %v595 = vsel %vm485, %v571, 0
        %v598 = vsel %vm485, %v572, 0
        %v601 = vsel %vm485, %v573, 0
        %603 = vmatprep.subr.bf16.mxu0 0
        %604 = vmatpush1.bf16.msra.mxu0 0
        %605 = vmatprep.subr.bf16.mxu0 0
        %606 = vmatpush1.bf16.msra.mxu0 0
        %607 = vmatprep.subr.bf16.mxu0 0
        %608 = vmatpush1.bf16.msra.mxu0 0
        %609 = vmatprep.subr.bf16.mxu0 0
        %610 = vmatpush1.bf16.msra.mxu0 0
        %611 = vmatprep.subr.bf16.mxu0 0
        %612 = vmatpush1.bf16.msra.mxu0 0
        %613 = vmatprep.subr.bf16.mxu0 0
        %614 = vmatpush1.bf16.msra.mxu0 0
        %615 = vmatprep.subr.bf16.mxu0 0
        %616 = vmatpush1.bf16.msra.mxu0 %v591
        %617 = vmatprep.subr.bf16.mxu0 0
        %618 = vmatpush1.bf16.msra.mxu0 %v590
        %619 = vmatprep.subr.bf16.mxu0 0
        %620 = vmatpush2.bf16.msra.mxu0 0
        %621 = vmatprep.subr.bf16.mxu0 0
        %622 = vmatpush2.bf16.msra.mxu0 0
        %623 = vmatprep.subr.bf16.mxu0 0
        %624 = vmatpush2.bf16.msra.mxu0 0
        %625 = vmatprep.subr.bf16.mxu0 0
        %626 = vmatpush2.bf16.msra.mxu0 0
        %627 = vmatprep.subr.bf16.mxu0 0
        %628 = vmatpush2.bf16.msra.mxu0 0
        %629 = vmatprep.subr.bf16.mxu0 0
        %630 = vmatpush2.bf16.msra.mxu0 0
        %631 = vmatprep.subr.bf16.mxu0 0
        %632 = vmatpush2.bf16.msra.mxu0 0
        %633 = vmatprep.subr.bf16.mxu0 0
        %634 = vmatpush2.bf16.msra.mxu0 0
        %635 = vmatprep.mubr.bf16.mxu0 0
        %636 = vmatmul.mubr.bf16.gmra.mxu0 %v595
        %v637 = vpop.f32.mrf.mxu0
        %v638 = vadd.f32 %v581, %v637
        %v639 = vpop.f32.mrf.mxu0
        %v640 = vpop.f32.mrf.mxu0
        %v641 = vadd.f32 %v581, %v640
        %v642 = vpop.f32.mrf.mxu0
        %643 = vmatprep.mubr.bf16.mxu0 0
        %644 = vmatmul.mubr.bf16.gmra.mxu0 %v598
        %v645 = vpop.f32.mrf.mxu0
        %v646 = vadd.f32 %v581, %v645
        %v647 = vpop.f32.mrf.mxu0
        %v648 = vpop.f32.mrf.mxu0
        %v649 = vadd.f32 %v581, %v648
        %v650 = vpop.f32.mrf.mxu0
        %651 = vmatprep.mubr.bf16.mxu0 0
        %652 = vmatmul.mubr.bf16.gmra.mxu0 %v601
        %v653 = vpop.f32.mrf.mxu0
        %v654 = vadd.f32 %v581, %v653
        %v655 = vpop.f32.mrf.mxu0
        %v656 = vpop.f32.mrf.mxu0
        %v657 = vpop.f32.mrf.mxu0
        %658 = vdwg.mxu0
        %664 = vrot.lane.b32.xlu0 %v638, 96
        %v665 = vpop.permute.xlu0 %664
        %666 = vrot.lane.b32.xlu0 %v641, 96
        %v667 = vpop.permute.xlu0 %666
        %668 = vrot.lane.b32.xlu0 %v646, 96
        %v669 = vpop.permute.xlu0 %668
        %670 = vrot.lane.b32.xlu0 %v649, 96
        %v671 = vpop.permute.xlu0 %670
        %672 = vrot.lane.b32.xlu0 %v654, 96
        %v673 = vpop.permute.xlu0 %672
        %vm674 = vcmask 64512
        %v675 = vsel %vm674, %v638, 0
        %v677 = vsel %vm674, %v641, 0
        %v679 = vsel %vm674, %v646, 0
        %v681 = vsel %vm674, %v649, 0
        %v683 = vsel %vm674, %v654, 0
        %v685 = vsel %vm674, %v665, 0
        %v687 = vsel %vm674, %v667, 0
        %v689 = vsel %vm674, %v669, 0
        %v691 = vsel %vm674, %v671, 0
        %v693 = vsel %vm674, %v673, 0
        %695 = vmatprep.subr.mxu0 0.0
        %696 = vmatpush1.xpose.msra.mxu0 0.0
        %697 = vmatprep.subr.mxu0 0.0
        %698 = vmatpush1.xpose.msra.mxu0 0.0
        %699 = vmatprep.subr.mxu0 0.0
        %700 = vmatpush1.xpose.msra.mxu0 0.0
        %701 = vmatprep.subr.mxu0 0.0
        %702 = vmatpush1.xpose.msra.mxu0 0.0
        %703 = vmatprep.subr.mxu0 0.0
        %704 = vmatpush1.xpose.msra.mxu0 0.0
        %705 = vmatprep.subr.mxu0 0.0
        %706 = vmatpush1.xpose.msra.mxu0 0.0
        %707 = vmatprep.subr.mxu0 0.0
        %708 = vmatpush1.xpose.msra.mxu0 0.0
        %709 = vmatprep.subr.mxu0 0.0
        %710 = vmatpush1.xpose.msra.mxu0 0.0
        %711 = vmatprep.subr.mxu0 0.0
        %712 = vmatpush1.xpose.msra.mxu0 0.0
        %713 = vmatprep.subr.mxu0 0.0
        %714 = vmatpush1.xpose.msra.mxu0 0.0
        %715 = vmatprep.subr.mxu0 0.0
        %716 = vmatpush1.xpose.msra.mxu0 0.0
        %717 = vmatprep.subr.mxu0 0.0
        %718 = vmatpush1.xpose.msra.mxu0 %v693
        %719 = vmatprep.subr.mxu0 0.0
        %720 = vmatpush1.xpose.msra.mxu0 %v691
        %721 = vmatprep.subr.mxu0 0.0
        %722 = vmatpush1.xpose.msra.mxu0 %v689
        %723 = vmatprep.subr.mxu0 0.0
        %724 = vmatpush1.xpose.msra.mxu0 %v687
        %725 = vmatprep.subr.mxu0 0.0
        %726 = vmatpush1.xpose.msra.mxu0 %v685
        %727 = vmatprep.subr.mxu0 0.0
        %728 = vmatpush2.xpose.msra.mxu0 0.0
        %729 = vmatprep.subr.mxu0 0.0
        %730 = vmatpush2.xpose.msra.mxu0 0.0
        %731 = vmatprep.subr.mxu0 0.0
        %732 = vmatpush2.xpose.msra.mxu0 0.0
        %733 = vmatprep.subr.mxu0 0.0
        %734 = vmatpush2.xpose.msra.mxu0 0.0
        %735 = vmatprep.subr.mxu0 0.0
        %736 = vmatpush2.xpose.msra.mxu0 0.0
        %737 = vmatprep.subr.mxu0 0.0
        %738 = vmatpush2.xpose.msra.mxu0 0.0
        %739 = vmatprep.subr.mxu0 0.0
        %740 = vmatpush2.xpose.msra.mxu0 0.0
        %741 = vmatprep.subr.mxu0 0.0
        %742 = vmatpush2.xpose.msra.mxu0 0.0
        %743 = vmatprep.subr.mxu0 0.0
        %744 = vmatpush2.xpose.msra.mxu0 0.0
        %745 = vmatprep.subr.mxu0 0.0
        %746 = vmatpush2.xpose.msra.mxu0 0.0
        %747 = vmatprep.subr.mxu0 0.0
        %748 = vmatpush2.xpose.msra.mxu0 0.0
        %749 = vmatprep.subr.mxu0 0.0
        %750 = vmatpush2.xpose.msra.mxu0 0.0
        %751 = vmatprep.subr.mxu0 0.0
        %752 = vmatpush2.xpose.msra.mxu0 0.0
        %753 = vmatprep.subr.mxu0 0.0
        %754 = vmatpush2.xpose.msra.mxu0 0.0
        %755 = vmatprep.subr.mxu0 0.0
        %756 = vmatpush2.xpose.msra.mxu0 0.0
        %757 = vmatprep.subr.mxu0 0.0
        %758 = vmatpush2.xpose.msra.mxu0 0.0
        %759 = vmatprep.mubr.f32.mxu0 0.0
        %760 = vmatmul.mubr.f32.gmra.mxu0 %v675
        %v761 = vpop.f32.mrf.mxu0
        %v762 = vadd.f32 0.0, %v761
        %v763 = vpop.f32.mrf.mxu0
        %764 = vmatprep.mubr.f32.mxu0 0.0
        %765 = vmatmul.mubr.f32.gmra.mxu0 %v677
        %v766 = vpop.f32.mrf.mxu0
        %v767 = vadd.f32 0.0, %v766
        %v768 = vpop.f32.mrf.mxu0
        %769 = vmatprep.mubr.f32.mxu0 0.0
        %770 = vmatmul.mubr.f32.gmra.mxu0 %v679
        %v771 = vpop.f32.mrf.mxu0
        %v772 = vadd.f32 0.0, %v771
        %v773 = vpop.f32.mrf.mxu0
        %774 = vmatprep.mubr.f32.mxu0 0.0
        %775 = vmatmul.mubr.f32.gmra.mxu0 %v681
        %v776 = vpop.f32.mrf.mxu0
        %v777 = vadd.f32 0.0, %v776
        %v778 = vpop.f32.mrf.mxu0
        %779 = vmatprep.mubr.f32.mxu0 0.0
        %780 = vmatmul.mubr.f32.gmra.mxu0 %v683
        %v781 = vpop.f32.mrf.mxu0
        %v782 = vadd.f32 0.0, %v781
        %v783 = vpop.f32.mrf.mxu0
        %784 = vdwg.mxu0
        %v785 = vmul.f32 %v762, 0.35355338
        %v786 = vmul.f32 %v767, 0.35355338
        %v787 = vmul.f32 %v772, 0.35355338
        %v788 = vmul.f32 %v777, 0.35355338
        %v789 = vmul.f32 %v782, 0.35355338
        %vm790 = vcmask 269312
        %v791 = vsel %vm790, %v785, -inf
        %792 = vmax.xlane.f32.xlu0 %v791
        %v793 = vpop.xlane.xlu0 %792
        %v794 = vsel %vm790, %v786, -inf
        %795 = vmax.xlane.f32.xlu0 %v794
        %v796 = vpop.xlane.xlu0 %795
        %v797 = vsel %vm790, %v787, -inf
        %798 = vmax.xlane.f32.xlu0 %v797
        %v799 = vpop.xlane.xlu0 %798
        %v800 = vsel %vm790, %v788, -inf
        %801 = vmax.xlane.f32.xlu0 %v800
        %v802 = vpop.xlane.xlu0 %801
        %vm803 = vcmask 262144
        %v804 = vsel %vm803, %v789, -inf
        %805 = vmax.xlane.f32.xlu0 %v804
        %v806 = vpop.xlane.xlu0 %805
        %v807 = vsub.f32 %v785, %v793
        %v808 = vsub.f32 %v786, %v796
        %v809 = vsub.f32 %v787, %v799
        %v810 = vsub.f32 %v788, %v802
        %v811 = vsub.f32 %v789, %v806
        %v812 = vmul.f32 %v807, 1.442695
        %v813 = vpow.pop %v812
        %v814 = vmul.f32 %v808, 1.442695
        %v815 = vpow.pop %v814
        %v816 = vmul.f32 %v809, 1.442695
        %v817 = vpow.pop %v816
        %v818 = vmul.f32 %v810, 1.442695
        %v819 = vpow.pop %v818
        %v820 = vmul.f32 %v811, 1.442695
        %v821 = vpow.pop %v820
        %v822 = vsel %vm790, %v813, 0.0
        %823 = vadd.xlane.f32.xlu0 %v822
        %v824 = vpop.xlane.xlu0 %823
        %v825 = vsel %vm790, %v815, 0.0
        %826 = vadd.xlane.f32.xlu0 %v825
        %v827 = vpop.xlane.xlu0 %826
        %v828 = vsel %vm790, %v817, 0.0
        %829 = vadd.xlane.f32.xlu0 %v828
        %v830 = vpop.xlane.xlu0 %829
        %v831 = vsel %vm790, %v819, 0.0
        %832 = vadd.xlane.f32.xlu0 %v831
        %v833 = vpop.xlane.xlu0 %832
        %v834 = vsel %vm803, %v821, 0.0
        %835 = vadd.xlane.f32.xlu0 %v834
        %v836 = vpop.xlane.xlu0 %835
        %v837 = vrcp.pop %v824
        %v838 = vrcp.pop %v827
        %v839 = vrcp.pop %v830
        %v840 = vrcp.pop %v833
        %v841 = vrcp.pop %v836
        %v842 = vmul.f32 %v813, %v837
        %v843 = vmul.f32 %v815, %v838
        %v844 = vmul.f32 %v817, %v839
        %v845 = vmul.f32 %v819, %v840
        %v846 = vmul.f32 %v821, %v841
        %847 = vrot.lane.b32.xlu0 %v638, 64
        %v848 = vpop.permute.xlu0 %847
        %849 = vrot.lane.b32.xlu0 %v641, 64
        %v850 = vpop.permute.xlu0 %849
        %851 = vrot.lane.b32.xlu0 %v646, 64
        %v852 = vpop.permute.xlu0 %851
        %853 = vrot.lane.b32.xlu0 %v649, 64
        %v854 = vpop.permute.xlu0 %853
        %855 = vrot.lane.b32.xlu0 %v654, 64
        %v856 = vpop.permute.xlu0 %855
        %v862 = vsel %vm790, %v842, 0
        %v865 = vsel %vm790, %v843, 0
        %v868 = vsel %vm790, %v844, 0
        %v871 = vsel %vm790, %v845, 0
        %v874 = vsel %vm790, %v846, 0
        %vm876 = vcmask 1040384
        %v877 = vsel %vm876, %v856, 0
        %879 = vmatprep.subr.mxu0 0.0
        %880 = vmatpush1.msra.mxu0 0.0
        %881 = vmatprep.subr.mxu0 0.0
        %882 = vmatpush1.msra.mxu0 0.0
        %883 = vmatprep.subr.mxu0 0.0
        %884 = vmatpush1.msra.mxu0 0.0
        %885 = vmatprep.subr.mxu0 0.0
        %886 = vmatpush1.msra.mxu0 0.0
        %887 = vmatprep.subr.mxu0 0.0
        %888 = vmatpush1.msra.mxu0 0.0
        %889 = vmatprep.subr.mxu0 0.0
        %890 = vmatpush1.msra.mxu0 0.0
        %891 = vmatprep.subr.mxu0 0.0
        %892 = vmatpush1.msra.mxu0 0.0
        %893 = vmatprep.subr.mxu0 0.0
        %894 = vmatpush1.msra.mxu0 0.0
        %895 = vmatprep.subr.mxu0 0.0
        %896 = vmatpush1.msra.mxu0 0.0
        %897 = vmatprep.subr.mxu0 0.0
        %898 = vmatpush1.msra.mxu0 0.0
        %899 = vmatprep.subr.mxu0 0.0
        %900 = vmatpush1.msra.mxu0 0.0
        %901 = vmatprep.subr.mxu0 0.0
        %902 = vmatpush1.msra.mxu0 %v877
        %903 = vmatprep.subr.mxu0 0.0
        %904 = vmatpush1.msra.mxu0 %v854
        %905 = vmatprep.subr.mxu0 0.0
        %906 = vmatpush1.msra.mxu0 %v852
        %907 = vmatprep.subr.mxu0 0.0
        %908 = vmatpush1.msra.mxu0 %v850
        %909 = vmatprep.subr.mxu0 0.0
        %910 = vmatpush1.msra.mxu0 %v848
        %911 = vmatprep.subr.mxu0 0.0
        %912 = vmatpush2.msra.mxu0 0.0
        %913 = vmatprep.subr.mxu0 0.0
        %914 = vmatpush2.msra.mxu0 0.0
        %915 = vmatprep.subr.mxu0 0.0
        %916 = vmatpush2.msra.mxu0 0.0
        %917 = vmatprep.subr.mxu0 0.0
        %918 = vmatpush2.msra.mxu0 0.0
        %919 = vmatprep.subr.mxu0 0.0
        %920 = vmatpush2.msra.mxu0 0.0
        %921 = vmatprep.subr.mxu0 0.0
        %922 = vmatpush2.msra.mxu0 0.0
        %923 = vmatprep.subr.mxu0 0.0
        %924 = vmatpush2.msra.mxu0 0.0
        %925 = vmatprep.subr.mxu0 0.0
        %926 = vmatpush2.msra.mxu0 0.0
        %927 = vmatprep.subr.mxu0 0.0
        %928 = vmatpush2.msra.mxu0 0.0
        %929 = vmatprep.subr.mxu0 0.0
        %930 = vmatpush2.msra.mxu0 0.0
        %931 = vmatprep.subr.mxu0 0.0
        %932 = vmatpush2.msra.mxu0 0.0
        %933 = vmatprep.subr.mxu0 0.0
        %934 = vmatpush2.msra.mxu0 0.0
        %935 = vmatprep.subr.mxu0 0.0
        %936 = vmatpush2.msra.mxu0 0.0
        %937 = vmatprep.subr.mxu0 0.0
        %938 = vmatpush2.msra.mxu0 0.0
        %939 = vmatprep.subr.mxu0 0.0
        %940 = vmatpush2.msra.mxu0 0.0
        %941 = vmatprep.subr.mxu0 0.0
        %942 = vmatpush2.msra.mxu0 0.0
        %943 = vmatprep.mubr.f32.mxu0 0.0
        %944 = vmatmul.mubr.f32.gmra.mxu0 %v862
        %v945 = vpop.f32.mrf.mxu0
        %v946 = vadd.f32 0.0, %v945
        %v947 = vpop.f32.mrf.mxu0
        %948 = vmatprep.mubr.f32.mxu0 0.0
        %949 = vmatmul.mubr.f32.gmra.mxu0 %v865
        %v950 = vpop.f32.mrf.mxu0
        %v951 = vadd.f32 0.0, %v950
        %v952 = vpop.f32.mrf.mxu0
        %953 = vmatprep.mubr.f32.mxu0 0.0
        %954 = vmatmul.mubr.f32.gmra.mxu0 %v868
        %v955 = vpop.f32.mrf.mxu0
        %v956 = vadd.f32 0.0, %v955
        %v957 = vpop.f32.mrf.mxu0
        %958 = vmatprep.mubr.f32.mxu0 0.0
        %959 = vmatmul.mubr.f32.gmra.mxu0 %v871
        %v960 = vpop.f32.mrf.mxu0
        %v961 = vadd.f32 0.0, %v960
        %v962 = vpop.f32.mrf.mxu0
        %963 = vmatprep.mubr.f32.mxu0 0.0
        %964 = vmatmul.mubr.f32.gmra.mxu0 %v874
        %v965 = vpop.f32.mrf.mxu0
        %v966 = vadd.f32 0.0, %v965
        %v967 = vpop.f32.mrf.mxu0
        %968 = vdwg.mxu0
        %969 = vrot.lane.b32.xlu0 %v638, 120
        %v970 = vpop.permute.xlu0 %969
        %971 = vrot.lane.b32.xlu0 %v641, 120
        %v972 = vpop.permute.xlu0 %971
        %973 = vrot.lane.b32.xlu0 %v646, 120
        %v974 = vpop.permute.xlu0 %973
        %975 = vrot.lane.b32.xlu0 %v649, 120
        %v976 = vpop.permute.xlu0 %975
        %977 = vrot.lane.b32.xlu0 %v654, 120
        %v978 = vpop.permute.xlu0 %977
        %979 = vrot.lane.b32.xlu0 %v638, 88
        %v980 = vpop.permute.xlu0 %979
        %981 = vrot.lane.b32.xlu0 %v641, 88
        %v982 = vpop.permute.xlu0 %981
        %983 = vrot.lane.b32.xlu0 %v646, 88
        %v984 = vpop.permute.xlu0 %983
        %985 = vrot.lane.b32.xlu0 %v649, 88
        %v986 = vpop.permute.xlu0 %985
        %987 = vrot.lane.b32.xlu0 %v654, 88
        %v988 = vpop.permute.xlu0 %987
        %v989 = vsel %vm674, %v970, 0
        %v991 = vsel %vm674, %v972, 0
        %v993 = vsel %vm674, %v974, 0
        %v995 = vsel %vm674, %v976, 0
        %v997 = vsel %vm674, %v978, 0
        %v999 = vsel %vm674, %v980, 0
        %v1001 = vsel %vm674, %v982, 0
        %v1003 = vsel %vm674, %v984, 0
        %v1005 = vsel %vm674, %v986, 0
        %v1007 = vsel %vm674, %v988, 0
        %1009 = vmatprep.subr.mxu0 0.0
        %1010 = vmatpush1.xpose.msra.mxu0 0.0
        %1011 = vmatprep.subr.mxu0 0.0
        %1012 = vmatpush1.xpose.msra.mxu0 0.0
        %1013 = vmatprep.subr.mxu0 0.0
        %1014 = vmatpush1.xpose.msra.mxu0 0.0
        %1015 = vmatprep.subr.mxu0 0.0
        %1016 = vmatpush1.xpose.msra.mxu0 0.0
        %1017 = vmatprep.subr.mxu0 0.0
        %1018 = vmatpush1.xpose.msra.mxu0 0.0
        %1019 = vmatprep.subr.mxu0 0.0
        %1020 = vmatpush1.xpose.msra.mxu0 0.0
        %1021 = vmatprep.subr.mxu0 0.0
        %1022 = vmatpush1.xpose.msra.mxu0 0.0
        %1023 = vmatprep.subr.mxu0 0.0
        %1024 = vmatpush1.xpose.msra.mxu0 0.0
        %1025 = vmatprep.subr.mxu0 0.0
        %1026 = vmatpush1.xpose.msra.mxu0 0.0
        %1027 = vmatprep.subr.mxu0 0.0
        %1028 = vmatpush1.xpose.msra.mxu0 0.0
        %1029 = vmatprep.subr.mxu0 0.0
        %1030 = vmatpush1.xpose.msra.mxu0 0.0
        %1031 = vmatprep.subr.mxu0 0.0
        %1032 = vmatpush1.xpose.msra.mxu0 %v1007
        %1033 = vmatprep.subr.mxu0 0.0
        %1034 = vmatpush1.xpose.msra.mxu0 %v1005
        %1035 = vmatprep.subr.mxu0 0.0
        %1036 = vmatpush1.xpose.msra.mxu0 %v1003
        %1037 = vmatprep.subr.mxu0 0.0
        %1038 = vmatpush1.xpose.msra.mxu0 %v1001
        %1039 = vmatprep.subr.mxu0 0.0
        %1040 = vmatpush1.xpose.msra.mxu0 %v999
        %1041 = vmatprep.subr.mxu0 0.0
        %1042 = vmatpush2.xpose.msra.mxu0 0.0
        %1043 = vmatprep.subr.mxu0 0.0
        %1044 = vmatpush2.xpose.msra.mxu0 0.0
        %1045 = vmatprep.subr.mxu0 0.0
        %1046 = vmatpush2.xpose.msra.mxu0 0.0
        %1047 = vmatprep.subr.mxu0 0.0
        %1048 = vmatpush2.xpose.msra.mxu0 0.0
        %1049 = vmatprep.subr.mxu0 0.0
        %1050 = vmatpush2.xpose.msra.mxu0 0.0
        %1051 = vmatprep.subr.mxu0 0.0
        %1052 = vmatpush2.xpose.msra.mxu0 0.0
        %1053 = vmatprep.subr.mxu0 0.0
        %1054 = vmatpush2.xpose.msra.mxu0 0.0
        %1055 = vmatprep.subr.mxu0 0.0
        %1056 = vmatpush2.xpose.msra.mxu0 0.0
        %1057 = vmatprep.subr.mxu0 0.0
        %1058 = vmatpush2.xpose.msra.mxu0 0.0
        %1059 = vmatprep.subr.mxu0 0.0
        %1060 = vmatpush2.xpose.msra.mxu0 0.0
        %1061 = vmatprep.subr.mxu0 0.0
        %1062 = vmatpush2.xpose.msra.mxu0 0.0
        %1063 = vmatprep.subr.mxu0 0.0
        %1064 = vmatpush2.xpose.msra.mxu0 0.0
        %1065 = vmatprep.subr.mxu0 0.0
        %1066 = vmatpush2.xpose.msra.mxu0 0.0
        %1067 = vmatprep.subr.mxu0 0.0
        %1068 = vmatpush2.xpose.msra.mxu0 0.0
        %1069 = vmatprep.subr.mxu0 0.0
        %1070 = vmatpush2.xpose.msra.mxu0 0.0
        %1071 = vmatprep.subr.mxu0 0.0
        %1072 = vmatpush2.xpose.msra.mxu0 0.0
        %1073 = vmatprep.mubr.f32.mxu0 0.0
        %1074 = vmatmul.mubr.f32.gmra.mxu0 %v989
        %v1075 = vpop.f32.mrf.mxu0
        %v1076 = vadd.f32 0.0, %v1075
        %v1077 = vpop.f32.mrf.mxu0
        %1078 = vmatprep.mubr.f32.mxu0 0.0
        %1079 = vmatmul.mubr.f32.gmra.mxu0 %v991
        %v1080 = vpop.f32.mrf.mxu0
        %v1081 = vadd.f32 0.0, %v1080
        %v1082 = vpop.f32.mrf.mxu0
        %1083 = vmatprep.mubr.f32.mxu0 0.0
        %1084 = vmatmul.mubr.f32.gmra.mxu0 %v993
        %v1085 = vpop.f32.mrf.mxu0
        %v1086 = vadd.f32 0.0, %v1085
        %v1087 = vpop.f32.mrf.mxu0
        %1088 = vmatprep.mubr.f32.mxu0 0.0
        %1089 = vmatmul.mubr.f32.gmra.mxu0 %v995
        %v1090 = vpop.f32.mrf.mxu0
        %v1091 = vadd.f32 0.0, %v1090
        %v1092 = vpop.f32.mrf.mxu0
        %1093 = vmatprep.mubr.f32.mxu0 0.0
        %1094 = vmatmul.mubr.f32.gmra.mxu0 %v997
        %v1095 = vpop.f32.mrf.mxu0
        %v1096 = vadd.f32 0.0, %v1095
        %v1097 = vpop.f32.mrf.mxu0
        %1098 = vdwg.mxu0
        %v1099 = vmul.f32 %v1076, 0.35355338
        %v1100 = vmul.f32 %v1081, 0.35355338
        %v1101 = vmul.f32 %v1086, 0.35355338
        %v1102 = vmul.f32 %v1091, 0.35355338
        %v1103 = vmul.f32 %v1096, 0.35355338
        %v1104 = vsel %vm790, %v1099, -inf
        %1105 = vmax.xlane.f32.xlu0 %v1104
        %v1106 = vpop.xlane.xlu0 %1105
        %v1107 = vsel %vm790, %v1100, -inf
        %1108 = vmax.xlane.f32.xlu0 %v1107
        %v1109 = vpop.xlane.xlu0 %1108
        %v1110 = vsel %vm790, %v1101, -inf
        %1111 = vmax.xlane.f32.xlu0 %v1110
        %v1112 = vpop.xlane.xlu0 %1111
        %v1113 = vsel %vm790, %v1102, -inf
        %1114 = vmax.xlane.f32.xlu0 %v1113
        %v1115 = vpop.xlane.xlu0 %1114
        %v1116 = vsel %vm803, %v1103, -inf
        %1117 = vmax.xlane.f32.xlu0 %v1116
        %v1118 = vpop.xlane.xlu0 %1117
        %v1119 = vsub.f32 %v1099, %v1106
        %v1120 = vsub.f32 %v1100, %v1109
        %v1121 = vsub.f32 %v1101, %v1112
        %v1122 = vsub.f32 %v1102, %v1115
        %v1123 = vsub.f32 %v1103, %v1118
        %v1124 = vmul.f32 %v1119, 1.442695
        %v1125 = vpow.pop %v1124
        %v1126 = vmul.f32 %v1120, 1.442695
        %v1127 = vpow.pop %v1126
        %v1128 = vmul.f32 %v1121, 1.442695
        %v1129 = vpow.pop %v1128
        %v1130 = vmul.f32 %v1122, 1.442695
        %v1131 = vpow.pop %v1130
        %v1132 = vmul.f32 %v1123, 1.442695
        %v1133 = vpow.pop %v1132
        %v1134 = vsel %vm790, %v1125, 0.0
        %1135 = vadd.xlane.f32.xlu0 %v1134
        %v1136 = vpop.xlane.xlu0 %1135
        %v1137 = vsel %vm790, %v1127, 0.0
        %1138 = vadd.xlane.f32.xlu0 %v1137
        %v1139 = vpop.xlane.xlu0 %1138
        %v1140 = vsel %vm790, %v1129, 0.0
        %1141 = vadd.xlane.f32.xlu0 %v1140
        %v1142 = vpop.xlane.xlu0 %1141
        %v1143 = vsel %vm790, %v1131, 0.0
        %1144 = vadd.xlane.f32.xlu0 %v1143
        %v1145 = vpop.xlane.xlu0 %1144
        %v1146 = vsel %vm803, %v1133, 0.0
        %1147 = vadd.xlane.f32.xlu0 %v1146
        %v1148 = vpop.xlane.xlu0 %1147
        %v1149 = vrcp.pop %v1136
        %v1150 = vrcp.pop %v1139
        %v1151 = vrcp.pop %v1142
        %v1152 = vrcp.pop %v1145
        %v1153 = vrcp.pop %v1148
        %v1154 = vmul.f32 %v1125, %v1149
        %v1155 = vmul.f32 %v1127, %v1150
        %v1156 = vmul.f32 %v1129, %v1151
        %v1157 = vmul.f32 %v1131, %v1152
        %v1158 = vmul.f32 %v1133, %v1153
        %1159 = vrot.lane.b32.xlu0 %v638, 56
        %v1160 = vpop.permute.xlu0 %1159
        %1161 = vrot.lane.b32.xlu0 %v641, 56
        %v1162 = vpop.permute.xlu0 %1161
        %1163 = vrot.lane.b32.xlu0 %v646, 56
        %v1164 = vpop.permute.xlu0 %1163
        %1165 = vrot.lane.b32.xlu0 %v649, 56
        %v1166 = vpop.permute.xlu0 %1165
        %1167 = vrot.lane.b32.xlu0 %v654, 56
        %v1168 = vpop.permute.xlu0 %1167
        %v1174 = vsel %vm790, %v1154, 0
        %v1177 = vsel %vm790, %v1155, 0
        %v1180 = vsel %vm790, %v1156, 0
        %v1183 = vsel %vm790, %v1157, 0
        %v1186 = vsel %vm790, %v1158, 0
        %v1188 = vsel %vm876, %v1168, 0
        %1190 = vmatprep.subr.mxu0 0.0
        %1191 = vmatpush1.msra.mxu0 0.0
        %1192 = vmatprep.subr.mxu0 0.0
        %1193 = vmatpush1.msra.mxu0 0.0
        %1194 = vmatprep.subr.mxu0 0.0
        %1195 = vmatpush1.msra.mxu0 0.0
        %1196 = vmatprep.subr.mxu0 0.0
        %1197 = vmatpush1.msra.mxu0 0.0
        %1198 = vmatprep.subr.mxu0 0.0
        %1199 = vmatpush1.msra.mxu0 0.0
        %1200 = vmatprep.subr.mxu0 0.0
        %1201 = vmatpush1.msra.mxu0 0.0
        %1202 = vmatprep.subr.mxu0 0.0
        %1203 = vmatpush1.msra.mxu0 0.0
        %1204 = vmatprep.subr.mxu0 0.0
        %1205 = vmatpush1.msra.mxu0 0.0
        %1206 = vmatprep.subr.mxu0 0.0
        %1207 = vmatpush1.msra.mxu0 0.0
        %1208 = vmatprep.subr.mxu0 0.0
        %1209 = vmatpush1.msra.mxu0 0.0
        %1210 = vmatprep.subr.mxu0 0.0
        %1211 = vmatpush1.msra.mxu0 0.0
        %1212 = vmatprep.subr.mxu0 0.0
        %1213 = vmatpush1.msra.mxu0 %v1188
        %1214 = vmatprep.subr.mxu0 0.0
        %1215 = vmatpush1.msra.mxu0 %v1166
        %1216 = vmatprep.subr.mxu0 0.0
        %1217 = vmatpush1.msra.mxu0 %v1164
        %1218 = vmatprep.subr.mxu0 0.0
        %1219 = vmatpush1.msra.mxu0 %v1162
        %1220 = vmatprep.subr.mxu0 0.0
        %1221 = vmatpush1.msra.mxu0 %v1160
        %1222 = vmatprep.subr.mxu0 0.0
        %1223 = vmatpush2.msra.mxu0 0.0
        %1224 = vmatprep.subr.mxu0 0.0
        %1225 = vmatpush2.msra.mxu0 0.0
        %1226 = vmatprep.subr.mxu0 0.0
        %1227 = vmatpush2.msra.mxu0 0.0
        %1228 = vmatprep.subr.mxu0 0.0
        %1229 = vmatpush2.msra.mxu0 0.0
        %1230 = vmatprep.subr.mxu0 0.0
        %1231 = vmatpush2.msra.mxu0 0.0
        %1232 = vmatprep.subr.mxu0 0.0
        %1233 = vmatpush2.msra.mxu0 0.0
        %1234 = vmatprep.subr.mxu0 0.0
        %1235 = vmatpush2.msra.mxu0 0.0
        %1236 = vmatprep.subr.mxu0 0.0
        %1237 = vmatpush2.msra.mxu0 0.0
        %1238 = vmatprep.subr.mxu0 0.0
        %1239 = vmatpush2.msra.mxu0 0.0
        %1240 = vmatprep.subr.mxu0 0.0
        %1241 = vmatpush2.msra.mxu0 0.0
        %1242 = vmatprep.subr.mxu0 0.0
        %1243 = vmatpush2.msra.mxu0 0.0
        %1244 = vmatprep.subr.mxu0 0.0
        %1245 = vmatpush2.msra.mxu0 0.0
        %1246 = vmatprep.subr.mxu0 0.0
        %1247 = vmatpush2.msra.mxu0 0.0
        %1248 = vmatprep.subr.mxu0 0.0
        %1249 = vmatpush2.msra.mxu0 0.0
        %1250 = vmatprep.subr.mxu0 0.0
        %1251 = vmatpush2.msra.mxu0 0.0
        %1252 = vmatprep.subr.mxu0 0.0
        %1253 = vmatpush2.msra.mxu0 0.0
        %1254 = vmatprep.mubr.f32.mxu0 0.0
        %1255 = vmatmul.mubr.f32.gmra.mxu0 %v1174
        %v1256 = vpop.f32.mrf.mxu0
        %v1257 = vadd.f32 0.0, %v1256
        %v1258 = vpop.f32.mrf.mxu0
        %1259 = vmatprep.mubr.f32.mxu0 0.0
        %1260 = vmatmul.mubr.f32.gmra.mxu0 %v1177
        %v1261 = vpop.f32.mrf.mxu0
        %v1262 = vadd.f32 0.0, %v1261
        %v1263 = vpop.f32.mrf.mxu0
        %1264 = vmatprep.mubr.f32.mxu0 0.0
        %1265 = vmatmul.mubr.f32.gmra.mxu0 %v1180
        %v1266 = vpop.f32.mrf.mxu0
        %v1267 = vadd.f32 0.0, %v1266
        %v1268 = vpop.f32.mrf.mxu0
        %1269 = vmatprep.mubr.f32.mxu0 0.0
        %1270 = vmatmul.mubr.f32.gmra.mxu0 %v1183
        %v1271 = vpop.f32.mrf.mxu0
        %v1272 = vadd.f32 0.0, %v1271
        %v1273 = vpop.f32.mrf.mxu0
        %1274 = vmatprep.mubr.f32.mxu0 0.0
        %1275 = vmatmul.mubr.f32.gmra.mxu0 %v1186
        %v1276 = vpop.f32.mrf.mxu0
        %v1277 = vadd.f32 0.0, %v1276
        %v1278 = vpop.f32.mrf.mxu0
        %1279 = vdwg.mxu0
        %1280 = vrot.lane.b32.xlu0 %v638, 112
        %v1281 = vpop.permute.xlu0 %1280
        %1282 = vrot.lane.b32.xlu0 %v641, 112
        %v1283 = vpop.permute.xlu0 %1282
        %1284 = vrot.lane.b32.xlu0 %v646, 112
        %v1285 = vpop.permute.xlu0 %1284
        %1286 = vrot.lane.b32.xlu0 %v649, 112
        %v1287 = vpop.permute.xlu0 %1286
        %1288 = vrot.lane.b32.xlu0 %v654, 112
        %v1289 = vpop.permute.xlu0 %1288
        %1290 = vrot.lane.b32.xlu0 %v638, 80
        %v1291 = vpop.permute.xlu0 %1290
        %1292 = vrot.lane.b32.xlu0 %v641, 80
        %v1293 = vpop.permute.xlu0 %1292
        %1294 = vrot.lane.b32.xlu0 %v646, 80
        %v1295 = vpop.permute.xlu0 %1294
        %1296 = vrot.lane.b32.xlu0 %v649, 80
        %v1297 = vpop.permute.xlu0 %1296
        %1298 = vrot.lane.b32.xlu0 %v654, 80
        %v1299 = vpop.permute.xlu0 %1298
        %v1300 = vsel %vm674, %v1281, 0
        %v1302 = vsel %vm674, %v1283, 0
        %v1304 = vsel %vm674, %v1285, 0
        %v1306 = vsel %vm674, %v1287, 0
        %v1308 = vsel %vm674, %v1289, 0
        %v1310 = vsel %vm674, %v1291, 0
        %v1312 = vsel %vm674, %v1293, 0
        %v1314 = vsel %vm674, %v1295, 0
        %v1316 = vsel %vm674, %v1297, 0
        %v1318 = vsel %vm674, %v1299, 0
        %1320 = vmatprep.subr.mxu0 0.0
        %1321 = vmatpush1.xpose.msra.mxu0 0.0
        %1322 = vmatprep.subr.mxu0 0.0
        %1323 = vmatpush1.xpose.msra.mxu0 0.0
        %1324 = vmatprep.subr.mxu0 0.0
        %1325 = vmatpush1.xpose.msra.mxu0 0.0
        %1326 = vmatprep.subr.mxu0 0.0
        %1327 = vmatpush1.xpose.msra.mxu0 0.0
        %1328 = vmatprep.subr.mxu0 0.0
        %1329 = vmatpush1.xpose.msra.mxu0 0.0
        %1330 = vmatprep.subr.mxu0 0.0
        %1331 = vmatpush1.xpose.msra.mxu0 0.0
        %1332 = vmatprep.subr.mxu0 0.0
        %1333 = vmatpush1.xpose.msra.mxu0 0.0
        %1334 = vmatprep.subr.mxu0 0.0
        %1335 = vmatpush1.xpose.msra.mxu0 0.0
        %1336 = vmatprep.subr.mxu0 0.0
        %1337 = vmatpush1.xpose.msra.mxu0 0.0
        %1338 = vmatprep.subr.mxu0 0.0
        %1339 = vmatpush1.xpose.msra.mxu0 0.0
        %1340 = vmatprep.subr.mxu0 0.0
        %1341 = vmatpush1.xpose.msra.mxu0 0.0
        %1342 = vmatprep.subr.mxu0 0.0
        %1343 = vmatpush1.xpose.msra.mxu0 %v1318
        %1344 = vmatprep.subr.mxu0 0.0
        %1345 = vmatpush1.xpose.msra.mxu0 %v1316
        %1346 = vmatprep.subr.mxu0 0.0
        %1347 = vmatpush1.xpose.msra.mxu0 %v1314
        %1348 = vmatprep.subr.mxu0 0.0
        %1349 = vmatpush1.xpose.msra.mxu0 %v1312
        %1350 = vmatprep.subr.mxu0 0.0
        %1351 = vmatpush1.xpose.msra.mxu0 %v1310
        %1352 = vmatprep.subr.mxu0 0.0
        %1353 = vmatpush2.xpose.msra.mxu0 0.0
        %1354 = vmatprep.subr.mxu0 0.0
        %1355 = vmatpush2.xpose.msra.mxu0 0.0
        %1356 = vmatprep.subr.mxu0 0.0
        %1357 = vmatpush2.xpose.msra.mxu0 0.0
        %1358 = vmatprep.subr.mxu0 0.0
        %1359 = vmatpush2.xpose.msra.mxu0 0.0
        %1360 = vmatprep.subr.mxu0 0.0
        %1361 = vmatpush2.xpose.msra.mxu0 0.0
        %1362 = vmatprep.subr.mxu0 0.0
        %1363 = vmatpush2.xpose.msra.mxu0 0.0
        %1364 = vmatprep.subr.mxu0 0.0
        %1365 = vmatpush2.xpose.msra.mxu0 0.0
        %1366 = vmatprep.subr.mxu0 0.0
        %1367 = vmatpush2.xpose.msra.mxu0 0.0
        %1368 = vmatprep.subr.mxu0 0.0
        %1369 = vmatpush2.xpose.msra.mxu0 0.0
        %1370 = vmatprep.subr.mxu0 0.0
        %1371 = vmatpush2.xpose.msra.mxu0 0.0
        %1372 = vmatprep.subr.mxu0 0.0
        %1373 = vmatpush2.xpose.msra.mxu0 0.0
        %1374 = vmatprep.subr.mxu0 0.0
        %1375 = vmatpush2.xpose.msra.mxu0 0.0
        %1376 = vmatprep.subr.mxu0 0.0
        %1377 = vmatpush2.xpose.msra.mxu0 0.0
        %1378 = vmatprep.subr.mxu0 0.0
        %1379 = vmatpush2.xpose.msra.mxu0 0.0
        %1380 = vmatprep.subr.mxu0 0.0
        %1381 = vmatpush2.xpose.msra.mxu0 0.0
        %1382 = vmatprep.subr.mxu0 0.0
        %1383 = vmatpush2.xpose.msra.mxu0 0.0
        %1384 = vmatprep.mubr.f32.mxu0 0.0
        %1385 = vmatmul.mubr.f32.gmra.mxu0 %v1300
        %v1386 = vpop.f32.mrf.mxu0
        %v1387 = vadd.f32 0.0, %v1386
        %v1388 = vpop.f32.mrf.mxu0
        %1389 = vmatprep.mubr.f32.mxu0 0.0
        %1390 = vmatmul.mubr.f32.gmra.mxu0 %v1302
        %v1391 = vpop.f32.mrf.mxu0
        %v1392 = vadd.f32 0.0, %v1391
        %v1393 = vpop.f32.mrf.mxu0
        %1394 = vmatprep.mubr.f32.mxu0 0.0
        %1395 = vmatmul.mubr.f32.gmra.mxu0 %v1304
        %v1396 = vpop.f32.mrf.mxu0
        %v1397 = vadd.f32 0.0, %v1396
        %v1398 = vpop.f32.mrf.mxu0
        %1399 = vmatprep.mubr.f32.mxu0 0.0
        %1400 = vmatmul.mubr.f32.gmra.mxu0 %v1306
        %v1401 = vpop.f32.mrf.mxu0
        %v1402 = vadd.f32 0.0, %v1401
        %v1403 = vpop.f32.mrf.mxu0
        %1404 = vmatprep.mubr.f32.mxu0 0.0
        %1405 = vmatmul.mubr.f32.gmra.mxu0 %v1308
        %v1406 = vpop.f32.mrf.mxu0
        %v1407 = vadd.f32 0.0, %v1406
        %v1408 = vpop.f32.mrf.mxu0
        %1409 = vdwg.mxu0
        %v1410 = vmul.f32 %v1387, 0.35355338
        %v1411 = vmul.f32 %v1392, 0.35355338
        %v1412 = vmul.f32 %v1397, 0.35355338
        %v1413 = vmul.f32 %v1402, 0.35355338
        %v1414 = vmul.f32 %v1407, 0.35355338
        %v1415 = vsel %vm790, %v1410, -inf
        %1416 = vmax.xlane.f32.xlu0 %v1415
        %v1417 = vpop.xlane.xlu0 %1416
        %v1418 = vsel %vm790, %v1411, -inf
        %1419 = vmax.xlane.f32.xlu0 %v1418
        %v1420 = vpop.xlane.xlu0 %1419
        %v1421 = vsel %vm790, %v1412, -inf
        %1422 = vmax.xlane.f32.xlu0 %v1421
        %v1423 = vpop.xlane.xlu0 %1422
        %v1424 = vsel %vm790, %v1413, -inf
        %1425 = vmax.xlane.f32.xlu0 %v1424
        %v1426 = vpop.xlane.xlu0 %1425
        %v1427 = vsel %vm803, %v1414, -inf
        %1428 = vmax.xlane.f32.xlu0 %v1427
        %v1429 = vpop.xlane.xlu0 %1428
        %v1430 = vsub.f32 %v1410, %v1417
        %v1431 = vsub.f32 %v1411, %v1420
        %v1432 = vsub.f32 %v1412, %v1423
        %v1433 = vsub.f32 %v1413, %v1426
        %v1434 = vsub.f32 %v1414, %v1429
        %v1435 = vmul.f32 %v1430, 1.442695
        %v1436 = vpow.pop %v1435
        %v1437 = vmul.f32 %v1431, 1.442695
        %v1438 = vpow.pop %v1437
        %v1439 = vmul.f32 %v1432, 1.442695
        %v1440 = vpow.pop %v1439
        %v1441 = vmul.f32 %v1433, 1.442695
        %v1442 = vpow.pop %v1441
        %v1443 = vmul.f32 %v1434, 1.442695
        %v1444 = vpow.pop %v1443
        %v1445 = vsel %vm790, %v1436, 0.0
        %1446 = vadd.xlane.f32.xlu0 %v1445
        %v1447 = vpop.xlane.xlu0 %1446
        %v1448 = vsel %vm790, %v1438, 0.0
        %1449 = vadd.xlane.f32.xlu0 %v1448
        %v1450 = vpop.xlane.xlu0 %1449
        %v1451 = vsel %vm790, %v1440, 0.0
        %1452 = vadd.xlane.f32.xlu0 %v1451
        %v1453 = vpop.xlane.xlu0 %1452
        %v1454 = vsel %vm790, %v1442, 0.0
        %1455 = vadd.xlane.f32.xlu0 %v1454
        %v1456 = vpop.xlane.xlu0 %1455
        %v1457 = vsel %vm803, %v1444, 0.0
        %1458 = vadd.xlane.f32.xlu0 %v1457
        %v1459 = vpop.xlane.xlu0 %1458
        %v1460 = vrcp.pop %v1447
        %v1461 = vrcp.pop %v1450
        %v1462 = vrcp.pop %v1453
        %v1463 = vrcp.pop %v1456
        %v1464 = vrcp.pop %v1459
        %v1465 = vmul.f32 %v1436, %v1460
        %v1466 = vmul.f32 %v1438, %v1461
        %v1467 = vmul.f32 %v1440, %v1462
        %v1468 = vmul.f32 %v1442, %v1463
        %v1469 = vmul.f32 %v1444, %v1464
        %1470 = vrot.lane.b32.xlu0 %v638, 48
        %v1471 = vpop.permute.xlu0 %1470
        %1472 = vrot.lane.b32.xlu0 %v641, 48
        %v1473 = vpop.permute.xlu0 %1472
        %1474 = vrot.lane.b32.xlu0 %v646, 48
        %v1475 = vpop.permute.xlu0 %1474
        %1476 = vrot.lane.b32.xlu0 %v649, 48
        %v1477 = vpop.permute.xlu0 %1476
        %1478 = vrot.lane.b32.xlu0 %v654, 48
        %v1479 = vpop.permute.xlu0 %1478
        %v1485 = vsel %vm790, %v1465, 0
        %v1488 = vsel %vm790, %v1466, 0
        %v1491 = vsel %vm790, %v1467, 0
        %v1494 = vsel %vm790, %v1468, 0
        %v1497 = vsel %vm790, %v1469, 0
        %v1499 = vsel %vm876, %v1479, 0
        %1501 = vmatprep.subr.mxu0 0.0
        %1502 = vmatpush1.msra.mxu0 0.0
        %1503 = vmatprep.subr.mxu0 0.0
        %1504 = vmatpush1.msra.mxu0 0.0
        %1505 = vmatprep.subr.mxu0 0.0
        %1506 = vmatpush1.msra.mxu0 0.0
        %1507 = vmatprep.subr.mxu0 0.0
        %1508 = vmatpush1.msra.mxu0 0.0
        %1509 = vmatprep.subr.mxu0 0.0
        %1510 = vmatpush1.msra.mxu0 0.0
        %1511 = vmatprep.subr.mxu0 0.0
        %1512 = vmatpush1.msra.mxu0 0.0
        %1513 = vmatprep.subr.mxu0 0.0
        %1514 = vmatpush1.msra.mxu0 0.0
        %1515 = vmatprep.subr.mxu0 0.0
        %1516 = vmatpush1.msra.mxu0 0.0
        %1517 = vmatprep.subr.mxu0 0.0
        %1518 = vmatpush1.msra.mxu0 0.0
        %1519 = vmatprep.subr.mxu0 0.0
        %1520 = vmatpush1.msra.mxu0 0.0
        %1521 = vmatprep.subr.mxu0 0.0
        %1522 = vmatpush1.msra.mxu0 0.0
        %1523 = vmatprep.subr.mxu0 0.0
        %1524 = vmatpush1.msra.mxu0 %v1499
        %1525 = vmatprep.subr.mxu0 0.0
        %1526 = vmatpush1.msra.mxu0 %v1477
        %1527 = vmatprep.subr.mxu0 0.0
        %1528 = vmatpush1.msra.mxu0 %v1475
        %1529 = vmatprep.subr.mxu0 0.0
        %1530 = vmatpush1.msra.mxu0 %v1473
        %1531 = vmatprep.subr.mxu0 0.0
        %1532 = vmatpush1.msra.mxu0 %v1471
        %1533 = vmatprep.subr.mxu0 0.0
        %1534 = vmatpush2.msra.mxu0 0.0
        %1535 = vmatprep.subr.mxu0 0.0
        %1536 = vmatpush2.msra.mxu0 0.0
        %1537 = vmatprep.subr.mxu0 0.0
        %1538 = vmatpush2.msra.mxu0 0.0
        %1539 = vmatprep.subr.mxu0 0.0
        %1540 = vmatpush2.msra.mxu0 0.0
        %1541 = vmatprep.subr.mxu0 0.0
        %1542 = vmatpush2.msra.mxu0 0.0
        %1543 = vmatprep.subr.mxu0 0.0
        %1544 = vmatpush2.msra.mxu0 0.0
        %1545 = vmatprep.subr.mxu0 0.0
        %1546 = vmatpush2.msra.mxu0 0.0
        %1547 = vmatprep.subr.mxu0 0.0
        %1548 = vmatpush2.msra.mxu0 0.0
        %1549 = vmatprep.subr.mxu0 0.0
        %1550 = vmatpush2.msra.mxu0 0.0
        %1551 = vmatprep.subr.mxu0 0.0
        %1552 = vmatpush2.msra.mxu0 0.0
        %1553 = vmatprep.subr.mxu0 0.0
        %1554 = vmatpush2.msra.mxu0 0.0
        %1555 = vmatprep.subr.mxu0 0.0
        %1556 = vmatpush2.msra.mxu0 0.0
        %1557 = vmatprep.subr.mxu0 0.0
        %1558 = vmatpush2.msra.mxu0 0.0
        %1559 = vmatprep.subr.mxu0 0.0
        %1560 = vmatpush2.msra.mxu0 0.0
        %1561 = vmatprep.subr.mxu0 0.0
        %1562 = vmatpush2.msra.mxu0 0.0
        %1563 = vmatprep.subr.mxu0 0.0
        %1564 = vmatpush2.msra.mxu0 0.0
        %1565 = vmatprep.mubr.f32.mxu0 0.0
        %1566 = vmatmul.mubr.f32.gmra.mxu0 %v1485
        %v1567 = vpop.f32.mrf.mxu0
        %v1568 = vadd.f32 0.0, %v1567
        %v1569 = vpop.f32.mrf.mxu0
        %1570 = vmatprep.mubr.f32.mxu0 0.0
        %1571 = vmatmul.mubr.f32.gmra.mxu0 %v1488
        %v1572 = vpop.f32.mrf.mxu0
        %v1573 = vadd.f32 0.0, %v1572
        %v1574 = vpop.f32.mrf.mxu0
        %1575 = vmatprep.mubr.f32.mxu0 0.0
        %1576 = vmatmul.mubr.f32.gmra.mxu0 %v1491
        %v1577 = vpop.f32.mrf.mxu0
        %v1578 = vadd.f32 0.0, %v1577
        %v1579 = vpop.f32.mrf.mxu0
        %1580 = vmatprep.mubr.f32.mxu0 0.0
        %1581 = vmatmul.mubr.f32.gmra.mxu0 %v1494
        %v1582 = vpop.f32.mrf.mxu0
        %v1583 = vadd.f32 0.0, %v1582
        %v1584 = vpop.f32.mrf.mxu0
        %1585 = vmatprep.mubr.f32.mxu0 0.0
        %1586 = vmatmul.mubr.f32.gmra.mxu0 %v1497
        %v1587 = vpop.f32.mrf.mxu0
        %v1588 = vadd.f32 0.0, %v1587
        %v1589 = vpop.f32.mrf.mxu0
        %1590 = vdwg.mxu0
        %1591 = vrot.lane.b32.xlu0 %v638, 104
        %v1592 = vpop.permute.xlu0 %1591
        %1593 = vrot.lane.b32.xlu0 %v641, 104
        %v1594 = vpop.permute.xlu0 %1593
        %1595 = vrot.lane.b32.xlu0 %v646, 104
        %v1596 = vpop.permute.xlu0 %1595
        %1597 = vrot.lane.b32.xlu0 %v649, 104
        %v1598 = vpop.permute.xlu0 %1597
        %1599 = vrot.lane.b32.xlu0 %v654, 104
        %v1600 = vpop.permute.xlu0 %1599
        %1601 = vrot.lane.b32.xlu0 %v638, 72
        %v1602 = vpop.permute.xlu0 %1601
        %1603 = vrot.lane.b32.xlu0 %v641, 72
        %v1604 = vpop.permute.xlu0 %1603
        %1605 = vrot.lane.b32.xlu0 %v646, 72
        %v1606 = vpop.permute.xlu0 %1605
        %1607 = vrot.lane.b32.xlu0 %v649, 72
        %v1608 = vpop.permute.xlu0 %1607
        %1609 = vrot.lane.b32.xlu0 %v654, 72
        %v1610 = vpop.permute.xlu0 %1609
        %v1611 = vsel %vm674, %v1592, 0
        %v1613 = vsel %vm674, %v1594, 0
        %v1615 = vsel %vm674, %v1596, 0
        %v1617 = vsel %vm674, %v1598, 0
        %v1619 = vsel %vm674, %v1600, 0
        %v1621 = vsel %vm674, %v1602, 0
        %v1623 = vsel %vm674, %v1604, 0
        %v1625 = vsel %vm674, %v1606, 0
        %v1627 = vsel %vm674, %v1608, 0
        %v1629 = vsel %vm674, %v1610, 0
        %1631 = vmatprep.subr.mxu0 0.0
        %1632 = vmatpush1.xpose.msra.mxu0 0.0
        %1633 = vmatprep.subr.mxu0 0.0
        %1634 = vmatpush1.xpose.msra.mxu0 0.0
        %1635 = vmatprep.subr.mxu0 0.0
        %1636 = vmatpush1.xpose.msra.mxu0 0.0
        %1637 = vmatprep.subr.mxu0 0.0
        %1638 = vmatpush1.xpose.msra.mxu0 0.0
        %1639 = vmatprep.subr.mxu0 0.0
        %1640 = vmatpush1.xpose.msra.mxu0 0.0
        %1641 = vmatprep.subr.mxu0 0.0
        %1642 = vmatpush1.xpose.msra.mxu0 0.0
        %1643 = vmatprep.subr.mxu0 0.0
        %1644 = vmatpush1.xpose.msra.mxu0 0.0
        %1645 = vmatprep.subr.mxu0 0.0
        %1646 = vmatpush1.xpose.msra.mxu0 0.0
        %1647 = vmatprep.subr.mxu0 0.0
        %1648 = vmatpush1.xpose.msra.mxu0 0.0
        %1649 = vmatprep.subr.mxu0 0.0
        %1650 = vmatpush1.xpose.msra.mxu0 0.0
        %1651 = vmatprep.subr.mxu0 0.0
        %1652 = vmatpush1.xpose.msra.mxu0 0.0
        %1653 = vmatprep.subr.mxu0 0.0
        %1654 = vmatpush1.xpose.msra.mxu0 %v1629
        %1655 = vmatprep.subr.mxu0 0.0
        %1656 = vmatpush1.xpose.msra.mxu0 %v1627
        %1657 = vmatprep.subr.mxu0 0.0
        %1658 = vmatpush1.xpose.msra.mxu0 %v1625
        %1659 = vmatprep.subr.mxu0 0.0
        %1660 = vmatpush1.xpose.msra.mxu0 %v1623
        %1661 = vmatprep.subr.mxu0 0.0
        %1662 = vmatpush1.xpose.msra.mxu0 %v1621
        %1663 = vmatprep.subr.mxu0 0.0
        %1664 = vmatpush2.xpose.msra.mxu0 0.0
        %1665 = vmatprep.subr.mxu0 0.0
        %1666 = vmatpush2.xpose.msra.mxu0 0.0
        %1667 = vmatprep.subr.mxu0 0.0
        %1668 = vmatpush2.xpose.msra.mxu0 0.0
        %1669 = vmatprep.subr.mxu0 0.0
        %1670 = vmatpush2.xpose.msra.mxu0 0.0
        %1671 = vmatprep.subr.mxu0 0.0
        %1672 = vmatpush2.xpose.msra.mxu0 0.0
        %1673 = vmatprep.subr.mxu0 0.0
        %1674 = vmatpush2.xpose.msra.mxu0 0.0
        %1675 = vmatprep.subr.mxu0 0.0
        %1676 = vmatpush2.xpose.msra.mxu0 0.0
        %1677 = vmatprep.subr.mxu0 0.0
        %1678 = vmatpush2.xpose.msra.mxu0 0.0
        %1679 = vmatprep.subr.mxu0 0.0
        %1680 = vmatpush2.xpose.msra.mxu0 0.0
        %1681 = vmatprep.subr.mxu0 0.0
        %1682 = vmatpush2.xpose.msra.mxu0 0.0
        %1683 = vmatprep.subr.mxu0 0.0
        %1684 = vmatpush2.xpose.msra.mxu0 0.0
        %1685 = vmatprep.subr.mxu0 0.0
        %1686 = vmatpush2.xpose.msra.mxu0 0.0
        %1687 = vmatprep.subr.mxu0 0.0
        %1688 = vmatpush2.xpose.msra.mxu0 0.0
        %1689 = vmatprep.subr.mxu0 0.0
        %1690 = vmatpush2.xpose.msra.mxu0 0.0
        %1691 = vmatprep.subr.mxu0 0.0
        %1692 = vmatpush2.xpose.msra.mxu0 0.0
        %1693 = vmatprep.subr.mxu0 0.0
        %1694 = vmatpush2.xpose.msra.mxu0 0.0
        %1695 = vmatprep.mubr.f32.mxu0 0.0
        %1696 = vmatmul.mubr.f32.gmra.mxu0 %v1611
        %v1697 = vpop.f32.mrf.mxu0
        %v1698 = vadd.f32 0.0, %v1697
        %v1699 = vpop.f32.mrf.mxu0
        %1700 = vmatprep.mubr.f32.mxu0 0.0
        %1701 = vmatmul.mubr.f32.gmra.mxu0 %v1613
        %v1702 = vpop.f32.mrf.mxu0
        %v1703 = vadd.f32 0.0, %v1702
        %v1704 = vpop.f32.mrf.mxu0
        %1705 = vmatprep.mubr.f32.mxu0 0.0
        %1706 = vmatmul.mubr.f32.gmra.mxu0 %v1615
        %v1707 = vpop.f32.mrf.mxu0
        %v1708 = vadd.f32 0.0, %v1707
        %v1709 = vpop.f32.mrf.mxu0
        %1710 = vmatprep.mubr.f32.mxu0 0.0
        %1711 = vmatmul.mubr.f32.gmra.mxu0 %v1617
        %v1712 = vpop.f32.mrf.mxu0
        %v1713 = vadd.f32 0.0, %v1712
        %v1714 = vpop.f32.mrf.mxu0
        %1715 = vmatprep.mubr.f32.mxu0 0.0
        %1716 = vmatmul.mubr.f32.gmra.mxu0 %v1619
        %v1717 = vpop.f32.mrf.mxu0
        %v1718 = vadd.f32 0.0, %v1717
        %v1719 = vpop.f32.mrf.mxu0
        %1720 = vdwg.mxu0
        %v1721 = vmul.f32 %v1698, 0.35355338
        %v1722 = vmul.f32 %v1703, 0.35355338
        %v1723 = vmul.f32 %v1708, 0.35355338
        %v1724 = vmul.f32 %v1713, 0.35355338
        %v1725 = vmul.f32 %v1718, 0.35355338
        %v1726 = vsel %vm790, %v1721, -inf
        %1727 = vmax.xlane.f32.xlu0 %v1726
        %v1728 = vpop.xlane.xlu0 %1727
        %v1729 = vsel %vm790, %v1722, -inf
        %1730 = vmax.xlane.f32.xlu0 %v1729
        %v1731 = vpop.xlane.xlu0 %1730
        %v1732 = vsel %vm790, %v1723, -inf
        %1733 = vmax.xlane.f32.xlu0 %v1732
        %v1734 = vpop.xlane.xlu0 %1733
        %v1735 = vsel %vm790, %v1724, -inf
        %1736 = vmax.xlane.f32.xlu0 %v1735
        %v1737 = vpop.xlane.xlu0 %1736
        %v1738 = vsel %vm803, %v1725, -inf
        %1739 = vmax.xlane.f32.xlu0 %v1738
        %v1740 = vpop.xlane.xlu0 %1739
        %v1741 = vsub.f32 %v1721, %v1728
        %v1742 = vsub.f32 %v1722, %v1731
        %v1743 = vsub.f32 %v1723, %v1734
        %v1744 = vsub.f32 %v1724, %v1737
        %v1745 = vsub.f32 %v1725, %v1740
        %v1746 = vmul.f32 %v1741, 1.442695
        %v1747 = vpow.pop %v1746
        %v1748 = vmul.f32 %v1742, 1.442695
        %v1749 = vpow.pop %v1748
        %v1750 = vmul.f32 %v1743, 1.442695
        %v1751 = vpow.pop %v1750
        %v1752 = vmul.f32 %v1744, 1.442695
        %v1753 = vpow.pop %v1752
        %v1754 = vmul.f32 %v1745, 1.442695
        %v1755 = vpow.pop %v1754
        %v1756 = vsel %vm790, %v1747, 0.0
        %1757 = vadd.xlane.f32.xlu0 %v1756
        %v1758 = vpop.xlane.xlu0 %1757
        %v1759 = vsel %vm790, %v1749, 0.0
        %1760 = vadd.xlane.f32.xlu0 %v1759
        %v1761 = vpop.xlane.xlu0 %1760
        %v1762 = vsel %vm790, %v1751, 0.0
        %1763 = vadd.xlane.f32.xlu0 %v1762
        %v1764 = vpop.xlane.xlu0 %1763
        %v1765 = vsel %vm790, %v1753, 0.0
        %1766 = vadd.xlane.f32.xlu0 %v1765
        %v1767 = vpop.xlane.xlu0 %1766
        %v1768 = vsel %vm803, %v1755, 0.0
        %1769 = vadd.xlane.f32.xlu0 %v1768
        %v1770 = vpop.xlane.xlu0 %1769
        %v1771 = vrcp.pop %v1758
        %v1772 = vrcp.pop %v1761
        %v1773 = vrcp.pop %v1764
        %v1774 = vrcp.pop %v1767
        %v1775 = vrcp.pop %v1770
        %v1776 = vmul.f32 %v1747, %v1771
        %v1777 = vmul.f32 %v1749, %v1772
        %v1778 = vmul.f32 %v1751, %v1773
        %v1779 = vmul.f32 %v1753, %v1774
        %v1780 = vmul.f32 %v1755, %v1775
        %1781 = vrot.lane.b32.xlu0 %v638, 40
        %v1782 = vpop.permute.xlu0 %1781
        %1783 = vrot.lane.b32.xlu0 %v641, 40
        %v1784 = vpop.permute.xlu0 %1783
        %1785 = vrot.lane.b32.xlu0 %v646, 40
        %v1786 = vpop.permute.xlu0 %1785
        %1787 = vrot.lane.b32.xlu0 %v649, 40
        %v1788 = vpop.permute.xlu0 %1787
        %1789 = vrot.lane.b32.xlu0 %v654, 40
        %v1790 = vpop.permute.xlu0 %1789
        %v1796 = vsel %vm790, %v1776, 0
        %v1799 = vsel %vm790, %v1777, 0
        %v1802 = vsel %vm790, %v1778, 0
        %v1805 = vsel %vm790, %v1779, 0
        %v1808 = vsel %vm790, %v1780, 0
        %v1810 = vsel %vm876, %v1790, 0
        %1812 = vmatprep.subr.mxu0 0.0
        %1813 = vmatpush1.msra.mxu0 0.0
        %1814 = vmatprep.subr.mxu0 0.0
        %1815 = vmatpush1.msra.mxu0 0.0
        %1816 = vmatprep.subr.mxu0 0.0
        %1817 = vmatpush1.msra.mxu0 0.0
        %1818 = vmatprep.subr.mxu0 0.0
        %1819 = vmatpush1.msra.mxu0 0.0
        %1820 = vmatprep.subr.mxu0 0.0
        %1821 = vmatpush1.msra.mxu0 0.0
        %1822 = vmatprep.subr.mxu0 0.0
        %1823 = vmatpush1.msra.mxu0 0.0
        %1824 = vmatprep.subr.mxu0 0.0
        %1825 = vmatpush1.msra.mxu0 0.0
        %1826 = vmatprep.subr.mxu0 0.0
        %1827 = vmatpush1.msra.mxu0 0.0
        %1828 = vmatprep.subr.mxu0 0.0
        %1829 = vmatpush1.msra.mxu0 0.0
        %1830 = vmatprep.subr.mxu0 0.0
        %1831 = vmatpush1.msra.mxu0 0.0
        %1832 = vmatprep.subr.mxu0 0.0
        %1833 = vmatpush1.msra.mxu0 0.0
        %1834 = vmatprep.subr.mxu0 0.0
        %1835 = vmatpush1.msra.mxu0 %v1810
        %1836 = vmatprep.subr.mxu0 0.0
        %1837 = vmatpush1.msra.mxu0 %v1788
        %1838 = vmatprep.subr.mxu0 0.0
        %1839 = vmatpush1.msra.mxu0 %v1786
        %1840 = vmatprep.subr.mxu0 0.0
        %1841 = vmatpush1.msra.mxu0 %v1784
        %1842 = vmatprep.subr.mxu0 0.0
        %1843 = vmatpush1.msra.mxu0 %v1782
        %1844 = vmatprep.subr.mxu0 0.0
        %1845 = vmatpush2.msra.mxu0 0.0
        %1846 = vmatprep.subr.mxu0 0.0
        %1847 = vmatpush2.msra.mxu0 0.0
        %1848 = vmatprep.subr.mxu0 0.0
        %1849 = vmatpush2.msra.mxu0 0.0
        %1850 = vmatprep.subr.mxu0 0.0
        %1851 = vmatpush2.msra.mxu0 0.0
        %1852 = vmatprep.subr.mxu0 0.0
        %1853 = vmatpush2.msra.mxu0 0.0
        %1854 = vmatprep.subr.mxu0 0.0
        %1855 = vmatpush2.msra.mxu0 0.0
        %1856 = vmatprep.subr.mxu0 0.0
        %1857 = vmatpush2.msra.mxu0 0.0
        %1858 = vmatprep.subr.mxu0 0.0
        %1859 = vmatpush2.msra.mxu0 0.0
        %1860 = vmatprep.subr.mxu0 0.0
        %1861 = vmatpush2.msra.mxu0 0.0
        %1862 = vmatprep.subr.mxu0 0.0
        %1863 = vmatpush2.msra.mxu0 0.0
        %1864 = vmatprep.subr.mxu0 0.0
        %1865 = vmatpush2.msra.mxu0 0.0
        %1866 = vmatprep.subr.mxu0 0.0
        %1867 = vmatpush2.msra.mxu0 0.0
        %1868 = vmatprep.subr.mxu0 0.0
        %1869 = vmatpush2.msra.mxu0 0.0
        %1870 = vmatprep.subr.mxu0 0.0
        %1871 = vmatpush2.msra.mxu0 0.0
        %1872 = vmatprep.subr.mxu0 0.0
        %1873 = vmatpush2.msra.mxu0 0.0
        %1874 = vmatprep.subr.mxu0 0.0
        %1875 = vmatpush2.msra.mxu0 0.0
        %1876 = vmatprep.mubr.f32.mxu0 0.0
        %1877 = vmatmul.mubr.f32.gmra.mxu0 %v1796
        %v1878 = vpop.f32.mrf.mxu0
        %v1879 = vadd.f32 0.0, %v1878
        %v1880 = vpop.f32.mrf.mxu0
        %1881 = vmatprep.mubr.f32.mxu0 0.0
        %1882 = vmatmul.mubr.f32.gmra.mxu0 %v1799
        %v1883 = vpop.f32.mrf.mxu0
        %v1884 = vadd.f32 0.0, %v1883
        %v1885 = vpop.f32.mrf.mxu0
        %1886 = vmatprep.mubr.f32.mxu0 0.0
        %1887 = vmatmul.mubr.f32.gmra.mxu0 %v1802
        %v1888 = vpop.f32.mrf.mxu0
        %v1889 = vadd.f32 0.0, %v1888
        %v1890 = vpop.f32.mrf.mxu0
        %1891 = vmatprep.mubr.f32.mxu0 0.0
        %1892 = vmatmul.mubr.f32.gmra.mxu0 %v1805
        %v1893 = vpop.f32.mrf.mxu0
        %v1894 = vadd.f32 0.0, %v1893
        %v1895 = vpop.f32.mrf.mxu0
        %1896 = vmatprep.mubr.f32.mxu0 0.0
        %1897 = vmatmul.mubr.f32.gmra.mxu0 %v1808
        %v1898 = vpop.f32.mrf.mxu0
        %v1899 = vadd.f32 0.0, %v1898
        %v1900 = vpop.f32.mrf.mxu0
        %1901 = vdwg.mxu0
        %1907 = vrot.lane.b32.xlu0 %v1257, 8
        %v1908 = vpop.permute.xlu0 %1907
        %1909 = vrot.lane.b32.xlu0 %v1262, 8
        %v1910 = vpop.permute.xlu0 %1909
        %1911 = vrot.lane.b32.xlu0 %v1267, 8
        %v1912 = vpop.permute.xlu0 %1911
        %1913 = vrot.lane.b32.xlu0 %v1272, 8
        %v1914 = vpop.permute.xlu0 %1913
        %1915 = vrot.lane.b32.xlu0 %v1277, 8
        %v1916 = vpop.permute.xlu0 %1915
        %1927 = vrot.lane.b32.xlu0 %v1568, 16
        %v1928 = vpop.permute.xlu0 %1927
        %1929 = vrot.lane.b32.xlu0 %v1573, 16
        %v1930 = vpop.permute.xlu0 %1929
        %1931 = vrot.lane.b32.xlu0 %v1578, 16
        %v1932 = vpop.permute.xlu0 %1931
        %1933 = vrot.lane.b32.xlu0 %v1583, 16
        %v1934 = vpop.permute.xlu0 %1933
        %1935 = vrot.lane.b32.xlu0 %v1588, 16
        %v1936 = vpop.permute.xlu0 %1935
        %1947 = vrot.lane.b32.xlu0 %v1879, 24
        %v1948 = vpop.permute.xlu0 %1947
        %1949 = vrot.lane.b32.xlu0 %v1884, 24
        %v1950 = vpop.permute.xlu0 %1949
        %1951 = vrot.lane.b32.xlu0 %v1889, 24
        %v1952 = vpop.permute.xlu0 %1951
        %1953 = vrot.lane.b32.xlu0 %v1894, 24
        %v1954 = vpop.permute.xlu0 %1953
        %1955 = vrot.lane.b32.xlu0 %v1899, 24
        %v1956 = vpop.permute.xlu0 %1955
        %v1962 = vsel %vm674, %v946, %v1908
        %v1963 = vsel %vm674, %v951, %v1910
        %v1964 = vsel %vm674, %v956, %v1912
        %v1965 = vsel %vm674, %v961, %v1914
        %v1966 = vsel %vm674, %v966, %v1916
        %vm1967 = vcmask 130048
        %v1968 = vsel %vm1967, %v1962, %v1928
        %v1969 = vsel %vm1967, %v1963, %v1930
        %v1970 = vsel %vm1967, %v1964, %v1932
        %v1971 = vsel %vm1967, %v1965, %v1934
        %v1972 = vsel %vm1967, %v1966, %v1936
        %vm1973 = vcmask 195584
        %v1974 = vsel %vm1973, %v1968, %v1948
        %v1975 = vsel %vm1973, %v1969, %v1950
        %v1976 = vsel %vm1973, %v1970, %v1952
        %v1977 = vsel %vm1973, %v1971, %v1954
        %v1978 = vsel %vm1973, %v1972, %v1956
        %v1979 = vpack.c.bf16 %v1975, %v1974
        %v1980 = vpack.c.bf16 %v1977, %v1976
        %v1981 = vpack.c.bf16 %v1978, %v1978
        %v1982 = vld [vmem:[%s6] sm:$0xf]
        %v1983 = vld [vmem:[%s6 + $0x4] sm:$0xf]
        %v1984 = vld [vmem:[%s6 + $0x8] sm:$0xf]
        %v1985 = vld [vmem:[%s6 + $0xc] sm:$0xf]
        %v1986 = vlaneseq
        %v1987 = vshrl.u32 %v1986, 7
        %v1988 = vsub.s32 5, %v1987
        %v1989 = vrot.slane %v484, %v1988
        %v1994 = vunpack.c.l.b16 %v1982
        %v1995 = vunpack.c.l.b16 %v1983
        %v1996 = vunpack.c.l.b16 %v1984
        %v1997 = vunpack.c.l.b16 %v1985
        %v1998 = vpack.c.b16 %v1995, %v1994
        %v1999 = vpack.c.b16 %v1997, %v1996
        %v2003 = vsel %vm485, %v1979, 0
        %v2006 = vsel %vm485, %v1980, 0
        %v2009 = vsel %vm485, %v1981, 0
        %2011 = vmatprep.subr.bf16.mxu0 0
        %2012 = vmatpush1.bf16.msra.mxu0 0
        %2013 = vmatprep.subr.bf16.mxu0 0
        %2014 = vmatpush1.bf16.msra.mxu0 0
        %2015 = vmatprep.subr.bf16.mxu0 0
        %2016 = vmatpush1.bf16.msra.mxu0 0
        %2017 = vmatprep.subr.bf16.mxu0 0
        %2018 = vmatpush1.bf16.msra.mxu0 0
        %2019 = vmatprep.subr.bf16.mxu0 0
        %2020 = vmatpush1.bf16.msra.mxu0 0
        %2021 = vmatprep.subr.bf16.mxu0 0
        %2022 = vmatpush1.bf16.msra.mxu0 0
        %2023 = vmatprep.subr.bf16.mxu0 0
        %2024 = vmatpush1.bf16.msra.mxu0 %v1999
        %2025 = vmatprep.subr.bf16.mxu0 0
        %2026 = vmatpush1.bf16.msra.mxu0 %v1998
        %2027 = vmatprep.subr.bf16.mxu0 0
        %2028 = vmatpush2.bf16.msra.mxu0 0
        %2029 = vmatprep.subr.bf16.mxu0 0
        %2030 = vmatpush2.bf16.msra.mxu0 0
        %2031 = vmatprep.subr.bf16.mxu0 0
        %2032 = vmatpush2.bf16.msra.mxu0 0
        %2033 = vmatprep.subr.bf16.mxu0 0
        %2034 = vmatpush2.bf16.msra.mxu0 0
        %2035 = vmatprep.subr.bf16.mxu0 0
        %2036 = vmatpush2.bf16.msra.mxu0 0
        %2037 = vmatprep.subr.bf16.mxu0 0
        %2038 = vmatpush2.bf16.msra.mxu0 0
        %2039 = vmatprep.subr.bf16.mxu0 0
        %2040 = vmatpush2.bf16.msra.mxu0 0
        %2041 = vmatprep.subr.bf16.mxu0 0
        %2042 = vmatpush2.bf16.msra.mxu0 0
        %2043 = vmatprep.mubr.bf16.mxu0 0
        %2044 = vmatmul.mubr.bf16.gmra.mxu0 %v2003
        %v2045 = vpop.f32.mrf.mxu0
        %v2046 = vadd.f32 %v1989, %v2045
        %v2047 = vpop.f32.mrf.mxu0
        %v2048 = vpop.f32.mrf.mxu0
        %v2049 = vadd.f32 %v1989, %v2048
        %v2050 = vpop.f32.mrf.mxu0
        %2051 = vmatprep.mubr.bf16.mxu0 0
        %2052 = vmatmul.mubr.bf16.gmra.mxu0 %v2006
        %v2053 = vpop.f32.mrf.mxu0
        %v2054 = vadd.f32 %v1989, %v2053
        %v2055 = vpop.f32.mrf.mxu0
        %v2056 = vpop.f32.mrf.mxu0
        %v2057 = vadd.f32 %v1989, %v2056
        %v2058 = vpop.f32.mrf.mxu0
        %2059 = vmatprep.mubr.bf16.mxu0 0
        %2060 = vmatmul.mubr.bf16.gmra.mxu0 %v2009
        %v2061 = vpop.f32.mrf.mxu0
        %v2062 = vadd.f32 %v1989, %v2061
        %v2063 = vpop.f32.mrf.mxu0
        %v2064 = vpop.f32.mrf.mxu0
        %v2065 = vpop.f32.mrf.mxu0
        %2066 = vdwg.mxu0
        %v2067 = vadd.f32 %v477, %v2046
        %v2068 = vadd.f32 %v478, %v2049
        %v2069 = vadd.f32 %v479, %v2054
        %v2070 = vadd.f32 %v480, %v2057
        %v2071 = vadd.f32 %v482, %v2062
        %v2072 = vsel %vm485, %v2067, 0.0
        %2073 = vadd.xlane.f32.xlu0 %v2072
        %v2074 = vpop.xlane.xlu0 %2073
        %v2075 = vsel %vm485, %v2068, 0.0
        %2076 = vadd.xlane.f32.xlu0 %v2075
        %v2077 = vpop.xlane.xlu0 %2076
        %v2078 = vsel %vm485, %v2069, 0.0
        %2079 = vadd.xlane.f32.xlu0 %v2078
        %v2080 = vpop.xlane.xlu0 %2079
        %v2081 = vsel %vm485, %v2070, 0.0
        %2082 = vadd.xlane.f32.xlu0 %v2081
        %v2083 = vpop.xlane.xlu0 %2082
        %v2084 = vsel %vm498, %v2071, 0.0
        %2085 = vadd.xlane.f32.xlu0 %v2084
        %v2086 = vpop.xlane.xlu0 %2085
        %v2087 = vmul.f32 %v2074, %v502
        %v2088 = vmul.f32 %v2077, %v502
        %v2089 = vmul.f32 %v2080, %v502
        %v2090 = vmul.f32 %v2083, %v502
        %v2091 = vmul.f32 %v2086, %v502
        %v2092 = vsub.f32 %v2067, %v2087
        %v2093 = vsub.f32 %v2068, %v2088
        %v2094 = vsub.f32 %v2069, %v2089
        %v2095 = vsub.f32 %v2070, %v2090
        %v2096 = vsub.f32 %v2071, %v2091
        %v2097 = vmul.f32 %v2092, %v2092
        %v2098 = vmul.f32 %v2093, %v2093
        %v2099 = vmul.f32 %v2094, %v2094
        %v2100 = vmul.f32 %v2095, %v2095
        %v2101 = vmul.f32 %v2096, %v2096
        %v2102 = vsel %vm485, %v2097, 0.0
        %2103 = vadd.xlane.f32.xlu0 %v2102
        %v2104 = vpop.xlane.xlu0 %2103
        %v2105 = vsel %vm485, %v2098, 0.0
        %2106 = vadd.xlane.f32.xlu0 %v2105
        %v2107 = vpop.xlane.xlu0 %2106
        %v2108 = vsel %vm485, %v2099, 0.0
        %2109 = vadd.xlane.f32.xlu0 %v2108
        %v2110 = vpop.xlane.xlu0 %2109
        %v2111 = vsel %vm485, %v2100, 0.0
        %2112 = vadd.xlane.f32.xlu0 %v2111
        %v2113 = vpop.xlane.xlu0 %2112
        %v2114 = vsel %vm498, %v2101, 0.0
        %2115 = vadd.xlane.f32.xlu0 %v2114
        %v2116 = vpop.xlane.xlu0 %2115
        %v2117 = vmul.f32 %v2104, %v502
        %v2118 = vmul.f32 %v2107, %v502
        %v2119 = vmul.f32 %v2110, %v502
        %v2120 = vmul.f32 %v2113, %v502
        %v2121 = vmul.f32 %v2116, %v502
        %v2122 = vadd.f32 %v2117, 1e-06
        %v2123 = vadd.f32 %v2118, 1e-06
        %v2124 = vadd.f32 %v2119, 1e-06
        %v2125 = vadd.f32 %v2120, 1e-06
        %v2126 = vadd.f32 %v2121, 1e-06
        %v2127 = vrsqrt.pop %v2122
        %v2128 = vrsqrt.pop %v2123
        %v2129 = vrsqrt.pop %v2124
        %v2130 = vrsqrt.pop %v2125
        %v2131 = vrsqrt.pop %v2126
        %v2132 = vmul.f32 %v2092, %v2127
        %v2133 = vmul.f32 %v2093, %v2128
        %v2134 = vmul.f32 %v2094, %v2129
        %v2135 = vmul.f32 %v2095, %v2130
        %v2136 = vmul.f32 %v2096, %v2131
        %v2137 = vlaneseq
        %v2138 = vshrl.u32 %v2137, 7
        %v2139 = vsub.s32 2, %v2138
        %v2140 = vrot.slane %v484, %v2139
        %v2141 = vmul.f32 %v2132, %v2140
        %v2142 = vmul.f32 %v2133, %v2140
        %v2143 = vmul.f32 %v2134, %v2140
        %v2144 = vmul.f32 %v2135, %v2140
        %v2145 = vmul.f32 %v2136, %v2140
        %v2146 = vlaneseq
        %v2147 = vshrl.u32 %v2146, 7
        %v2148 = vsub.s32 3, %v2147
        %v2149 = vrot.slane %v484, %v2148
        %v2150 = vadd.f32 %v2141, %v2149
        %v2151 = vadd.f32 %v2142, %v2149
        %v2152 = vadd.f32 %v2143, %v2149
        %v2153 = vadd.f32 %v2144, %v2149
        %v2154 = vadd.f32 %v2145, %v2149
        %v2155 = vpack.c.bf16 %v2151, %v2150
        %v2156 = vpack.c.bf16 %v2153, %v2152
        %v2157 = vpack.c.bf16 %v2154, %v2154
        %v2158 = vld [vmem:[%s7] sm:$0xf]
        %v2159 = vld [vmem:[%s7 + $0x4] sm:$0xf]
        %v2160 = vld [vmem:[%s7 + $0x8] sm:$0xf]
        %v2161 = vld [vmem:[%s7 + $0xc] sm:$0xf]
        %v2162 = vlaneseq
        %v2163 = vshrl.u32 %v2162, 7
        %v2164 = vsub.s32 6, %v2163
        %v2165 = vrot.slane %v484, %v2164
        %v2170 = vunpack.c.l.b16 %v2158
        %v2171 = vunpack.c.l.b16 %v2159
        %v2172 = vunpack.c.l.b16 %v2160
        %v2173 = vunpack.c.l.b16 %v2161
        %v2174 = vpack.c.b16 %v2171, %v2170
        %v2175 = vpack.c.b16 %v2173, %v2172
        %v2179 = vsel %vm485, %v2155, 0
        %v2182 = vsel %vm485, %v2156, 0
        %v2185 = vsel %vm485, %v2157, 0
        %2187 = vmatprep.subr.bf16.mxu0 0
        %2188 = vmatpush1.bf16.msra.mxu0 0
        %2189 = vmatprep.subr.bf16.mxu0 0
        %2190 = vmatpush1.bf16.msra.mxu0 0
        %2191 = vmatprep.subr.bf16.mxu0 0
        %2192 = vmatpush1.bf16.msra.mxu0 0
        %2193 = vmatprep.subr.bf16.mxu0 0
        %2194 = vmatpush1.bf16.msra.mxu0 0
        %2195 = vmatprep.subr.bf16.mxu0 0
        %2196 = vmatpush1.bf16.msra.mxu0 0
        %2197 = vmatprep.subr.bf16.mxu0 0
        %2198 = vmatpush1.bf16.msra.mxu0 0
        %2199 = vmatprep.subr.bf16.mxu0 0
        %2200 = vmatpush1.bf16.msra.mxu0 %v2175
        %2201 = vmatprep.subr.bf16.mxu0 0
        %2202 = vmatpush1.bf16.msra.mxu0 %v2174
        %2203 = vmatprep.subr.bf16.mxu0 0
        %2204 = vmatpush2.bf16.msra.mxu0 0
        %2205 = vmatprep.subr.bf16.mxu0 0
        %2206 = vmatpush2.bf16.msra.mxu0 0
        %2207 = vmatprep.subr.bf16.mxu0 0
        %2208 = vmatpush2.bf16.msra.mxu0 0
        %2209 = vmatprep.subr.bf16.mxu0 0
        %2210 = vmatpush2.bf16.msra.mxu0 0
        %2211 = vmatprep.subr.bf16.mxu0 0
        %2212 = vmatpush2.bf16.msra.mxu0 0
        %2213 = vmatprep.subr.bf16.mxu0 0
        %2214 = vmatpush2.bf16.msra.mxu0 0
        %2215 = vmatprep.subr.bf16.mxu0 0
        %2216 = vmatpush2.bf16.msra.mxu0 0
        %2217 = vmatprep.subr.bf16.mxu0 0
        %2218 = vmatpush2.bf16.msra.mxu0 0
        %2219 = vmatprep.mubr.bf16.mxu0 0
        %2220 = vmatmul.mubr.bf16.gmra.mxu0 %v2179
        %v2221 = vpop.f32.mrf.mxu0
        %v2222 = vadd.f32 %v2165, %v2221
        %v2223 = vpop.f32.mrf.mxu0
        %v2224 = vpop.f32.mrf.mxu0
        %v2225 = vadd.f32 %v2165, %v2224
        %v2226 = vpop.f32.mrf.mxu0
        %2227 = vmatprep.mubr.bf16.mxu0 0
        %2228 = vmatmul.mubr.bf16.gmra.mxu0 %v2182
        %v2229 = vpop.f32.mrf.mxu0
        %v2230 = vadd.f32 %v2165, %v2229
        %v2231 = vpop.f32.mrf.mxu0
        %v2232 = vpop.f32.mrf.mxu0
        %v2233 = vadd.f32 %v2165, %v2232
        %v2234 = vpop.f32.mrf.mxu0
        %2235 = vmatprep.mubr.bf16.mxu0 0
        %2236 = vmatmul.mubr.bf16.gmra.mxu0 %v2185
        %v2237 = vpop.f32.mrf.mxu0
        %v2238 = vadd.f32 %v2165, %v2237
        %v2239 = vpop.f32.mrf.mxu0
        %v2240 = vpop.f32.mrf.mxu0
        %v2241 = vpop.f32.mrf.mxu0
        %2242 = vdwg.mxu0
        %v2243 = vmul.f32 %v2222, 0.5
        %v2244 = vmul.f32 %v2225, 0.5
        %v2245 = vmul.f32 %v2230, 0.5
        %v2246 = vmul.f32 %v2233, 0.5
        %v2247 = vmul.f32 %v2238, 0.5
        %v2248 = vmul.f32 %v2222, 0.7978846
        %v2249 = vmul.f32 %v2225, 0.7978846
        %v2250 = vmul.f32 %v2230, 0.7978846
        %v2251 = vmul.f32 %v2233, 0.7978846
        %v2252 = vmul.f32 %v2238, 0.7978846
        %v2253 = vmul.f32 %v2222, 0.044715
        %v2254 = vmul.f32 %v2225, 0.044715
        %v2255 = vmul.f32 %v2230, 0.044715
        %v2256 = vmul.f32 %v2233, 0.044715
        %v2257 = vmul.f32 %v2238, 0.044715
        %v2258 = vmul.f32 %v2253, %v2222
        %v2259 = vmul.f32 %v2254, %v2225
        %v2260 = vmul.f32 %v2255, %v2230
        %v2261 = vmul.f32 %v2256, %v2233
        %v2262 = vmul.f32 %v2257, %v2238
        %v2263 = vadd.f32 %v2258, 1.0
        %v2264 = vadd.f32 %v2259, 1.0
        %v2265 = vadd.f32 %v2260, 1.0
        %v2266 = vadd.f32 %v2261, 1.0
        %v2267 = vadd.f32 %v2262, 1.0
        %v2268 = vmul.f32 %v2248, %v2263
        %v2269 = vmul.f32 %v2249, %v2264
        %v2270 = vmul.f32 %v2250, %v2265
        %v2271 = vmul.f32 %v2251, %v2266
        %v2272 = vmul.f32 %v2252, %v2267
        %v2273 = vtanh.pop %v2268
        %v2274 = vtanh.pop %v2269
        %v2275 = vtanh.pop %v2270
        %v2276 = vtanh.pop %v2271
        %v2277 = vtanh.pop %v2272
        %v2278 = vadd.f32 %v2273, 1.0
        %v2279 = vadd.f32 %v2274, 1.0
        %v2280 = vadd.f32 %v2275, 1.0
        %v2281 = vadd.f32 %v2276, 1.0
        %v2282 = vadd.f32 %v2277, 1.0
        %v2283 = vmul.f32 %v2243, %v2278
        %v2284 = vmul.f32 %v2244, %v2279
        %v2285 = vmul.f32 %v2245, %v2280
        %v2286 = vmul.f32 %v2246, %v2281
        %v2287 = vmul.f32 %v2247, %v2282
        %v2288 = vpack.c.bf16 %v2284, %v2283
        %v2289 = vpack.c.bf16 %v2286, %v2285
        %v2290 = vpack.c.bf16 %v2287, %v2287
        %v2291 = vld [vmem:[%s8] sm:$0xf]
        %v2292 = vld [vmem:[%s8 + $0x4] sm:$0xf]
        %v2293 = vld [vmem:[%s8 + $0x8] sm:$0xf]
        %v2294 = vld [vmem:[%s8 + $0xc] sm:$0xf]
        %v2295 = vld [vmem:[%s8 + $0x10] sm:$0xf]
        %v2296 = vld [vmem:[%s8 + $0x14] sm:$0xf]
        %v2297 = vld [vmem:[%s8 + $0x18] sm:$0xf]
        %v2298 = vld [vmem:[%s8 + $0x1c] sm:$0xf]
        %v2299 = vlaneseq
        %v2300 = vshrl.u32 %v2299, 7
        %v2301 = vsub.s32 7, %v2300
        %v2302 = vrot.slane %v484, %v2301
        %v2311 = vunpack.c.l.b16 %v2291
        %v2312 = vunpack.c.l.b16 %v2292
        %v2313 = vunpack.c.l.b16 %v2293
        %v2314 = vunpack.c.l.b16 %v2294
        %v2315 = vunpack.c.l.b16 %v2295
        %v2316 = vunpack.c.l.b16 %v2296
        %v2317 = vunpack.c.l.b16 %v2297
        %v2318 = vunpack.c.l.b16 %v2298
        %v2319 = vpack.c.b16 %v2312, %v2311
        %v2320 = vpack.c.b16 %v2314, %v2313
        %v2321 = vpack.c.b16 %v2316, %v2315
        %v2322 = vpack.c.b16 %v2318, %v2317
        %vm2327 = vcmask 523264
        %v2329 = vsel %vm2327, %v2288, 0
        %v2332 = vsel %vm2327, %v2289, 0
        %v2335 = vsel %vm2327, %v2290, 0
        %2337 = vmatprep.subr.bf16.mxu0 0
        %2338 = vmatpush1.bf16.msra.mxu0 0
        %2339 = vmatprep.subr.bf16.mxu0 0
        %2340 = vmatpush1.bf16.msra.mxu0 0
        %2341 = vmatprep.subr.bf16.mxu0 0
        %2342 = vmatpush1.bf16.msra.mxu0 0
        %2343 = vmatprep.subr.bf16.mxu0 0
        %2344 = vmatpush1.bf16.msra.mxu0 0
        %2345 = vmatprep.subr.bf16.mxu0 0
        %2346 = vmatpush1.bf16.msra.mxu0 %v2322
        %2347 = vmatprep.subr.bf16.mxu0 0
        %2348 = vmatpush1.bf16.msra.mxu0 %v2321
        %2349 = vmatprep.subr.bf16.mxu0 0
        %2350 = vmatpush1.bf16.msra.mxu0 %v2320
        %2351 = vmatprep.subr.bf16.mxu0 0
        %2352 = vmatpush1.bf16.msra.mxu0 %v2319
        %2353 = vmatprep.subr.bf16.mxu0 0
        %2354 = vmatpush2.bf16.msra.mxu0 0
        %2355 = vmatprep.subr.bf16.mxu0 0
        %2356 = vmatpush2.bf16.msra.mxu0 0
        %2357 = vmatprep.subr.bf16.mxu0 0
        %2358 = vmatpush2.bf16.msra.mxu0 0
        %2359 = vmatprep.subr.bf16.mxu0 0
        %2360 = vmatpush2.bf16.msra.mxu0 0
        %2361 = vmatprep.subr.bf16.mxu0 0
        %2362 = vmatpush2.bf16.msra.mxu0 0
        %2363 = vmatprep.subr.bf16.mxu0 0
        %2364 = vmatpush2.bf16.msra.mxu0 0
        %2365 = vmatprep.subr.bf16.mxu0 0
        %2366 = vmatpush2.bf16.msra.mxu0 0
        %2367 = vmatprep.subr.bf16.mxu0 0
        %2368 = vmatpush2.bf16.msra.mxu0 0
        %2369 = vmatprep.mubr.bf16.mxu0 0
        %2370 = vmatmul.mubr.bf16.gmra.mxu0 %v2329
        %v2371 = vpop.f32.mrf.mxu0
        %v2372 = vadd.f32 %v2302, %v2371
        %v2373 = vpop.f32.mrf.mxu0
        %v2374 = vpop.f32.mrf.mxu0
        %v2375 = vadd.f32 %v2302, %v2374
        %v2376 = vpop.f32.mrf.mxu0
        %2377 = vmatprep.mubr.bf16.mxu0 0
        %2378 = vmatmul.mubr.bf16.gmra.mxu0 %v2332
        %v2379 = vpop.f32.mrf.mxu0
        %v2380 = vadd.f32 %v2302, %v2379
        %v2381 = vpop.f32.mrf.mxu0
        %v2382 = vpop.f32.mrf.mxu0
        %v2383 = vadd.f32 %v2302, %v2382
        %v2384 = vpop.f32.mrf.mxu0
        %2385 = vmatprep.mubr.bf16.mxu0 0
        %2386 = vmatmul.mubr.bf16.gmra.mxu0 %v2335
        %v2387 = vpop.f32.mrf.mxu0
        %v2388 = vadd.f32 %v2302, %v2387
        %v2389 = vpop.f32.mrf.mxu0
        %v2390 = vpop.f32.mrf.mxu0
        %v2391 = vpop.f32.mrf.mxu0
        %2392 = vdwg.mxu0
        %v2393 = vadd.f32 %v2067, %v2372
        %v2394 = vadd.f32 %v2068, %v2375
        %v2395 = vadd.f32 %v2069, %v2380
        %v2396 = vadd.f32 %v2070, %v2383
        %v2397 = vadd.f32 %v2071, %v2388
        %s2398 = scalar_lea.vmem %s9, 8
        %v2399 = vld [vmem:[%s2398] sm:$0xff]
        %v2400 = vsel %vm485, %v2393, 0.0
        %2401 = vadd.xlane.f32.xlu0 %v2400
        %v2402 = vpop.xlane.xlu0 %2401
        %v2403 = vsel %vm485, %v2394, 0.0
        %2404 = vadd.xlane.f32.xlu0 %v2403
        %v2405 = vpop.xlane.xlu0 %2404
        %v2406 = vsel %vm485, %v2395, 0.0
        %2407 = vadd.xlane.f32.xlu0 %v2406
        %v2408 = vpop.xlane.xlu0 %2407
        %v2409 = vsel %vm485, %v2396, 0.0
        %2410 = vadd.xlane.f32.xlu0 %v2409
        %v2411 = vpop.xlane.xlu0 %2410
        %v2412 = vsel %vm498, %v2397, 0.0
        %2413 = vadd.xlane.f32.xlu0 %v2412
        %v2414 = vpop.xlane.xlu0 %2413
        %v2415 = vmul.f32 %v2402, %v502
        %v2416 = vmul.f32 %v2405, %v502
        %v2417 = vmul.f32 %v2408, %v502
        %v2418 = vmul.f32 %v2411, %v502
        %v2419 = vmul.f32 %v2414, %v502
        %v2420 = vsub.f32 %v2393, %v2415
        %v2421 = vsub.f32 %v2394, %v2416
        %v2422 = vsub.f32 %v2395, %v2417
        %v2423 = vsub.f32 %v2396, %v2418
        %v2424 = vsub.f32 %v2397, %v2419
        %v2425 = vmul.f32 %v2420, %v2420
        %v2426 = vmul.f32 %v2421, %v2421
        %v2427 = vmul.f32 %v2422, %v2422
        %v2428 = vmul.f32 %v2423, %v2423
        %v2429 = vmul.f32 %v2424, %v2424
        %v2430 = vsel %vm485, %v2425, 0.0
        %2431 = vadd.xlane.f32.xlu0 %v2430
        %v2432 = vpop.xlane.xlu0 %2431
        %v2433 = vsel %vm485, %v2426, 0.0
        %2434 = vadd.xlane.f32.xlu0 %v2433
        %v2435 = vpop.xlane.xlu0 %2434
        %v2436 = vsel %vm485, %v2427, 0.0
        %2437 = vadd.xlane.f32.xlu0 %v2436
        %v2438 = vpop.xlane.xlu0 %2437
        %v2439 = vsel %vm485, %v2428, 0.0
        %2440 = vadd.xlane.f32.xlu0 %v2439
        %v2441 = vpop.xlane.xlu0 %2440
        %v2442 = vsel %vm498, %v2429, 0.0
        %2443 = vadd.xlane.f32.xlu0 %v2442
        %v2444 = vpop.xlane.xlu0 %2443
        %v2445 = vmul.f32 %v2432, %v502
        %v2446 = vmul.f32 %v2435, %v502
        %v2447 = vmul.f32 %v2438, %v502
        %v2448 = vmul.f32 %v2441, %v502
        %v2449 = vmul.f32 %v2444, %v502
        %v2450 = vadd.f32 %v2445, 1e-06
        %v2451 = vadd.f32 %v2446, 1e-06
        %v2452 = vadd.f32 %v2447, 1e-06
        %v2453 = vadd.f32 %v2448, 1e-06
        %v2454 = vadd.f32 %v2449, 1e-06
        %v2455 = vrsqrt.pop %v2450
        %v2456 = vrsqrt.pop %v2451
        %v2457 = vrsqrt.pop %v2452
        %v2458 = vrsqrt.pop %v2453
        %v2459 = vrsqrt.pop %v2454
        %v2460 = vmul.f32 %v2420, %v2455
        %v2461 = vmul.f32 %v2421, %v2456
        %v2462 = vmul.f32 %v2422, %v2457
        %v2463 = vmul.f32 %v2423, %v2458
        %v2464 = vmul.f32 %v2424, %v2459
        %v2465 = vlaneseq
        %v2466 = vshrl.u32 %v2465, 7
        %v2467 = vsub.s32 0, %v2466
        %v2468 = vrot.slane %v2399, %v2467
        %v2469 = vmul.f32 %v2460, %v2468
        %v2470 = vmul.f32 %v2461, %v2468
        %v2471 = vmul.f32 %v2462, %v2468
        %v2472 = vmul.f32 %v2463, %v2468
        %v2473 = vmul.f32 %v2464, %v2468
        %v2474 = vlaneseq
        %v2475 = vshrl.u32 %v2474, 7
        %v2476 = vsub.s32 1, %v2475
        %v2477 = vrot.slane %v2399, %v2476
        %v2478 = vadd.f32 %v2469, %v2477
        %v2479 = vadd.f32 %v2470, %v2477
        %v2480 = vadd.f32 %v2471, %v2477
        %v2481 = vadd.f32 %v2472, %v2477
        %v2482 = vadd.f32 %v2473, %v2477
        %v2483 = vpack.c.bf16 %v2479, %v2478
        %v2484 = vpack.c.bf16 %v2481, %v2480
        %v2485 = vpack.c.bf16 %v2482, %v2482
        %s2486 = scalar_lea.vmem %s5, 16
        %v2487 = vld [vmem:[%s2486] sm:$0xf]
        %v2488 = vld [vmem:[%s2486 + $0x4] sm:$0xf]
        %v2489 = vld [vmem:[%s2486 + $0x8] sm:$0xf]
        %v2490 = vld [vmem:[%s2486 + $0xc] sm:$0xf]
        %v2491 = vlaneseq
        %v2492 = vshrl.u32 %v2491, 7
        %v2493 = vsub.s32 4, %v2492
        %v2494 = vrot.slane %v2399, %v2493
        %v2499 = vunpack.c.l.b16 %v2487
        %v2500 = vunpack.c.l.b16 %v2488
        %v2501 = vunpack.c.l.b16 %v2489
        %v2502 = vunpack.c.l.b16 %v2490
        %v2503 = vpack.c.b16 %v2500, %v2499
        %v2504 = vpack.c.b16 %v2502, %v2501
        %v2508 = vsel %vm485, %v2483, 0
        %v2511 = vsel %vm485, %v2484, 0
        %v2514 = vsel %vm485, %v2485, 0
        %2516 = vmatprep.subr.bf16.mxu0 0
        %2517 = vmatpush1.bf16.msra.mxu0 0
        %2518 = vmatprep.subr.bf16.mxu0 0
        %2519 = vmatpush1.bf16.msra.mxu0 0
        %2520 = vmatprep.subr.bf16.mxu0 0
        %2521 = vmatpush1.bf16.msra.mxu0 0
        %2522 = vmatprep.subr.bf16.mxu0 0
        %2523 = vmatpush1.bf16.msra.mxu0 0
        %2524 = vmatprep.subr.bf16.mxu0 0
        %2525 = vmatpush1.bf16.msra.mxu0 0
        %2526 = vmatprep.subr.bf16.mxu0 0
        %2527 = vmatpush1.bf16.msra.mxu0 0
        %2528 = vmatprep.subr.bf16.mxu0 0
        %2529 = vmatpush1.bf16.msra.mxu0 %v2504
        %2530 = vmatprep.subr.bf16.mxu0 0
        %2531 = vmatpush1.bf16.msra.mxu0 %v2503
        %2532 = vmatprep.subr.bf16.mxu0 0
        %2533 = vmatpush2.bf16.msra.mxu0 0
        %2534 = vmatprep.subr.bf16.mxu0 0
        %2535 = vmatpush2.bf16.msra.mxu0 0
        %2536 = vmatprep.subr.bf16.mxu0 0
        %2537 = vmatpush2.bf16.msra.mxu0 0
        %2538 = vmatprep.subr.bf16.mxu0 0
        %2539 = vmatpush2.bf16.msra.mxu0 0
        %2540 = vmatprep.subr.bf16.mxu0 0
        %2541 = vmatpush2.bf16.msra.mxu0 0
        %2542 = vmatprep.subr.bf16.mxu0 0
        %2543 = vmatpush2.bf16.msra.mxu0 0
        %2544 = vmatprep.subr.bf16.mxu0 0
        %2545 = vmatpush2.bf16.msra.mxu0 0
        %2546 = vmatprep.subr.bf16.mxu0 0
        %2547 = vmatpush2.bf16.msra.mxu0 0
        %2548 = vmatprep.mubr.bf16.mxu0 0
        %2549 = vmatmul.mubr.bf16.gmra.mxu0 %v2508
        %v2550 = vpop.f32.mrf.mxu0
        %v2551 = vadd.f32 %v2494, %v2550
        %v2552 = vpop.f32.mrf.mxu0
        %v2553 = vpop.f32.mrf.mxu0
        %v2554 = vadd.f32 %v2494, %v2553
        %v2555 = vpop.f32.mrf.mxu0
        %2556 = vmatprep.mubr.bf16.mxu0 0
        %2557 = vmatmul.mubr.bf16.gmra.mxu0 %v2511
        %v2558 = vpop.f32.mrf.mxu0
        %v2559 = vadd.f32 %v2494, %v2558
        %v2560 = vpop.f32.mrf.mxu0
        %v2561 = vpop.f32.mrf.mxu0
        %v2562 = vadd.f32 %v2494, %v2561
        %v2563 = vpop.f32.mrf.mxu0
        %2564 = vmatprep.mubr.bf16.mxu0 0
        %2565 = vmatmul.mubr.bf16.gmra.mxu0 %v2514
        %v2566 = vpop.f32.mrf.mxu0
        %v2567 = vadd.f32 %v2494, %v2566
        %v2568 = vpop.f32.mrf.mxu0
        %v2569 = vpop.f32.mrf.mxu0
        %v2570 = vpop.f32.mrf.mxu0
        %2571 = vdwg.mxu0
        %2577 = vrot.lane.b32.xlu0 %v2551, 96
        %v2578 = vpop.permute.xlu0 %2577
        %2579 = vrot.lane.b32.xlu0 %v2554, 96
        %v2580 = vpop.permute.xlu0 %2579
        %2581 = vrot.lane.b32.xlu0 %v2559, 96
        %v2582 = vpop.permute.xlu0 %2581
        %2583 = vrot.lane.b32.xlu0 %v2562, 96
        %v2584 = vpop.permute.xlu0 %2583
        %2585 = vrot.lane.b32.xlu0 %v2567, 96
        %v2586 = vpop.permute.xlu0 %2585
        %v2587 = vsel %vm674, %v2551, 0
        %v2589 = vsel %vm674, %v2554, 0
        %v2591 = vsel %vm674, %v2559, 0
        %v2593 = vsel %vm674, %v2562, 0
        %v2595 = vsel %vm674, %v2567, 0
        %v2597 = vsel %vm674, %v2578, 0
        %v2599 = vsel %vm674, %v2580, 0
        %v2601 = vsel %vm674, %v2582, 0
        %v2603 = vsel %vm674, %v2584, 0
        %v2605 = vsel %vm674, %v2586, 0
        %2607 = vmatprep.subr.mxu0 0.0
        %2608 = vmatpush1.xpose.msra.mxu0 0.0
        %2609 = vmatprep.subr.mxu0 0.0
        %2610 = vmatpush1.xpose.msra.mxu0 0.0
        %2611 = vmatprep.subr.mxu0 0.0
        %2612 = vmatpush1.xpose.msra.mxu0 0.0
        %2613 = vmatprep.subr.mxu0 0.0
        %2614 = vmatpush1.xpose.msra.mxu0 0.0
        %2615 = vmatprep.subr.mxu0 0.0
        %2616 = vmatpush1.xpose.msra.mxu0 0.0
        %2617 = vmatprep.subr.mxu0 0.0
        %2618 = vmatpush1.xpose.msra.mxu0 0.0
        %2619 = vmatprep.subr.mxu0 0.0
        %2620 = vmatpush1.xpose.msra.mxu0 0.0
        %2621 = vmatprep.subr.mxu0 0.0
        %2622 = vmatpush1.xpose.msra.mxu0 0.0
        %2623 = vmatprep.subr.mxu0 0.0
        %2624 = vmatpush1.xpose.msra.mxu0 0.0
        %2625 = vmatprep.subr.mxu0 0.0
        %2626 = vmatpush1.xpose.msra.mxu0 0.0
        %2627 = vmatprep.subr.mxu0 0.0
        %2628 = vmatpush1.xpose.msra.mxu0 0.0
        %2629 = vmatprep.subr.mxu0 0.0
        %2630 = vmatpush1.xpose.msra.mxu0 %v2605
        %2631 = vmatprep.subr.mxu0 0.0
        %2632 = vmatpush1.xpose.msra.mxu0 %v2603
        %2633 = vmatprep.subr.mxu0 0.0
        %2634 = vmatpush1.xpose.msra.mxu0 %v2601
        %2635 = vmatprep.subr.mxu0 0.0
        %2636 = vmatpush1.xpose.msra.mxu0 %v2599
        %2637 = vmatprep.subr.mxu0 0.0
        %2638 = vmatpush1.xpose.msra.mxu0 %v2597
        %2639 = vmatprep.subr.mxu0 0.0
        %2640 = vmatpush2.xpose.msra.mxu0 0.0
        %2641 = vmatprep.subr.mxu0 0.0
        %2642 = vmatpush2.xpose.msra.mxu0 0.0
        %2643 = vmatprep.subr.mxu0 0.0
        %2644 = vmatpush2.xpose.msra.mxu0 0.0
        %2645 = vmatprep.subr.mxu0 0.0
        %2646 = vmatpush2.xpose.msra.mxu0 0.0
        %2647 = vmatprep.subr.mxu0 0.0
        %2648 = vmatpush2.xpose.msra.mxu0 0.0
        %2649 = vmatprep.subr.mxu0 0.0
        %2650 = vmatpush2.xpose.msra.mxu0 0.0
        %2651 = vmatprep.subr.mxu0 0.0
        %2652 = vmatpush2.xpose.msra.mxu0 0.0
        %2653 = vmatprep.subr.mxu0 0.0
        %2654 = vmatpush2.xpose.msra.mxu0 0.0
        %2655 = vmatprep.subr.mxu0 0.0
        %2656 = vmatpush2.xpose.msra.mxu0 0.0
        %2657 = vmatprep.subr.mxu0 0.0
        %2658 = vmatpush2.xpose.msra.mxu0 0.0
        %2659 = vmatprep.subr.mxu0 0.0
        %2660 = vmatpush2.xpose.msra.mxu0 0.0
        %2661 = vmatprep.subr.mxu0 0.0
        %2662 = vmatpush2.xpose.msra.mxu0 0.0
        %2663 = vmatprep.subr.mxu0 0.0
        %2664 = vmatpush2.xpose.msra.mxu0 0.0
        %2665 = vmatprep.subr.mxu0 0.0
        %2666 = vmatpush2.xpose.msra.mxu0 0.0
        %2667 = vmatprep.subr.mxu0 0.0
        %2668 = vmatpush2.xpose.msra.mxu0 0.0
        %2669 = vmatprep.subr.mxu0 0.0
        %2670 = vmatpush2.xpose.msra.mxu0 0.0
        %2671 = vmatprep.mubr.f32.mxu0 0.0
        %2672 = vmatmul.mubr.f32.gmra.mxu0 %v2587
        %v2673 = vpop.f32.mrf.mxu0
        %v2674 = vadd.f32 0.0, %v2673
        %v2675 = vpop.f32.mrf.mxu0
        %2676 = vmatprep.mubr.f32.mxu0 0.0
        %2677 = vmatmul.mubr.f32.gmra.mxu0 %v2589
        %v2678 = vpop.f32.mrf.mxu0
        %v2679 = vadd.f32 0.0, %v2678
        %v2680 = vpop.f32.mrf.mxu0
        %2681 = vmatprep.mubr.f32.mxu0 0.0
        %2682 = vmatmul.mubr.f32.gmra.mxu0 %v2591
        %v2683 = vpop.f32.mrf.mxu0
        %v2684 = vadd.f32 0.0, %v2683
        %v2685 = vpop.f32.mrf.mxu0
        %2686 = vmatprep.mubr.f32.mxu0 0.0
        %2687 = vmatmul.mubr.f32.gmra.mxu0 %v2593
        %v2688 = vpop.f32.mrf.mxu0
        %v2689 = vadd.f32 0.0, %v2688
        %v2690 = vpop.f32.mrf.mxu0
        %2691 = vmatprep.mubr.f32.mxu0 0.0
        %2692 = vmatmul.mubr.f32.gmra.mxu0 %v2595
        %v2693 = vpop.f32.mrf.mxu0
        %v2694 = vadd.f32 0.0, %v2693
        %v2695 = vpop.f32.mrf.mxu0
        %2696 = vdwg.mxu0
        %v2697 = vmul.f32 %v2674, 0.35355338
        %v2698 = vmul.f32 %v2679, 0.35355338
        %v2699 = vmul.f32 %v2684, 0.35355338
        %v2700 = vmul.f32 %v2689, 0.35355338
        %v2701 = vmul.f32 %v2694, 0.35355338
        %v2702 = vsel %vm790, %v2697, -inf
        %2703 = vmax.xlane.f32.xlu0 %v2702
        %v2704 = vpop.xlane.xlu0 %2703
        %v2705 = vsel %vm790, %v2698, -inf
        %2706 = vmax.xlane.f32.xlu0 %v2705
        %v2707 = vpop.xlane.xlu0 %2706
        %v2708 = vsel %vm790, %v2699, -inf
        %2709 = vmax.xlane.f32.xlu0 %v2708
        %v2710 = vpop.xlane.xlu0 %2709
        %v2711 = vsel %vm790, %v2700, -inf
        %2712 = vmax.xlane.f32.xlu0 %v2711
        %v2713 = vpop.xlane.xlu0 %2712
        %v2714 = vsel %vm803, %v2701, -inf
        %2715 = vmax.xlane.f32.xlu0 %v2714
        %v2716 = vpop.xlane.xlu0 %2715
        %v2717 = vsub.f32 %v2697, %v2704
        %v2718 = vsub.f32 %v2698, %v2707
        %v2719 = vsub.f32 %v2699, %v2710
        %v2720 = vsub.f32 %v2700, %v2713
        %v2721 = vsub.f32 %v2701, %v2716
        %v2722 = vmul.f32 %v2717, 1.442695
        %v2723 = vpow.pop %v2722
        %v2724 = vmul.f32 %v2718, 1.442695
        %v2725 = vpow.pop %v2724
        %v2726 = vmul.f32 %v2719, 1.442695
        %v2727 = vpow.pop %v2726
        %v2728 = vmul.f32 %v2720, 1.442695
        %v2729 = vpow.pop %v2728
        %v2730 = vmul.f32 %v2721, 1.442695
        %v2731 = vpow.pop %v2730
        %v2732 = vsel %vm790, %v2723, 0.0
        %2733 = vadd.xlane.f32.xlu0 %v2732
        %v2734 = vpop.xlane.xlu0 %2733
        %v2735 = vsel %vm790, %v2725, 0.0
        %2736 = vadd.xlane.f32.xlu0 %v2735
        %v2737 = vpop.xlane.xlu0 %2736
        %v2738 = vsel %vm790, %v2727, 0.0
        %2739 = vadd.xlane.f32.xlu0 %v2738
        %v2740 = vpop.xlane.xlu0 %2739
        %v2741 = vsel %vm790, %v2729, 0.0
        %2742 = vadd.xlane.f32.xlu0 %v2741
        %v2743 = vpop.xlane.xlu0 %2742
        %v2744 = vsel %vm803, %v2731, 0.0
        %2745 = vadd.xlane.f32.xlu0 %v2744
        %v2746 = vpop.xlane.xlu0 %2745
        %v2747 = vrcp.pop %v2734
        %v2748 = vrcp.pop %v2737
        %v2749 = vrcp.pop %v2740
        %v2750 = vrcp.pop %v2743
        %v2751 = vrcp.pop %v2746
        %v2752 = vmul.f32 %v2723, %v2747
        %v2753 = vmul.f32 %v2725, %v2748
        %v2754 = vmul.f32 %v2727, %v2749
        %v2755 = vmul.f32 %v2729, %v2750
        %v2756 = vmul.f32 %v2731, %v2751
        %2757 = vrot.lane.b32.xlu0 %v2551, 64
        %v2758 = vpop.permute.xlu0 %2757
        %2759 = vrot.lane.b32.xlu0 %v2554, 64
        %v2760 = vpop.permute.xlu0 %2759
        %2761 = vrot.lane.b32.xlu0 %v2559, 64
        %v2762 = vpop.permute.xlu0 %2761
        %2763 = vrot.lane.b32.xlu0 %v2562, 64
        %v2764 = vpop.permute.xlu0 %2763
        %2765 = vrot.lane.b32.xlu0 %v2567, 64
        %v2766 = vpop.permute.xlu0 %2765
        %v2772 = vsel %vm790, %v2752, 0
        %v2775 = vsel %vm790, %v2753, 0
        %v2778 = vsel %vm790, %v2754, 0
        %v2781 = vsel %vm790, %v2755, 0
        %v2784 = vsel %vm790, %v2756, 0
        %v2786 = vsel %vm876, %v2766, 0
        %2788 = vmatprep.subr.mxu0 0.0
        %2789 = vmatpush1.msra.mxu0 0.0
        %2790 = vmatprep.subr.mxu0 0.0
        %2791 = vmatpush1.msra.mxu0 0.0
        %2792 = vmatprep.subr.mxu0 0.0
        %2793 = vmatpush1.msra.mxu0 0.0
        %2794 = vmatprep.subr.mxu0 0.0
        %2795 = vmatpush1.msra.mxu0 0.0
        %2796 = vmatprep.subr.mxu0 0.0
        %2797 = vmatpush1.msra.mxu0 0.0
        %2798 = vmatprep.subr.mxu0 0.0
        %2799 = vmatpush1.msra.mxu0 0.0
        %2800 = vmatprep.subr.mxu0 0.0
        %2801 = vmatpush1.msra.mxu0 0.0
        %2802 = vmatprep.subr.mxu0 0.0
        %2803 = vmatpush1.msra.mxu0 0.0
        %2804 = vmatprep.subr.mxu0 0.0
        %2805 = vmatpush1.msra.mxu0 0.0
        %2806 = vmatprep.subr.mxu0 0.0
        %2807 = vmatpush1.msra.mxu0 0.0
        %2808 = vmatprep.subr.mxu0 0.0
        %2809 = vmatpush1.msra.mxu0 0.0
        %2810 = vmatprep.subr.mxu0 0.0
        %2811 = vmatpush1.msra.mxu0 %v2786
        %2812 = vmatprep.subr.mxu0 0.0
        %2813 = vmatpush1.msra.mxu0 %v2764
        %2814 = vmatprep.subr.mxu0 0.0
        %2815 = vmatpush1.msra.mxu0 %v2762
        %2816 = vmatprep.subr.mxu0 0.0
        %2817 = vmatpush1.msra.mxu0 %v2760
        %2818 = vmatprep.subr.mxu0 0.0
        %2819 = vmatpush1.msra.mxu0 %v2758
        %2820 = vmatprep.subr.mxu0 0.0
        %2821 = vmatpush2.msra.mxu0 0.0
        %2822 = vmatprep.subr.mxu0 0.0
        %2823 = vmatpush2.msra.mxu0 0.0
        %2824 = vmatprep.subr.mxu0 0.0
        %2825 = vmatpush2.msra.mxu0 0.0
        %2826 = vmatprep.subr.mxu0 0.0
        %2827 = vmatpush2.msra.mxu0 0.0
        %2828 = vmatprep.subr.mxu0 0.0
        %2829 = vmatpush2.msra.mxu0 0.0
        %2830 = vmatprep.subr.mxu0 0.0
        %2831 = vmatpush2.msra.mxu0 0.0
        %2832 = vmatprep.subr.mxu0 0.0
        %2833 = vmatpush2.msra.mxu0 0.0
        %2834 = vmatprep.subr.mxu0 0.0
        %2835 = vmatpush2.msra.mxu0 0.0
        %2836 = vmatprep.subr.mxu0 0.0
        %2837 = vmatpush2.msra.mxu0 0.0
        %2838 = vmatprep.subr.mxu0 0.0
        %2839 = vmatpush2.msra.mxu0 0.0
        %2840 = vmatprep.subr.mxu0 0.0
        %2841 = vmatpush2.msra.mxu0 0.0
        %2842 = vmatprep.subr.mxu0 0.0
        %2843 = vmatpush2.msra.mxu0 0.0
        %2844 = vmatprep.subr.mxu0 0.0
        %2845 = vmatpush2.msra.mxu0 0.0
        %2846 = vmatprep.subr.mxu0 0.0
        %2847 = vmatpush2.msra.mxu0 0.0
        %2848 = vmatprep.subr.mxu0 0.0
        %2849 = vmatpush2.msra.mxu0 0.0
        %2850 = vmatprep.subr.mxu0 0.0
        %2851 = vmatpush2.msra.mxu0 0.0
        %2852 = vmatprep.mubr.f32.mxu0 0.0
        %2853 = vmatmul.mubr.f32.gmra.mxu0 %v2772
        %v2854 = vpop.f32.mrf.mxu0
        %v2855 = vadd.f32 0.0, %v2854
        %v2856 = vpop.f32.mrf.mxu0
        %2857 = vmatprep.mubr.f32.mxu0 0.0
        %2858 = vmatmul.mubr.f32.gmra.mxu0 %v2775
        %v2859 = vpop.f32.mrf.mxu0
        %v2860 = vadd.f32 0.0, %v2859
        %v2861 = vpop.f32.mrf.mxu0
        %2862 = vmatprep.mubr.f32.mxu0 0.0
        %2863 = vmatmul.mubr.f32.gmra.mxu0 %v2778
        %v2864 = vpop.f32.mrf.mxu0
        %v2865 = vadd.f32 0.0, %v2864
        %v2866 = vpop.f32.mrf.mxu0
        %2867 = vmatprep.mubr.f32.mxu0 0.0
        %2868 = vmatmul.mubr.f32.gmra.mxu0 %v2781
        %v2869 = vpop.f32.mrf.mxu0
        %v2870 = vadd.f32 0.0, %v2869
        %v2871 = vpop.f32.mrf.mxu0
        %2872 = vmatprep.mubr.f32.mxu0 0.0
        %2873 = vmatmul.mubr.f32.gmra.mxu0 %v2784
        %v2874 = vpop.f32.mrf.mxu0
        %v2875 = vadd.f32 0.0, %v2874
        %v2876 = vpop.f32.mrf.mxu0
        %2877 = vdwg.mxu0
        %2878 = vrot.lane.b32.xlu0 %v2551, 120
        %v2879 = vpop.permute.xlu0 %2878
        %2880 = vrot.lane.b32.xlu0 %v2554, 120
        %v2881 = vpop.permute.xlu0 %2880
        %2882 = vrot.lane.b32.xlu0 %v2559, 120
        %v2883 = vpop.permute.xlu0 %2882
        %2884 = vrot.lane.b32.xlu0 %v2562, 120
        %v2885 = vpop.permute.xlu0 %2884
        %2886 = vrot.lane.b32.xlu0 %v2567, 120
        %v2887 = vpop.permute.xlu0 %2886
        %2888 = vrot.lane.b32.xlu0 %v2551, 88
        %v2889 = vpop.permute.xlu0 %2888
        %2890 = vrot.lane.b32.xlu0 %v2554, 88
        %v2891 = vpop.permute.xlu0 %2890
        %2892 = vrot.lane.b32.xlu0 %v2559, 88
        %v2893 = vpop.permute.xlu0 %2892
        %2894 = vrot.lane.b32.xlu0 %v2562, 88
        %v2895 = vpop.permute.xlu0 %2894
        %2896 = vrot.lane.b32.xlu0 %v2567, 88
        %v2897 = vpop.permute.xlu0 %2896
        %v2898 = vsel %vm674, %v2879, 0
        %v2900 = vsel %vm674, %v2881, 0
        %v2902 = vsel %vm674, %v2883, 0
        %v2904 = vsel %vm674, %v2885, 0
        %v2906 = vsel %vm674, %v2887, 0
        %v2908 = vsel %vm674, %v2889, 0
        %v2910 = vsel %vm674, %v2891, 0
        %v2912 = vsel %vm674, %v2893, 0
        %v2914 = vsel %vm674, %v2895, 0
        %v2916 = vsel %vm674, %v2897, 0
        %2918 = vmatprep.subr.mxu0 0.0
        %2919 = vmatpush1.xpose.msra.mxu0 0.0
        %2920 = vmatprep.subr.mxu0 0.0
        %2921 = vmatpush1.xpose.msra.mxu0 0.0
        %2922 = vmatprep.subr.mxu0 0.0
        %2923 = vmatpush1.xpose.msra.mxu0 0.0
        %2924 = vmatprep.subr.mxu0 0.0
        %2925 = vmatpush1.xpose.msra.mxu0 0.0
        %2926 = vmatprep.subr.mxu0 0.0
        %2927 = vmatpush1.xpose.msra.mxu0 0.0
        %2928 = vmatprep.subr.mxu0 0.0
        %2929 = vmatpush1.xpose.msra.mxu0 0.0
        %2930 = vmatprep.subr.mxu0 0.0
        %2931 = vmatpush1.xpose.msra.mxu0 0.0
        %2932 = vmatprep.subr.mxu0 0.0
        %2933 = vmatpush1.xpose.msra.mxu0 0.0
        %2934 = vmatprep.subr.mxu0 0.0
        %2935 = vmatpush1.xpose.msra.mxu0 0.0
        %2936 = vmatprep.subr.mxu0 0.0
        %2937 = vmatpush1.xpose.msra.mxu0 0.0
        %2938 = vmatprep.subr.mxu0 0.0
        %2939 = vmatpush1.xpose.msra.mxu0 0.0
        %2940 = vmatprep.subr.mxu0 0.0
        %2941 = vmatpush1.xpose.msra.mxu0 %v2916
        %2942 = vmatprep.subr.mxu0 0.0
        %2943 = vmatpush1.xpose.msra.mxu0 %v2914
        %2944 = vmatprep.subr.mxu0 0.0
        %2945 = vmatpush1.xpose.msra.mxu0 %v2912
        %2946 = vmatprep.subr.mxu0 0.0
        %2947 = vmatpush1.xpose.msra.mxu0 %v2910
        %2948 = vmatprep.subr.mxu0 0.0
        %2949 = vmatpush1.xpose.msra.mxu0 %v2908
        %2950 = vmatprep.subr.mxu0 0.0
        %2951 = vmatpush2.xpose.msra.mxu0 0.0
        %2952 = vmatprep.subr.mxu0 0.0
        %2953 = vmatpush2.xpose.msra.mxu0 0.0
        %2954 = vmatprep.subr.mxu0 0.0
        %2955 = vmatpush2.xpose.msra.mxu0 0.0
        %2956 = vmatprep.subr.mxu0 0.0
        %2957 = vmatpush2.xpose.msra.mxu0 0.0
        %2958 = vmatprep.subr.mxu0 0.0
        %2959 = vmatpush2.xpose.msra.mxu0 0.0
        %2960 = vmatprep.subr.mxu0 0.0
        %2961 = vmatpush2.xpose.msra.mxu0 0.0
        %2962 = vmatprep.subr.mxu0 0.0
        %2963 = vmatpush2.xpose.msra.mxu0 0.0
        %2964 = vmatprep.subr.mxu0 0.0
        %2965 = vmatpush2.xpose.msra.mxu0 0.0
        %2966 = vmatprep.subr.mxu0 0.0
        %2967 = vmatpush2.xpose.msra.mxu0 0.0
        %2968 = vmatprep.subr.mxu0 0.0
        %2969 = vmatpush2.xpose.msra.mxu0 0.0
        %2970 = vmatprep.subr.mxu0 0.0
        %2971 = vmatpush2.xpose.msra.mxu0 0.0
        %2972 = vmatprep.subr.mxu0 0.0
        %2973 = vmatpush2.xpose.msra.mxu0 0.0
        %2974 = vmatprep.subr.mxu0 0.0
        %2975 = vmatpush2.xpose.msra.mxu0 0.0
        %2976 = vmatprep.subr.mxu0 0.0
        %2977 = vmatpush2.xpose.msra.mxu0 0.0
        %2978 = vmatprep.subr.mxu0 0.0
        %2979 = vmatpush2.xpose.msra.mxu0 0.0
        %2980 = vmatprep.subr.mxu0 0.0
        %2981 = vmatpush2.xpose.msra.mxu0 0.0
        %2982 = vmatprep.mubr.f32.mxu0 0.0
        %2983 = vmatmul.mubr.f32.gmra.mxu0 %v2898
        %v2984 = vpop.f32.mrf.mxu0
        %v2985 = vadd.f32 0.0, %v2984
        %v2986 = vpop.f32.mrf.mxu0
        %2987 = vmatprep.mubr.f32.mxu0 0.0
        %2988 = vmatmul.mubr.f32.gmra.mxu0 %v2900
        %v2989 = vpop.f32.mrf.mxu0
        %v2990 = vadd.f32 0.0, %v2989
        %v2991 = vpop.f32.mrf.mxu0
        %2992 = vmatprep.mubr.f32.mxu0 0.0
        %2993 = vmatmul.mubr.f32.gmra.mxu0 %v2902
        %v2994 = vpop.f32.mrf.mxu0
        %v2995 = vadd.f32 0.0, %v2994
        %v2996 = vpop.f32.mrf.mxu0
        %2997 = vmatprep.mubr.f32.mxu0 0.0
        %2998 = vmatmul.mubr.f32.gmra.mxu0 %v2904
        %v2999 = vpop.f32.mrf.mxu0
        %v3000 = vadd.f32 0.0, %v2999
        %v3001 = vpop.f32.mrf.mxu0
        %3002 = vmatprep.mubr.f32.mxu0 0.0
        %3003 = vmatmul.mubr.f32.gmra.mxu0 %v2906
        %v3004 = vpop.f32.mrf.mxu0
        %v3005 = vadd.f32 0.0, %v3004
        %v3006 = vpop.f32.mrf.mxu0
        %3007 = vdwg.mxu0
        %v3008 = vmul.f32 %v2985, 0.35355338
        %v3009 = vmul.f32 %v2990, 0.35355338
        %v3010 = vmul.f32 %v2995, 0.35355338
        %v3011 = vmul.f32 %v3000, 0.35355338
        %v3012 = vmul.f32 %v3005, 0.35355338
        %v3013 = vsel %vm790, %v3008, -inf
        %3014 = vmax.xlane.f32.xlu0 %v3013
        %v3015 = vpop.xlane.xlu0 %3014
        %v3016 = vsel %vm790, %v3009, -inf
        %3017 = vmax.xlane.f32.xlu0 %v3016
        %v3018 = vpop.xlane.xlu0 %3017
        %v3019 = vsel %vm790, %v3010, -inf
        %3020 = vmax.xlane.f32.xlu0 %v3019
        %v3021 = vpop.xlane.xlu0 %3020
        %v3022 = vsel %vm790, %v3011, -inf
        %3023 = vmax.xlane.f32.xlu0 %v3022
        %v3024 = vpop.xlane.xlu0 %3023
        %v3025 = vsel %vm803, %v3012, -inf
        %3026 = vmax.xlane.f32.xlu0 %v3025
        %v3027 = vpop.xlane.xlu0 %3026
        %v3028 = vsub.f32 %v3008, %v3015
        %v3029 = vsub.f32 %v3009, %v3018
        %v3030 = vsub.f32 %v3010, %v3021
        %v3031 = vsub.f32 %v3011, %v3024
        %v3032 = vsub.f32 %v3012, %v3027
        %v3033 = vmul.f32 %v3028, 1.442695
        %v3034 = vpow.pop %v3033
        %v3035 = vmul.f32 %v3029, 1.442695
        %v3036 = vpow.pop %v3035
        %v3037 = vmul.f32 %v3030, 1.442695
        %v3038 = vpow.pop %v3037
        %v3039 = vmul.f32 %v3031, 1.442695
        %v3040 = vpow.pop %v3039
        %v3041 = vmul.f32 %v3032, 1.442695
        %v3042 = vpow.pop %v3041
        %v3043 = vsel %vm790, %v3034, 0.0
        %3044 = vadd.xlane.f32.xlu0 %v3043
        %v3045 = vpop.xlane.xlu0 %3044
        %v3046 = vsel %vm790, %v3036, 0.0
        %3047 = vadd.xlane.f32.xlu0 %v3046
        %v3048 = vpop.xlane.xlu0 %3047
        %v3049 = vsel %vm790, %v3038, 0.0
        %3050 = vadd.xlane.f32.xlu0 %v3049
        %v3051 = vpop.xlane.xlu0 %3050
        %v3052 = vsel %vm790, %v3040, 0.0
        %3053 = vadd.xlane.f32.xlu0 %v3052
        %v3054 = vpop.xlane.xlu0 %3053
        %v3055 = vsel %vm803, %v3042, 0.0
        %3056 = vadd.xlane.f32.xlu0 %v3055
        %v3057 = vpop.xlane.xlu0 %3056
        %v3058 = vrcp.pop %v3045
        %v3059 = vrcp.pop %v3048
        %v3060 = vrcp.pop %v3051
        %v3061 = vrcp.pop %v3054
        %v3062 = vrcp.pop %v3057
        %v3063 = vmul.f32 %v3034, %v3058
        %v3064 = vmul.f32 %v3036, %v3059
        %v3065 = vmul.f32 %v3038, %v3060
        %v3066 = vmul.f32 %v3040, %v3061
        %v3067 = vmul.f32 %v3042, %v3062
        %3068 = vrot.lane.b32.xlu0 %v2551, 56
        %v3069 = vpop.permute.xlu0 %3068
        %3070 = vrot.lane.b32.xlu0 %v2554, 56
        %v3071 = vpop.permute.xlu0 %3070
        %3072 = vrot.lane.b32.xlu0 %v2559, 56
        %v3073 = vpop.permute.xlu0 %3072
        %3074 = vrot.lane.b32.xlu0 %v2562, 56
        %v3075 = vpop.permute.xlu0 %3074
        %3076 = vrot.lane.b32.xlu0 %v2567, 56
        %v3077 = vpop.permute.xlu0 %3076
        %v3083 = vsel %vm790, %v3063, 0
        %v3086 = vsel %vm790, %v3064, 0
        %v3089 = vsel %vm790, %v3065, 0
        %v3092 = vsel %vm790, %v3066, 0
        %v3095 = vsel %vm790, %v3067, 0
        %v3097 = vsel %vm876, %v3077, 0
        %3099 = vmatprep.subr.mxu0 0.0
        %3100 = vmatpush1.msra.mxu0 0.0
        %3101 = vmatprep.subr.mxu0 0.0
        %3102 = vmatpush1.msra.mxu0 0.0
        %3103 = vmatprep.subr.mxu0 0.0
        %3104 = vmatpush1.msra.mxu0 0.0
        %3105 = vmatprep.subr.mxu0 0.0
        %3106 = vmatpush1.msra.mxu0 0.0
        %3107 = vmatprep.subr.mxu0 0.0
        %3108 = vmatpush1.msra.mxu0 0.0
        %3109 = vmatprep.subr.mxu0 0.0
        %3110 = vmatpush1.msra.mxu0 0.0
        %3111 = vmatprep.subr.mxu0 0.0
        %3112 = vmatpush1.msra.mxu0 0.0
        %3113 = vmatprep.subr.mxu0 0.0
        %3114 = vmatpush1.msra.mxu0 0.0
        %3115 = vmatprep.subr.mxu0 0.0
        %3116 = vmatpush1.msra.mxu0 0.0
        %3117 = vmatprep.subr.mxu0 0.0
        %3118 = vmatpush1.msra.mxu0 0.0
        %3119 = vmatprep.subr.mxu0 0.0
        %3120 = vmatpush1.msra.mxu0 0.0
        %3121 = vmatprep.subr.mxu0 0.0
        %3122 = vmatpush1.msra.mxu0 %v3097
        %3123 = vmatprep.subr.mxu0 0.0
        %3124 = vmatpush1.msra.mxu0 %v3075
        %3125 = vmatprep.subr.mxu0 0.0
        %3126 = vmatpush1.msra.mxu0 %v3073
        %3127 = vmatprep.subr.mxu0 0.0
        %3128 = vmatpush1.msra.mxu0 %v3071
        %3129 = vmatprep.subr.mxu0 0.0
        %3130 = vmatpush1.msra.mxu0 %v3069
        %3131 = vmatprep.subr.mxu0 0.0
        %3132 = vmatpush2.msra.mxu0 0.0
        %3133 = vmatprep.subr.mxu0 0.0
        %3134 = vmatpush2.msra.mxu0 0.0
        %3135 = vmatprep.subr.mxu0 0.0
        %3136 = vmatpush2.msra.mxu0 0.0
        %3137 = vmatprep.subr.mxu0 0.0
        %3138 = vmatpush2.msra.mxu0 0.0
        %3139 = vmatprep.subr.mxu0 0.0
        %3140 = vmatpush2.msra.mxu0 0.0
        %3141 = vmatprep.subr.mxu0 0.0
        %3142 = vmatpush2.msra.mxu0 0.0
        %3143 = vmatprep.subr.mxu0 0.0
        %3144 = vmatpush2.msra.mxu0 0.0
        %3145 = vmatprep.subr.mxu0 0.0
        %3146 = vmatpush2.msra.mxu0 0.0
        %3147 = vmatprep.subr.mxu0 0.0
        %3148 = vmatpush2.msra.mxu0 0.0
        %3149 = vmatprep.subr.mxu0 0.0
        %3150 = vmatpush2.msra.mxu0 0.0
        %3151 = vmatprep.subr.mxu0 0.0
        %3152 = vmatpush2.msra.mxu0 0.0
        %3153 = vmatprep.subr.mxu0 0.0
        %3154 = vmatpush2.msra.mxu0 0.0
        %3155 = vmatprep.subr.mxu0 0.0
        %3156 = vmatpush2.msra.mxu0 0.0
        %3157 = vmatprep.subr.mxu0 0.0
        %3158 = vmatpush2.msra.mxu0 0.0
        %3159 = vmatprep.subr.mxu0 0.0
        %3160 = vmatpush2.msra.mxu0 0.0
        %3161 = vmatprep.subr.mxu0 0.0
        %3162 = vmatpush2.msra.mxu0 0.0
        %3163 = vmatprep.mubr.f32.mxu0 0.0
        %3164 = vmatmul.mubr.f32.gmra.mxu0 %v3083
        %v3165 = vpop.f32.mrf.mxu0
        %v3166 = vadd.f32 0.0, %v3165
        %v3167 = vpop.f32.mrf.mxu0
        %3168 = vmatprep.mubr.f32.mxu0 0.0
        %3169 = vmatmul.mubr.f32.gmra.mxu0 %v3086
        %v3170 = vpop.f32.mrf.mxu0
        %v3171 = vadd.f32 0.0, %v3170
        %v3172 = vpop.f32.mrf.mxu0
        %3173 = vmatprep.mubr.f32.mxu0 0.0
        %3174 = vmatmul.mubr.f32.gmra.mxu0 %v3089
        %v3175 = vpop.f32.mrf.mxu0
        %v3176 = vadd.f32 0.0, %v3175
        %v3177 = vpop.f32.mrf.mxu0
        %3178 = vmatprep.mubr.f32.mxu0 0.0
        %3179 = vmatmul.mubr.f32.gmra.mxu0 %v3092
        %v3180 = vpop.f32.mrf.mxu0
        %v3181 = vadd.f32 0.0, %v3180
        %v3182 = vpop.f32.mrf.mxu0
        %3183 = vmatprep.mubr.f32.mxu0 0.0
        %3184 = vmatmul.mubr.f32.gmra.mxu0 %v3095
        %v3185 = vpop.f32.mrf.mxu0
        %v3186 = vadd.f32 0.0, %v3185
        %v3187 = vpop.f32.mrf.mxu0
        %3188 = vdwg.mxu0
        %3189 = vrot.lane.b32.xlu0 %v2551, 112
        %v3190 = vpop.permute.xlu0 %3189
        %3191 = vrot.lane.b32.xlu0 %v2554, 112
        %v3192 = vpop.permute.xlu0 %3191
        %3193 = vrot.lane.b32.xlu0 %v2559, 112
        %v3194 = vpop.permute.xlu0 %3193
        %3195 = vrot.lane.b32.xlu0 %v2562, 112
        %v3196 = vpop.permute.xlu0 %3195
        %3197 = vrot.lane.b32.xlu0 %v2567, 112
        %v3198 = vpop.permute.xlu0 %3197
        %3199 = vrot.lane.b32.xlu0 %v2551, 80
        %v3200 = vpop.permute.xlu0 %3199
        %3201 = vrot.lane.b32.xlu0 %v2554, 80
        %v3202 = vpop.permute.xlu0 %3201
        %3203 = vrot.lane.b32.xlu0 %v2559, 80
        %v3204 = vpop.permute.xlu0 %3203
        %3205 = vrot.lane.b32.xlu0 %v2562, 80
        %v3206 = vpop.permute.xlu0 %3205
        %3207 = vrot.lane.b32.xlu0 %v2567, 80
        %v3208 = vpop.permute.xlu0 %3207
        %v3209 = vsel %vm674, %v3190, 0
        %v3211 = vsel %vm674, %v3192, 0
        %v3213 = vsel %vm674, %v3194, 0
        %v3215 = vsel %vm674, %v3196, 0
        %v3217 = vsel %vm674, %v3198, 0
        %v3219 = vsel %vm674, %v3200, 0
        %v3221 = vsel %vm674, %v3202, 0
        %v3223 = vsel %vm674, %v3204, 0
        %v3225 = vsel %vm674, %v3206, 0
        %v3227 = vsel %vm674, %v3208, 0
        %3229 = vmatprep.subr.mxu0 0.0
        %3230 = vmatpush1.xpose.msra.mxu0 0.0
        %3231 = vmatprep.subr.mxu0 0.0
        %3232 = vmatpush1.xpose.msra.mxu0 0.0
        %3233 = vmatprep.subr.mxu0 0.0
        %3234 = vmatpush1.xpose.msra.mxu0 0.0
        %3235 = vmatprep.subr.mxu0 0.0
        %3236 = vmatpush1.xpose.msra.mxu0 0.0
        %3237 = vmatprep.subr.mxu0 0.0
        %3238 = vmatpush1.xpose.msra.mxu0 0.0
        %3239 = vmatprep.subr.mxu0 0.0
        %3240 = vmatpush1.xpose.msra.mxu0 0.0
        %3241 = vmatprep.subr.mxu0 0.0
        %3242 = vmatpush1.xpose.msra.mxu0 0.0
        %3243 = vmatprep.subr.mxu0 0.0
        %3244 = vmatpush1.xpose.msra.mxu0 0.0
        %3245 = vmatprep.subr.mxu0 0.0
        %3246 = vmatpush1.xpose.msra.mxu0 0.0
        %3247 = vmatprep.subr.mxu0 0.0
        %3248 = vmatpush1.xpose.msra.mxu0 0.0
        %3249 = vmatprep.subr.mxu0 0.0
        %3250 = vmatpush1.xpose.msra.mxu0 0.0
        %3251 = vmatprep.subr.mxu0 0.0
        %3252 = vmatpush1.xpose.msra.mxu0 %v3227
        %3253 = vmatprep.subr.mxu0 0.0
        %3254 = vmatpush1.xpose.msra.mxu0 %v3225
        %3255 = vmatprep.subr.mxu0 0.0
        %3256 = vmatpush1.xpose.msra.mxu0 %v3223
        %3257 = vmatprep.subr.mxu0 0.0
        %3258 = vmatpush1.xpose.msra.mxu0 %v3221
        %3259 = vmatprep.subr.mxu0 0.0
        %3260 = vmatpush1.xpose.msra.mxu0 %v3219
        %3261 = vmatprep.subr.mxu0 0.0
        %3262 = vmatpush2.xpose.msra.mxu0 0.0
        %3263 = vmatprep.subr.mxu0 0.0
        %3264 = vmatpush2.xpose.msra.mxu0 0.0
        %3265 = vmatprep.subr.mxu0 0.0
        %3266 = vmatpush2.xpose.msra.mxu0 0.0
        %3267 = vmatprep.subr.mxu0 0.0
        %3268 = vmatpush2.xpose.msra.mxu0 0.0
        %3269 = vmatprep.subr.mxu0 0.0
        %3270 = vmatpush2.xpose.msra.mxu0 0.0
        %3271 = vmatprep.subr.mxu0 0.0
        %3272 = vmatpush2.xpose.msra.mxu0 0.0
        %3273 = vmatprep.subr.mxu0 0.0
        %3274 = vmatpush2.xpose.msra.mxu0 0.0
        %3275 = vmatprep.subr.mxu0 0.0
        %3276 = vmatpush2.xpose.msra.mxu0 0.0
        %3277 = vmatprep.subr.mxu0 0.0
        %3278 = vmatpush2.xpose.msra.mxu0 0.0
        %3279 = vmatprep.subr.mxu0 0.0
        %3280 = vmatpush2.xpose.msra.mxu0 0.0
        %3281 = vmatprep.subr.mxu0 0.0
        %3282 = vmatpush2.xpose.msra.mxu0 0.0
        %3283 = vmatprep.subr.mxu0 0.0
        %3284 = vmatpush2.xpose.msra.mxu0 0.0
        %3285 = vmatprep.subr.mxu0 0.0
        %3286 = vmatpush2.xpose.msra.mxu0 0.0
        %3287 = vmatprep.subr.mxu0 0.0
        %3288 = vmatpush2.xpose.msra.mxu0 0.0
        %3289 = vmatprep.subr.mxu0 0.0
        %3290 = vmatpush2.xpose.msra.mxu0 0.0
        %3291 = vmatprep.subr.mxu0 0.0
        %3292 = vmatpush2.xpose.msra.mxu0 0.0
        %3293 = vmatprep.mubr.f32.mxu0 0.0
        %3294 = vmatmul.mubr.f32.gmra.mxu0 %v3209
        %v3295 = vpop.f32.mrf.mxu0
        %v3296 = vadd.f32 0.0, %v3295
        %v3297 = vpop.f32.mrf.mxu0
        %3298 = vmatprep.mubr.f32.mxu0 0.0
        %3299 = vmatmul.mubr.f32.gmra.mxu0 %v3211
        %v3300 = vpop.f32.mrf.mxu0
        %v3301 = vadd.f32 0.0, %v3300
        %v3302 = vpop.f32.mrf.mxu0
        %3303 = vmatprep.mubr.f32.mxu0 0.0
        %3304 = vmatmul.mubr.f32.gmra.mxu0 %v3213
        %v3305 = vpop.f32.mrf.mxu0
        %v3306 = vadd.f32 0.0, %v3305
        %v3307 = vpop.f32.mrf.mxu0
        %3308 = vmatprep.mubr.f32.mxu0 0.0
        %3309 = vmatmul.mubr.f32.gmra.mxu0 %v3215
        %v3310 = vpop.f32.mrf.mxu0
        %v3311 = vadd.f32 0.0, %v3310
        %v3312 = vpop.f32.mrf.mxu0
        %3313 = vmatprep.mubr.f32.mxu0 0.0
        %3314 = vmatmul.mubr.f32.gmra.mxu0 %v3217
        %v3315 = vpop.f32.mrf.mxu0
        %v3316 = vadd.f32 0.0, %v3315
        %v3317 = vpop.f32.mrf.mxu0
        %3318 = vdwg.mxu0
        %v3319 = vmul.f32 %v3296, 0.35355338
        %v3320 = vmul.f32 %v3301, 0.35355338
        %v3321 = vmul.f32 %v3306, 0.35355338
        %v3322 = vmul.f32 %v3311, 0.35355338
        %v3323 = vmul.f32 %v3316, 0.35355338
        %v3324 = vsel %vm790, %v3319, -inf
        %3325 = vmax.xlane.f32.xlu0 %v3324
        %v3326 = vpop.xlane.xlu0 %3325
        %v3327 = vsel %vm790, %v3320, -inf
        %3328 = vmax.xlane.f32.xlu0 %v3327
        %v3329 = vpop.xlane.xlu0 %3328
        %v3330 = vsel %vm790, %v3321, -inf
        %3331 = vmax.xlane.f32.xlu0 %v3330
        %v3332 = vpop.xlane.xlu0 %3331
        %v3333 = vsel %vm790, %v3322, -inf
        %3334 = vmax.xlane.f32.xlu0 %v3333
        %v3335 = vpop.xlane.xlu0 %3334
        %v3336 = vsel %vm803, %v3323, -inf
        %3337 = vmax.xlane.f32.xlu0 %v3336
        %v3338 = vpop.xlane.xlu0 %3337
        %v3339 = vsub.f32 %v3319, %v3326
        %v3340 = vsub.f32 %v3320, %v3329
        %v3341 = vsub.f32 %v3321, %v3332
        %v3342 = vsub.f32 %v3322, %v3335
        %v3343 = vsub.f32 %v3323, %v3338
        %v3344 = vmul.f32 %v3339, 1.442695
        %v3345 = vpow.pop %v3344
        %v3346 = vmul.f32 %v3340, 1.442695
        %v3347 = vpow.pop %v3346
        %v3348 = vmul.f32 %v3341, 1.442695
        %v3349 = vpow.pop %v3348
        %v3350 = vmul.f32 %v3342, 1.442695
        %v3351 = vpow.pop %v3350
        %v3352 = vmul.f32 %v3343, 1.442695
        %v3353 = vpow.pop %v3352
        %v3354 = vsel %vm790, %v3345, 0.0
        %3355 = vadd.xlane.f32.xlu0 %v3354
        %v3356 = vpop.xlane.xlu0 %3355
        %v3357 = vsel %vm790, %v3347, 0.0
        %3358 = vadd.xlane.f32.xlu0 %v3357
        %v3359 = vpop.xlane.xlu0 %3358
        %v3360 = vsel %vm790, %v3349, 0.0
        %3361 = vadd.xlane.f32.xlu0 %v3360
        %v3362 = vpop.xlane.xlu0 %3361
        %v3363 = vsel %vm790, %v3351, 0.0
        %3364 = vadd.xlane.f32.xlu0 %v3363
        %v3365 = vpop.xlane.xlu0 %3364
        %v3366 = vsel %vm803, %v3353, 0.0
        %3367 = vadd.xlane.f32.xlu0 %v3366
        %v3368 = vpop.xlane.xlu0 %3367
        %v3369 = vrcp.pop %v3356
        %v3370 = vrcp.pop %v3359
        %v3371 = vrcp.pop %v3362
        %v3372 = vrcp.pop %v3365
        %v3373 = vrcp.pop %v3368
        %v3374 = vmul.f32 %v3345, %v3369
        %v3375 = vmul.f32 %v3347, %v3370
        %v3376 = vmul.f32 %v3349, %v3371
        %v3377 = vmul.f32 %v3351, %v3372
        %v3378 = vmul.f32 %v3353, %v3373
        %3379 = vrot.lane.b32.xlu0 %v2551, 48
        %v3380 = vpop.permute.xlu0 %3379
        %3381 = vrot.lane.b32.xlu0 %v2554, 48
        %v3382 = vpop.permute.xlu0 %3381
        %3383 = vrot.lane.b32.xlu0 %v2559, 48
        %v3384 = vpop.permute.xlu0 %3383
        %3385 = vrot.lane.b32.xlu0 %v2562, 48
        %v3386 = vpop.permute.xlu0 %3385
        %3387 = vrot.lane.b32.xlu0 %v2567, 48
        %v3388 = vpop.permute.xlu0 %3387
        %v3394 = vsel %vm790, %v3374, 0
        %v3397 = vsel %vm790, %v3375, 0
        %v3400 = vsel %vm790, %v3376, 0
        %v3403 = vsel %vm790, %v3377, 0
        %v3406 = vsel %vm790, %v3378, 0
        %v3408 = vsel %vm876, %v3388, 0
        %3410 = vmatprep.subr.mxu0 0.0
        %3411 = vmatpush1.msra.mxu0 0.0
        %3412 = vmatprep.subr.mxu0 0.0
        %3413 = vmatpush1.msra.mxu0 0.0
        %3414 = vmatprep.subr.mxu0 0.0
        %3415 = vmatpush1.msra.mxu0 0.0
        %3416 = vmatprep.subr.mxu0 0.0
        %3417 = vmatpush1.msra.mxu0 0.0
        %3418 = vmatprep.subr.mxu0 0.0
        %3419 = vmatpush1.msra.mxu0 0.0
        %3420 = vmatprep.subr.mxu0 0.0
        %3421 = vmatpush1.msra.mxu0 0.0
        %3422 = vmatprep.subr.mxu0 0.0
        %3423 = vmatpush1.msra.mxu0 0.0
        %3424 = vmatprep.subr.mxu0 0.0
        %3425 = vmatpush1.msra.mxu0 0.0
        %3426 = vmatprep.subr.mxu0 0.0
        %3427 = vmatpush1.msra.mxu0 0.0
        %3428 = vmatprep.subr.mxu0 0.0
        %3429 = vmatpush1.msra.mxu0 0.0
        %3430 = vmatprep.subr.mxu0 0.0
        %3431 = vmatpush1.msra.mxu0 0.0
        %3432 = vmatprep.subr.mxu0 0.0
        %3433 = vmatpush1.msra.mxu0 %v3408
        %3434 = vmatprep.subr.mxu0 0.0
        %3435 = vmatpush1.msra.mxu0 %v3386
        %3436 = vmatprep.subr.mxu0 0.0
        %3437 = vmatpush1.msra.mxu0 %v3384
        %3438 = vmatprep.subr.mxu0 0.0
        %3439 = vmatpush1.msra.mxu0 %v3382
        %3440 = vmatprep.subr.mxu0 0.0
        %3441 = vmatpush1.msra.mxu0 %v3380
        %3442 = vmatprep.subr.mxu0 0.0
        %3443 = vmatpush2.msra.mxu0 0.0
        %3444 = vmatprep.subr.mxu0 0.0
        %3445 = vmatpush2.msra.mxu0 0.0
        %3446 = vmatprep.subr.mxu0 0.0
        %3447 = vmatpush2.msra.mxu0 0.0
        %3448 = vmatprep.subr.mxu0 0.0
        %3449 = vmatpush2.msra.mxu0 0.0
        %3450 = vmatprep.subr.mxu0 0.0
        %3451 = vmatpush2.msra.mxu0 0.0
        %3452 = vmatprep.subr.mxu0 0.0
        %3453 = vmatpush2.msra.mxu0 0.0
        %3454 = vmatprep.subr.mxu0 0.0
        %3455 = vmatpush2.msra.mxu0 0.0
        %3456 = vmatprep.subr.mxu0 0.0
        %3457 = vmatpush2.msra.mxu0 0.0
        %3458 = vmatprep.subr.mxu0 0.0
        %3459 = vmatpush2.msra.mxu0 0.0
        %3460 = vmatprep.subr.mxu0 0.0
        %3461 = vmatpush2.msra.mxu0 0.0
        %3462 = vmatprep.subr.mxu0 0.0
        %3463 = vmatpush2.msra.mxu0 0.0
        %3464 = vmatprep.subr.mxu0 0.0
        %3465 = vmatpush2.msra.mxu0 0.0
        %3466 = vmatprep.subr.mxu0 0.0
        %3467 = vmatpush2.msra.mxu0 0.0
        %3468 = vmatprep.subr.mxu0 0.0
        %3469 = vmatpush2.msra.mxu0 0.0
        %3470 = vmatprep.subr.mxu0 0.0
        %3471 = vmatpush2.msra.mxu0 0.0
        %3472 = vmatprep.subr.mxu0 0.0
        %3473 = vmatpush2.msra.mxu0 0.0
        %3474 = vmatprep.mubr.f32.mxu0 0.0
        %3475 = vmatmul.mubr.f32.gmra.mxu0 %v3394
        %v3476 = vpop.f32.mrf.mxu0
        %v3477 = vadd.f32 0.0, %v3476
        %v3478 = vpop.f32.mrf.mxu0
        %3479 = vmatprep.mubr.f32.mxu0 0.0
        %3480 = vmatmul.mubr.f32.gmra.mxu0 %v3397
        %v3481 = vpop.f32.mrf.mxu0
        %v3482 = vadd.f32 0.0, %v3481
        %v3483 = vpop.f32.mrf.mxu0
        %3484 = vmatprep.mubr.f32.mxu0 0.0
        %3485 = vmatmul.mubr.f32.gmra.mxu0 %v3400
        %v3486 = vpop.f32.mrf.mxu0
        %v3487 = vadd.f32 0.0, %v3486
        %v3488 = vpop.f32.mrf.mxu0
        %3489 = vmatprep.mubr.f32.mxu0 0.0
        %3490 = vmatmul.mubr.f32.gmra.mxu0 %v3403
        %v3491 = vpop.f32.mrf.mxu0
        %v3492 = vadd.f32 0.0, %v3491
        %v3493 = vpop.f32.mrf.mxu0
        %3494 = vmatprep.mubr.f32.mxu0 0.0
        %3495 = vmatmul.mubr.f32.gmra.mxu0 %v3406
        %v3496 = vpop.f32.mrf.mxu0
        %v3497 = vadd.f32 0.0, %v3496
        %v3498 = vpop.f32.mrf.mxu0
        %3499 = vdwg.mxu0
        %3500 = vrot.lane.b32.xlu0 %v2551, 104
        %v3501 = vpop.permute.xlu0 %3500
        %3502 = vrot.lane.b32.xlu0 %v2554, 104
        %v3503 = vpop.permute.xlu0 %3502
        %3504 = vrot.lane.b32.xlu0 %v2559, 104
        %v3505 = vpop.permute.xlu0 %3504
        %3506 = vrot.lane.b32.xlu0 %v2562, 104
        %v3507 = vpop.permute.xlu0 %3506
        %3508 = vrot.lane.b32.xlu0 %v2567, 104
        %v3509 = vpop.permute.xlu0 %3508
        %3510 = vrot.lane.b32.xlu0 %v2551, 72
        %v3511 = vpop.permute.xlu0 %3510
        %3512 = vrot.lane.b32.xlu0 %v2554, 72
        %v3513 = vpop.permute.xlu0 %3512
        %3514 = vrot.lane.b32.xlu0 %v2559, 72
        %v3515 = vpop.permute.xlu0 %3514
        %3516 = vrot.lane.b32.xlu0 %v2562, 72
        %v3517 = vpop.permute.xlu0 %3516
        %3518 = vrot.lane.b32.xlu0 %v2567, 72
        %v3519 = vpop.permute.xlu0 %3518
        %v3520 = vsel %vm674, %v3501, 0
        %v3522 = vsel %vm674, %v3503, 0
        %v3524 = vsel %vm674, %v3505, 0
        %v3526 = vsel %vm674, %v3507, 0
        %v3528 = vsel %vm674, %v3509, 0
        %v3530 = vsel %vm674, %v3511, 0
        %v3532 = vsel %vm674, %v3513, 0
        %v3534 = vsel %vm674, %v3515, 0
        %v3536 = vsel %vm674, %v3517, 0
        %v3538 = vsel %vm674, %v3519, 0
        %3540 = vmatprep.subr.mxu0 0.0
        %3541 = vmatpush1.xpose.msra.mxu0 0.0
        %3542 = vmatprep.subr.mxu0 0.0
        %3543 = vmatpush1.xpose.msra.mxu0 0.0
        %3544 = vmatprep.subr.mxu0 0.0
        %3545 = vmatpush1.xpose.msra.mxu0 0.0
        %3546 = vmatprep.subr.mxu0 0.0
        %3547 = vmatpush1.xpose.msra.mxu0 0.0
        %3548 = vmatprep.subr.mxu0 0.0
        %3549 = vmatpush1.xpose.msra.mxu0 0.0
        %3550 = vmatprep.subr.mxu0 0.0
        %3551 = vmatpush1.xpose.msra.mxu0 0.0
        %3552 = vmatprep.subr.mxu0 0.0
        %3553 = vmatpush1.xpose.msra.mxu0 0.0
        %3554 = vmatprep.subr.mxu0 0.0
        %3555 = vmatpush1.xpose.msra.mxu0 0.0
        %3556 = vmatprep.subr.mxu0 0.0
        %3557 = vmatpush1.xpose.msra.mxu0 0.0
        %3558 = vmatprep.subr.mxu0 0.0
        %3559 = vmatpush1.xpose.msra.mxu0 0.0
        %3560 = vmatprep.subr.mxu0 0.0
        %3561 = vmatpush1.xpose.msra.mxu0 0.0
        %3562 = vmatprep.subr.mxu0 0.0
        %3563 = vmatpush1.xpose.msra.mxu0 %v3538
        %3564 = vmatprep.subr.mxu0 0.0
        %3565 = vmatpush1.xpose.msra.mxu0 %v3536
        %3566 = vmatprep.subr.mxu0 0.0
        %3567 = vmatpush1.xpose.msra.mxu0 %v3534
        %3568 = vmatprep.subr.mxu0 0.0
        %3569 = vmatpush1.xpose.msra.mxu0 %v3532
        %3570 = vmatprep.subr.mxu0 0.0
        %3571 = vmatpush1.xpose.msra.mxu0 %v3530
        %3572 = vmatprep.subr.mxu0 0.0
        %3573 = vmatpush2.xpose.msra.mxu0 0.0
        %3574 = vmatprep.subr.mxu0 0.0
        %3575 = vmatpush2.xpose.msra.mxu0 0.0
        %3576 = vmatprep.subr.mxu0 0.0
        %3577 = vmatpush2.xpose.msra.mxu0 0.0
        %3578 = vmatprep.subr.mxu0 0.0
        %3579 = vmatpush2.xpose.msra.mxu0 0.0
        %3580 = vmatprep.subr.mxu0 0.0
        %3581 = vmatpush2.xpose.msra.mxu0 0.0
        %3582 = vmatprep.subr.mxu0 0.0
        %3583 = vmatpush2.xpose.msra.mxu0 0.0
        %3584 = vmatprep.subr.mxu0 0.0
        %3585 = vmatpush2.xpose.msra.mxu0 0.0
        %3586 = vmatprep.subr.mxu0 0.0
        %3587 = vmatpush2.xpose.msra.mxu0 0.0
        %3588 = vmatprep.subr.mxu0 0.0
        %3589 = vmatpush2.xpose.msra.mxu0 0.0
        %3590 = vmatprep.subr.mxu0 0.0
        %3591 = vmatpush2.xpose.msra.mxu0 0.0
        %3592 = vmatprep.subr.mxu0 0.0
        %3593 = vmatpush2.xpose.msra.mxu0 0.0
        %3594 = vmatprep.subr.mxu0 0.0
        %3595 = vmatpush2.xpose.msra.mxu0 0.0
        %3596 = vmatprep.subr.mxu0 0.0
        %3597 = vmatpush2.xpose.msra.mxu0 0.0
        %3598 = vmatprep.subr.mxu0 0.0
        %3599 = vmatpush2.xpose.msra.mxu0 0.0
        %3600 = vmatprep.subr.mxu0 0.0
        %3601 = vmatpush2.xpose.msra.mxu0 0.0
        %3602 = vmatprep.subr.mxu0 0.0
        %3603 = vmatpush2.xpose.msra.mxu0 0.0
        %3604 = vmatprep.mubr.f32.mxu0 0.0
        %3605 = vmatmul.mubr.f32.gmra.mxu0 %v3520
        %v3606 = vpop.f32.mrf.mxu0
        %v3607 = vadd.f32 0.0, %v3606
        %v3608 = vpop.f32.mrf.mxu0
        %3609 = vmatprep.mubr.f32.mxu0 0.0
        %3610 = vmatmul.mubr.f32.gmra.mxu0 %v3522
        %v3611 = vpop.f32.mrf.mxu0
        %v3612 = vadd.f32 0.0, %v3611
        %v3613 = vpop.f32.mrf.mxu0
        %3614 = vmatprep.mubr.f32.mxu0 0.0
        %3615 = vmatmul.mubr.f32.gmra.mxu0 %v3524
        %v3616 = vpop.f32.mrf.mxu0
        %v3617 = vadd.f32 0.0, %v3616
        %v3618 = vpop.f32.mrf.mxu0
        %3619 = vmatprep.mubr.f32.mxu0 0.0
        %3620 = vmatmul.mubr.f32.gmra.mxu0 %v3526
        %v3621 = vpop.f32.mrf.mxu0
        %v3622 = vadd.f32 0.0, %v3621
        %v3623 = vpop.f32.mrf.mxu0
        %3624 = vmatprep.mubr.f32.mxu0 0.0
        %3625 = vmatmul.mubr.f32.gmra.mxu0 %v3528
        %v3626 = vpop.f32.mrf.mxu0
        %v3627 = vadd.f32 0.0, %v3626
        %v3628 = vpop.f32.mrf.mxu0
        %3629 = vdwg.mxu0
        %v3630 = vmul.f32 %v3607, 0.35355338
        %v3631 = vmul.f32 %v3612, 0.35355338
        %v3632 = vmul.f32 %v3617, 0.35355338
        %v3633 = vmul.f32 %v3622, 0.35355338
        %v3634 = vmul.f32 %v3627, 0.35355338
        %v3635 = vsel %vm790, %v3630, -inf
        %3636 = vmax.xlane.f32.xlu0 %v3635
        %v3637 = vpop.xlane.xlu0 %3636
        %v3638 = vsel %vm790, %v3631, -inf
        %3639 = vmax.xlane.f32.xlu0 %v3638
        %v3640 = vpop.xlane.xlu0 %3639
        %v3641 = vsel %vm790, %v3632, -inf
        %3642 = vmax.xlane.f32.xlu0 %v3641
        %v3643 = vpop.xlane.xlu0 %3642
        %v3644 = vsel %vm790, %v3633, -inf
        %3645 = vmax.xlane.f32.xlu0 %v3644
        %v3646 = vpop.xlane.xlu0 %3645
        %v3647 = vsel %vm803, %v3634, -inf
        %3648 = vmax.xlane.f32.xlu0 %v3647
        %v3649 = vpop.xlane.xlu0 %3648
        %v3650 = vsub.f32 %v3630, %v3637
        %v3651 = vsub.f32 %v3631, %v3640
        %v3652 = vsub.f32 %v3632, %v3643
        %v3653 = vsub.f32 %v3633, %v3646
        %v3654 = vsub.f32 %v3634, %v3649
        %v3655 = vmul.f32 %v3650, 1.442695
        %v3656 = vpow.pop %v3655
        %v3657 = vmul.f32 %v3651, 1.442695
        %v3658 = vpow.pop %v3657
        %v3659 = vmul.f32 %v3652, 1.442695
        %v3660 = vpow.pop %v3659
        %v3661 = vmul.f32 %v3653, 1.442695
        %v3662 = vpow.pop %v3661
        %v3663 = vmul.f32 %v3654, 1.442695
        %v3664 = vpow.pop %v3663
        %v3665 = vsel %vm790, %v3656, 0.0
        %3666 = vadd.xlane.f32.xlu0 %v3665
        %v3667 = vpop.xlane.xlu0 %3666
        %v3668 = vsel %vm790, %v3658, 0.0
        %3669 = vadd.xlane.f32.xlu0 %v3668
        %v3670 = vpop.xlane.xlu0 %3669
        %v3671 = vsel %vm790, %v3660, 0.0
        %3672 = vadd.xlane.f32.xlu0 %v3671
        %v3673 = vpop.xlane.xlu0 %3672
        %v3674 = vsel %vm790, %v3662, 0.0
        %3675 = vadd.xlane.f32.xlu0 %v3674
        %v3676 = vpop.xlane.xlu0 %3675
        %v3677 = vsel %vm803, %v3664, 0.0
        %3678 = vadd.xlane.f32.xlu0 %v3677
        %v3679 = vpop.xlane.xlu0 %3678
        %v3680 = vrcp.pop %v3667
        %v3681 = vrcp.pop %v3670
        %v3682 = vrcp.pop %v3673
        %v3683 = vrcp.pop %v3676
        %v3684 = vrcp.pop %v3679
        %v3685 = vmul.f32 %v3656, %v3680
        %v3686 = vmul.f32 %v3658, %v3681
        %v3687 = vmul.f32 %v3660, %v3682
        %v3688 = vmul.f32 %v3662, %v3683
        %v3689 = vmul.f32 %v3664, %v3684
        %3690 = vrot.lane.b32.xlu0 %v2551, 40
        %v3691 = vpop.permute.xlu0 %3690
        %3692 = vrot.lane.b32.xlu0 %v2554, 40
        %v3693 = vpop.permute.xlu0 %3692
        %3694 = vrot.lane.b32.xlu0 %v2559, 40
        %v3695 = vpop.permute.xlu0 %3694
        %3696 = vrot.lane.b32.xlu0 %v2562, 40
        %v3697 = vpop.permute.xlu0 %3696
        %3698 = vrot.lane.b32.xlu0 %v2567, 40
        %v3699 = vpop.permute.xlu0 %3698
        %v3705 = vsel %vm790, %v3685, 0
        %v3708 = vsel %vm790, %v3686, 0
        %v3711 = vsel %vm790, %v3687, 0
        %v3714 = vsel %vm790, %v3688, 0
        %v3717 = vsel %vm790, %v3689, 0
        %v3719 = vsel %vm876, %v3699, 0
        %3721 = vmatprep.subr.mxu0 0.0
        %3722 = vmatpush1.msra.mxu0 0.0
        %3723 = vmatprep.subr.mxu0 0.0
        %3724 = vmatpush1.msra.mxu0 0.0
        %3725 = vmatprep.subr.mxu0 0.0
        %3726 = vmatpush1.msra.mxu0 0.0
        %3727 = vmatprep.subr.mxu0 0.0
        %3728 = vmatpush1.msra.mxu0 0.0
        %3729 = vmatprep.subr.mxu0 0.0
        %3730 = vmatpush1.msra.mxu0 0.0
        %3731 = vmatprep.subr.mxu0 0.0
        %3732 = vmatpush1.msra.mxu0 0.0
        %3733 = vmatprep.subr.mxu0 0.0
        %3734 = vmatpush1.msra.mxu0 0.0
        %3735 = vmatprep.subr.mxu0 0.0
        %3736 = vmatpush1.msra.mxu0 0.0
        %3737 = vmatprep.subr.mxu0 0.0
        %3738 = vmatpush1.msra.mxu0 0.0
        %3739 = vmatprep.subr.mxu0 0.0
        %3740 = vmatpush1.msra.mxu0 0.0
        %3741 = vmatprep.subr.mxu0 0.0
        %3742 = vmatpush1.msra.mxu0 0.0
        %3743 = vmatprep.subr.mxu0 0.0
        %3744 = vmatpush1.msra.mxu0 %v3719
        %3745 = vmatprep.subr.mxu0 0.0
        %3746 = vmatpush1.msra.mxu0 %v3697
        %3747 = vmatprep.subr.mxu0 0.0
        %3748 = vmatpush1.msra.mxu0 %v3695
        %3749 = vmatprep.subr.mxu0 0.0
        %3750 = vmatpush1.msra.mxu0 %v3693
        %3751 = vmatprep.subr.mxu0 0.0
        %3752 = vmatpush1.msra.mxu0 %v3691
        %3753 = vmatprep.subr.mxu0 0.0
        %3754 = vmatpush2.msra.mxu0 0.0
        %3755 = vmatprep.subr.mxu0 0.0
        %3756 = vmatpush2.msra.mxu0 0.0
        %3757 = vmatprep.subr.mxu0 0.0
        %3758 = vmatpush2.msra.mxu0 0.0
        %3759 = vmatprep.subr.mxu0 0.0
        %3760 = vmatpush2.msra.mxu0 0.0
        %3761 = vmatprep.subr.mxu0 0.0
        %3762 = vmatpush2.msra.mxu0 0.0
        %3763 = vmatprep.subr.mxu0 0.0
        %3764 = vmatpush2.msra.mxu0 0.0
        %3765 = vmatprep.subr.mxu0 0.0
        %3766 = vmatpush2.msra.mxu0 0.0
        %3767 = vmatprep.subr.mxu0 0.0
        %3768 = vmatpush2.msra.mxu0 0.0
        %3769 = vmatprep.subr.mxu0 0.0
        %3770 = vmatpush2.msra.mxu0 0.0
        %3771 = vmatprep.subr.mxu0 0.0
        %3772 = vmatpush2.msra.mxu0 0.0
        %3773 = vmatprep.subr.mxu0 0.0
        %3774 = vmatpush2.msra.mxu0 0.0
        %3775 = vmatprep.subr.mxu0 0.0
        %3776 = vmatpush2.msra.mxu0 0.0
        %3777 = vmatprep.subr.mxu0 0.0
        %3778 = vmatpush2.msra.mxu0 0.0
        %3779 = vmatprep.subr.mxu0 0.0
        %3780 = vmatpush2.msra.mxu0 0.0
        %3781 = vmatprep.subr.mxu0 0.0
        %3782 = vmatpush2.msra.mxu0 0.0
        %3783 = vmatprep.subr.mxu0 0.0
        %3784 = vmatpush2.msra.mxu0 0.0
        %3785 = vmatprep.mubr.f32.mxu0 0.0
        %3786 = vmatmul.mubr.f32.gmra.mxu0 %v3705
        %v3787 = vpop.f32.mrf.mxu0
        %v3788 = vadd.f32 0.0, %v3787
        %v3789 = vpop.f32.mrf.mxu0
        %3790 = vmatprep.mubr.f32.mxu0 0.0
        %3791 = vmatmul.mubr.f32.gmra.mxu0 %v3708
        %v3792 = vpop.f32.mrf.mxu0
        %v3793 = vadd.f32 0.0, %v3792
        %v3794 = vpop.f32.mrf.mxu0
        %3795 = vmatprep.mubr.f32.mxu0 0.0
        %3796 = vmatmul.mubr.f32.gmra.mxu0 %v3711
        %v3797 = vpop.f32.mrf.mxu0
        %v3798 = vadd.f32 0.0, %v3797
        %v3799 = vpop.f32.mrf.mxu0
        %3800 = vmatprep.mubr.f32.mxu0 0.0
        %3801 = vmatmul.mubr.f32.gmra.mxu0 %v3714
        %v3802 = vpop.f32.mrf.mxu0
        %v3803 = vadd.f32 0.0, %v3802
        %v3804 = vpop.f32.mrf.mxu0
        %3805 = vmatprep.mubr.f32.mxu0 0.0
        %3806 = vmatmul.mubr.f32.gmra.mxu0 %v3717
        %v3807 = vpop.f32.mrf.mxu0
        %v3808 = vadd.f32 0.0, %v3807
        %v3809 = vpop.f32.mrf.mxu0
        %3810 = vdwg.mxu0
        %3816 = vrot.lane.b32.xlu0 %v3166, 8
        %v3817 = vpop.permute.xlu0 %3816
        %3818 = vrot.lane.b32.xlu0 %v3171, 8
        %v3819 = vpop.permute.xlu0 %3818
        %3820 = vrot.lane.b32.xlu0 %v3176, 8
        %v3821 = vpop.permute.xlu0 %3820
        %3822 = vrot.lane.b32.xlu0 %v3181, 8
        %v3823 = vpop.permute.xlu0 %3822
        %3824 = vrot.lane.b32.xlu0 %v3186, 8
        %v3825 = vpop.permute.xlu0 %3824
        %3836 = vrot.lane.b32.xlu0 %v3477, 16
        %v3837 = vpop.permute.xlu0 %3836
        %3838 = vrot.lane.b32.xlu0 %v3482, 16
        %v3839 = vpop.permute.xlu0 %3838
        %3840 = vrot.lane.b32.xlu0 %v3487, 16
        %v3841 = vpop.permute.xlu0 %3840
        %3842 = vrot.lane.b32.xlu0 %v3492, 16
        %v3843 = vpop.permute.xlu0 %3842
        %3844 = vrot.lane.b32.xlu0 %v3497, 16
        %v3845 = vpop.permute.xlu0 %3844
        %3856 = vrot.lane.b32.xlu0 %v3788, 24
        %v3857 = vpop.permute.xlu0 %3856
        %3858 = vrot.lane.b32.xlu0 %v3793, 24
        %v3859 = vpop.permute.xlu0 %3858
        %3860 = vrot.lane.b32.xlu0 %v3798, 24
        %v3861 = vpop.permute.xlu0 %3860
        %3862 = vrot.lane.b32.xlu0 %v3803, 24
        %v3863 = vpop.permute.xlu0 %3862
        %3864 = vrot.lane.b32.xlu0 %v3808, 24
        %v3865 = vpop.permute.xlu0 %3864
        %v3871 = vsel %vm674, %v2855, %v3817
        %v3872 = vsel %vm674, %v2860, %v3819
        %v3873 = vsel %vm674, %v2865, %v3821
        %v3874 = vsel %vm674, %v2870, %v3823
        %v3875 = vsel %vm674, %v2875, %v3825
        %v3876 = vsel %vm1967, %v3871, %v3837
        %v3877 = vsel %vm1967, %v3872, %v3839
        %v3878 = vsel %vm1967, %v3873, %v3841
        %v3879 = vsel %vm1967, %v3874, %v3843
        %v3880 = vsel %vm1967, %v3875, %v3845
        %v3881 = vsel %vm1973, %v3876, %v3857
        %v3882 = vsel %vm1973, %v3877, %v3859
        %v3883 = vsel %vm1973, %v3878, %v3861
        %v3884 = vsel %vm1973, %v3879, %v3863
        %v3885 = vsel %vm1973, %v3880, %v3865
        %v3886 = vpack.c.bf16 %v3882, %v3881
        %v3887 = vpack.c.bf16 %v3884, %v3883
        %v3888 = vpack.c.bf16 %v3885, %v3885
        %s3889 = scalar_lea.vmem %s6, 16
        %v3890 = vld [vmem:[%s3889] sm:$0xf]
        %v3891 = vld [vmem:[%s3889 + $0x4] sm:$0xf]
        %v3892 = vld [vmem:[%s3889 + $0x8] sm:$0xf]
        %v3893 = vld [vmem:[%s3889 + $0xc] sm:$0xf]
        %v3894 = vlaneseq
        %v3895 = vshrl.u32 %v3894, 7
        %v3896 = vsub.s32 5, %v3895
        %v3897 = vrot.slane %v2399, %v3896
        %v3902 = vunpack.c.l.b16 %v3890
        %v3903 = vunpack.c.l.b16 %v3891
        %v3904 = vunpack.c.l.b16 %v3892
        %v3905 = vunpack.c.l.b16 %v3893
        %v3906 = vpack.c.b16 %v3903, %v3902
        %v3907 = vpack.c.b16 %v3905, %v3904
        %v3911 = vsel %vm485, %v3886, 0
        %v3914 = vsel %vm485, %v3887, 0
        %v3917 = vsel %vm485, %v3888, 0
        %3919 = vmatprep.subr.bf16.mxu0 0
        %3920 = vmatpush1.bf16.msra.mxu0 0
        %3921 = vmatprep.subr.bf16.mxu0 0
        %3922 = vmatpush1.bf16.msra.mxu0 0
        %3923 = vmatprep.subr.bf16.mxu0 0
        %3924 = vmatpush1.bf16.msra.mxu0 0
        %3925 = vmatprep.subr.bf16.mxu0 0
        %3926 = vmatpush1.bf16.msra.mxu0 0
        %3927 = vmatprep.subr.bf16.mxu0 0
        %3928 = vmatpush1.bf16.msra.mxu0 0
        %3929 = vmatprep.subr.bf16.mxu0 0
        %3930 = vmatpush1.bf16.msra.mxu0 0
        %3931 = vmatprep.subr.bf16.mxu0 0
        %3932 = vmatpush1.bf16.msra.mxu0 %v3907
        %3933 = vmatprep.subr.bf16.mxu0 0
        %3934 = vmatpush1.bf16.msra.mxu0 %v3906
        %3935 = vmatprep.subr.bf16.mxu0 0
        %3936 = vmatpush2.bf16.msra.mxu0 0
        %3937 = vmatprep.subr.bf16.mxu0 0
        %3938 = vmatpush2.bf16.msra.mxu0 0
        %3939 = vmatprep.subr.bf16.mxu0 0
        %3940 = vmatpush2.bf16.msra.mxu0 0
        %3941 = vmatprep.subr.bf16.mxu0 0
        %3942 = vmatpush2.bf16.msra.mxu0 0
        %3943 = vmatprep.subr.bf16.mxu0 0
        %3944 = vmatpush2.bf16.msra.mxu0 0
        %3945 = vmatprep.subr.bf16.mxu0 0
        %3946 = vmatpush2.bf16.msra.mxu0 0
        %3947 = vmatprep.subr.bf16.mxu0 0
        %3948 = vmatpush2.bf16.msra.mxu0 0
        %3949 = vmatprep.subr.bf16.mxu0 0
        %3950 = vmatpush2.bf16.msra.mxu0 0
        %3951 = vmatprep.mubr.bf16.mxu0 0
        %3952 = vmatmul.mubr.bf16.gmra.mxu0 %v3911
        %v3953 = vpop.f32.mrf.mxu0
        %v3954 = vadd.f32 %v3897, %v3953
        %v3955 = vpop.f32.mrf.mxu0
        %v3956 = vpop.f32.mrf.mxu0
        %v3957 = vadd.f32 %v3897, %v3956
        %v3958 = vpop.f32.mrf.mxu0
        %3959 = vmatprep.mubr.bf16.mxu0 0
        %3960 = vmatmul.mubr.bf16.gmra.mxu0 %v3914
        %v3961 = vpop.f32.mrf.mxu0
        %v3962 = vadd.f32 %v3897, %v3961
        %v3963 = vpop.f32.mrf.mxu0
        %v3964 = vpop.f32.mrf.mxu0
        %v3965 = vadd.f32 %v3897, %v3964
        %v3966 = vpop.f32.mrf.mxu0
        %3967 = vmatprep.mubr.bf16.mxu0 0
        %3968 = vmatmul.mubr.bf16.gmra.mxu0 %v3917
        %v3969 = vpop.f32.mrf.mxu0
        %v3970 = vadd.f32 %v3897, %v3969
        %v3971 = vpop.f32.mrf.mxu0
        %v3972 = vpop.f32.mrf.mxu0
        %v3973 = vpop.f32.mrf.mxu0
        %3974 = vdwg.mxu0
        %v3975 = vadd.f32 %v2393, %v3954
        %v3976 = vadd.f32 %v2394, %v3957
        %v3977 = vadd.f32 %v2395, %v3962
        %v3978 = vadd.f32 %v2396, %v3965
        %v3979 = vadd.f32 %v2397, %v3970
        %v3980 = vsel %vm485, %v3975, 0.0
        %3981 = vadd.xlane.f32.xlu0 %v3980
        %v3982 = vpop.xlane.xlu0 %3981
        %v3983 = vsel %vm485, %v3976, 0.0
        %3984 = vadd.xlane.f32.xlu0 %v3983
        %v3985 = vpop.xlane.xlu0 %3984
        %v3986 = vsel %vm485, %v3977, 0.0
        %3987 = vadd.xlane.f32.xlu0 %v3986
        %v3988 = vpop.xlane.xlu0 %3987
        %v3989 = vsel %vm485, %v3978, 0.0
        %3990 = vadd.xlane.f32.xlu0 %v3989
        %v3991 = vpop.xlane.xlu0 %3990
        %v3992 = vsel %vm498, %v3979, 0.0
        %3993 = vadd.xlane.f32.xlu0 %v3992
        %v3994 = vpop.xlane.xlu0 %3993
        %v3995 = vmul.f32 %v3982, %v502
        %v3996 = vmul.f32 %v3985, %v502
        %v3997 = vmul.f32 %v3988, %v502
        %v3998 = vmul.f32 %v3991, %v502
        %v3999 = vmul.f32 %v3994, %v502
        %v4000 = vsub.f32 %v3975, %v3995
        %v4001 = vsub.f32 %v3976, %v3996
        %v4002 = vsub.f32 %v3977, %v3997
        %v4003 = vsub.f32 %v3978, %v3998
        %v4004 = vsub.f32 %v3979, %v3999
        %v4005 = vmul.f32 %v4000, %v4000
        %v4006 = vmul.f32 %v4001, %v4001
        %v4007 = vmul.f32 %v4002, %v4002
        %v4008 = vmul.f32 %v4003, %v4003
        %v4009 = vmul.f32 %v4004, %v4004
        %v4010 = vsel %vm485, %v4005, 0.0
        %4011 = vadd.xlane.f32.xlu0 %v4010
        %v4012 = vpop.xlane.xlu0 %4011
        %v4013 = vsel %vm485, %v4006, 0.0
        %4014 = vadd.xlane.f32.xlu0 %v4013
        %v4015 = vpop.xlane.xlu0 %4014
        %v4016 = vsel %vm485, %v4007, 0.0
        %4017 = vadd.xlane.f32.xlu0 %v4016
        %v4018 = vpop.xlane.xlu0 %4017
        %v4019 = vsel %vm485, %v4008, 0.0
        %4020 = vadd.xlane.f32.xlu0 %v4019
        %v4021 = vpop.xlane.xlu0 %4020
        %v4022 = vsel %vm498, %v4009, 0.0
        %4023 = vadd.xlane.f32.xlu0 %v4022
        %v4024 = vpop.xlane.xlu0 %4023
        %v4025 = vmul.f32 %v4012, %v502
        %v4026 = vmul.f32 %v4015, %v502
        %v4027 = vmul.f32 %v4018, %v502
        %v4028 = vmul.f32 %v4021, %v502
        %v4029 = vmul.f32 %v4024, %v502
        %v4030 = vadd.f32 %v4025, 1e-06
        %v4031 = vadd.f32 %v4026, 1e-06
        %v4032 = vadd.f32 %v4027, 1e-06
        %v4033 = vadd.f32 %v4028, 1e-06
        %v4034 = vadd.f32 %v4029, 1e-06
        %v4035 = vrsqrt.pop %v4030
        %v4036 = vrsqrt.pop %v4031
        %v4037 = vrsqrt.pop %v4032
        %v4038 = vrsqrt.pop %v4033
        %v4039 = vrsqrt.pop %v4034
        %v4040 = vmul.f32 %v4000, %v4035
        %v4041 = vmul.f32 %v4001, %v4036
        %v4042 = vmul.f32 %v4002, %v4037
        %v4043 = vmul.f32 %v4003, %v4038
        %v4044 = vmul.f32 %v4004, %v4039
        %v4045 = vlaneseq
        %v4046 = vshrl.u32 %v4045, 7
        %v4047 = vsub.s32 2, %v4046
        %v4048 = vrot.slane %v2399, %v4047
        %v4049 = vmul.f32 %v4040, %v4048
        %v4050 = vmul.f32 %v4041, %v4048
        %v4051 = vmul.f32 %v4042, %v4048
        %v4052 = vmul.f32 %v4043, %v4048
        %v4053 = vmul.f32 %v4044, %v4048
        %v4054 = vlaneseq
        %v4055 = vshrl.u32 %v4054, 7
        %v4056 = vsub.s32 3, %v4055
        %v4057 = vrot.slane %v2399, %v4056
        %v4058 = vadd.f32 %v4049, %v4057
        %v4059 = vadd.f32 %v4050, %v4057
        %v4060 = vadd.f32 %v4051, %v4057
        %v4061 = vadd.f32 %v4052, %v4057
        %v4062 = vadd.f32 %v4053, %v4057
        %v4063 = vpack.c.bf16 %v4059, %v4058
        %v4064 = vpack.c.bf16 %v4061, %v4060
        %v4065 = vpack.c.bf16 %v4062, %v4062
        %s4066 = scalar_lea.vmem %s7, 16
        %v4067 = vld [vmem:[%s4066] sm:$0xf]
        %v4068 = vld [vmem:[%s4066 + $0x4] sm:$0xf]
        %v4069 = vld [vmem:[%s4066 + $0x8] sm:$0xf]
        %v4070 = vld [vmem:[%s4066 + $0xc] sm:$0xf]
        %v4071 = vlaneseq
        %v4072 = vshrl.u32 %v4071, 7
        %v4073 = vsub.s32 6, %v4072
        %v4074 = vrot.slane %v2399, %v4073
        %v4079 = vunpack.c.l.b16 %v4067
        %v4080 = vunpack.c.l.b16 %v4068
        %v4081 = vunpack.c.l.b16 %v4069
        %v4082 = vunpack.c.l.b16 %v4070
        %v4083 = vpack.c.b16 %v4080, %v4079
        %v4084 = vpack.c.b16 %v4082, %v4081
        %v4088 = vsel %vm485, %v4063, 0
        %v4091 = vsel %vm485, %v4064, 0
        %v4094 = vsel %vm485, %v4065, 0
        %4096 = vmatprep.subr.bf16.mxu0 0
        %4097 = vmatpush1.bf16.msra.mxu0 0
        %4098 = vmatprep.subr.bf16.mxu0 0
        %4099 = vmatpush1.bf16.msra.mxu0 0
        %4100 = vmatprep.subr.bf16.mxu0 0
        %4101 = vmatpush1.bf16.msra.mxu0 0
        %4102 = vmatprep.subr.bf16.mxu0 0
        %4103 = vmatpush1.bf16.msra.mxu0 0
        %4104 = vmatprep.subr.bf16.mxu0 0
        %4105 = vmatpush1.bf16.msra.mxu0 0
        %4106 = vmatprep.subr.bf16.mxu0 0
        %4107 = vmatpush1.bf16.msra.mxu0 0
        %4108 = vmatprep.subr.bf16.mxu0 0
        %4109 = vmatpush1.bf16.msra.mxu0 %v4084
        %4110 = vmatprep.subr.bf16.mxu0 0
        %4111 = vmatpush1.bf16.msra.mxu0 %v4083
        %4112 = vmatprep.subr.bf16.mxu0 0
        %4113 = vmatpush2.bf16.msra.mxu0 0
        %4114 = vmatprep.subr.bf16.mxu0 0
        %4115 = vmatpush2.bf16.msra.mxu0 0
        %4116 = vmatprep.subr.bf16.mxu0 0
        %4117 = vmatpush2.bf16.msra.mxu0 0
        %4118 = vmatprep.subr.bf16.mxu0 0
        %4119 = vmatpush2.bf16.msra.mxu0 0
        %4120 = vmatprep.subr.bf16.mxu0 0
        %4121 = vmatpush2.bf16.msra.mxu0 0
        %4122 = vmatprep.subr.bf16.mxu0 0
        %4123 = vmatpush2.bf16.msra.mxu0 0
        %4124 = vmatprep.subr.bf16.mxu0 0
        %4125 = vmatpush2.bf16.msra.mxu0 0
        %4126 = vmatprep.subr.bf16.mxu0 0
        %4127 = vmatpush2.bf16.msra.mxu0 0
        %4128 = vmatprep.mubr.bf16.mxu0 0
        %4129 = vmatmul.mubr.bf16.gmra.mxu0 %v4088
        %v4130 = vpop.f32.mrf.mxu0
        %v4131 = vadd.f32 %v4074, %v4130
        %v4132 = vpop.f32.mrf.mxu0
        %v4133 = vpop.f32.mrf.mxu0
        %v4134 = vadd.f32 %v4074, %v4133
        %v4135 = vpop.f32.mrf.mxu0
        %4136 = vmatprep.mubr.bf16.mxu0 0
        %4137 = vmatmul.mubr.bf16.gmra.mxu0 %v4091
        %v4138 = vpop.f32.mrf.mxu0
        %v4139 = vadd.f32 %v4074, %v4138
        %v4140 = vpop.f32.mrf.mxu0
        %v4141 = vpop.f32.mrf.mxu0
        %v4142 = vadd.f32 %v4074, %v4141
        %v4143 = vpop.f32.mrf.mxu0
        %4144 = vmatprep.mubr.bf16.mxu0 0
        %4145 = vmatmul.mubr.bf16.gmra.mxu0 %v4094
        %v4146 = vpop.f32.mrf.mxu0
        %v4147 = vadd.f32 %v4074, %v4146
        %v4148 = vpop.f32.mrf.mxu0
        %v4149 = vpop.f32.mrf.mxu0
        %v4150 = vpop.f32.mrf.mxu0
        %4151 = vdwg.mxu0
        %v4152 = vmul.f32 %v4131, 0.5
        %v4153 = vmul.f32 %v4134, 0.5
        %v4154 = vmul.f32 %v4139, 0.5
        %v4155 = vmul.f32 %v4142, 0.5
        %v4156 = vmul.f32 %v4147, 0.5
        %v4157 = vmul.f32 %v4131, 0.7978846
        %v4158 = vmul.f32 %v4134, 0.7978846
        %v4159 = vmul.f32 %v4139, 0.7978846
        %v4160 = vmul.f32 %v4142, 0.7978846
        %v4161 = vmul.f32 %v4147, 0.7978846
        %v4162 = vmul.f32 %v4131, 0.044715
        %v4163 = vmul.f32 %v4134, 0.044715
        %v4164 = vmul.f32 %v4139, 0.044715
        %v4165 = vmul.f32 %v4142, 0.044715
        %v4166 = vmul.f32 %v4147, 0.044715
        %v4167 = vmul.f32 %v4162, %v4131
        %v4168 = vmul.f32 %v4163, %v4134
        %v4169 = vmul.f32 %v4164, %v4139
        %v4170 = vmul.f32 %v4165, %v4142
        %v4171 = vmul.f32 %v4166, %v4147
        %v4172 = vadd.f32 %v4167, 1.0
        %v4173 = vadd.f32 %v4168, 1.0
        %v4174 = vadd.f32 %v4169, 1.0
        %v4175 = vadd.f32 %v4170, 1.0
        %v4176 = vadd.f32 %v4171, 1.0
        %v4177 = vmul.f32 %v4157, %v4172
        %v4178 = vmul.f32 %v4158, %v4173
        %v4179 = vmul.f32 %v4159, %v4174
        %v4180 = vmul.f32 %v4160, %v4175
        %v4181 = vmul.f32 %v4161, %v4176
        %v4182 = vtanh.pop %v4177
        %v4183 = vtanh.pop %v4178
        %v4184 = vtanh.pop %v4179
        %v4185 = vtanh.pop %v4180
        %v4186 = vtanh.pop %v4181
        %v4187 = vadd.f32 %v4182, 1.0
        %v4188 = vadd.f32 %v4183, 1.0
        %v4189 = vadd.f32 %v4184, 1.0
        %v4190 = vadd.f32 %v4185, 1.0
        %v4191 = vadd.f32 %v4186, 1.0
        %v4192 = vmul.f32 %v4152, %v4187
        %v4193 = vmul.f32 %v4153, %v4188
        %v4194 = vmul.f32 %v4154, %v4189
        %v4195 = vmul.f32 %v4155, %v4190
        %v4196 = vmul.f32 %v4156, %v4191
        %v4197 = vpack.c.bf16 %v4193, %v4192
        %v4198 = vpack.c.bf16 %v4195, %v4194
        %v4199 = vpack.c.bf16 %v4196, %v4196
        %s4200 = scalar_lea.vmem %s8, 32
        %v4201 = vld [vmem:[%s4200] sm:$0xf]
        %v4202 = vld [vmem:[%s4200 + $0x4] sm:$0xf]
        %v4203 = vld [vmem:[%s4200 + $0x8] sm:$0xf]
        %v4204 = vld [vmem:[%s4200 + $0xc] sm:$0xf]
        %v4205 = vld [vmem:[%s4200 + $0x10] sm:$0xf]
        %v4206 = vld [vmem:[%s4200 + $0x14] sm:$0xf]
        %v4207 = vld [vmem:[%s4200 + $0x18] sm:$0xf]
        %v4208 = vld [vmem:[%s4200 + $0x1c] sm:$0xf]
        %v4209 = vlaneseq
        %v4210 = vshrl.u32 %v4209, 7
        %v4211 = vsub.s32 7, %v4210
        %v4212 = vrot.slane %v2399, %v4211
        %v4221 = vunpack.c.l.b16 %v4201
        %v4222 = vunpack.c.l.b16 %v4202
        %v4223 = vunpack.c.l.b16 %v4203
        %v4224 = vunpack.c.l.b16 %v4204
        %v4225 = vunpack.c.l.b16 %v4205
        %v4226 = vunpack.c.l.b16 %v4206
        %v4227 = vunpack.c.l.b16 %v4207
        %v4228 = vunpack.c.l.b16 %v4208
        %v4229 = vpack.c.b16 %v4222, %v4221
        %v4230 = vpack.c.b16 %v4224, %v4223
        %v4231 = vpack.c.b16 %v4226, %v4225
        %v4232 = vpack.c.b16 %v4228, %v4227
        %v4238 = vsel %vm2327, %v4197, 0
        %v4241 = vsel %vm2327, %v4198, 0
        %v4244 = vsel %vm2327, %v4199, 0
        %4246 = vmatprep.subr.bf16.mxu0 0
        %4247 = vmatpush1.bf16.msra.mxu0 0
        %4248 = vmatprep.subr.bf16.mxu0 0
        %4249 = vmatpush1.bf16.msra.mxu0 0
        %4250 = vmatprep.subr.bf16.mxu0 0
        %4251 = vmatpush1.bf16.msra.mxu0 0
        %4252 = vmatprep.subr.bf16.mxu0 0
        %4253 = vmatpush1.bf16.msra.mxu0 0
        %4254 = vmatprep.subr.bf16.mxu0 0
        %4255 = vmatpush1.bf16.msra.mxu0 %v4232
        %4256 = vmatprep.subr.bf16.mxu0 0
        %4257 = vmatpush1.bf16.msra.mxu0 %v4231
        %4258 = vmatprep.subr.bf16.mxu0 0
        %4259 = vmatpush1.bf16.msra.mxu0 %v4230
        %4260 = vmatprep.subr.bf16.mxu0 0
        %4261 = vmatpush1.bf16.msra.mxu0 %v4229
        %4262 = vmatprep.subr.bf16.mxu0 0
        %4263 = vmatpush2.bf16.msra.mxu0 0
        %4264 = vmatprep.subr.bf16.mxu0 0
        %4265 = vmatpush2.bf16.msra.mxu0 0
        %4266 = vmatprep.subr.bf16.mxu0 0
        %4267 = vmatpush2.bf16.msra.mxu0 0
        %4268 = vmatprep.subr.bf16.mxu0 0
        %4269 = vmatpush2.bf16.msra.mxu0 0
        %4270 = vmatprep.subr.bf16.mxu0 0
        %4271 = vmatpush2.bf16.msra.mxu0 0
        %4272 = vmatprep.subr.bf16.mxu0 0
        %4273 = vmatpush2.bf16.msra.mxu0 0
        %4274 = vmatprep.subr.bf16.mxu0 0
        %4275 = vmatpush2.bf16.msra.mxu0 0
        %4276 = vmatprep.subr.bf16.mxu0 0
        %4277 = vmatpush2.bf16.msra.mxu0 0
        %4278 = vmatprep.mubr.bf16.mxu0 0
        %4279 = vmatmul.mubr.bf16.gmra.mxu0 %v4238
        %v4280 = vpop.f32.mrf.mxu0
        %v4281 = vpop.f32.mrf.mxu0
        %v4282 = vpop.f32.mrf.mxu0
        %v4283 = vpop.f32.mrf.mxu0
        %4284 = vmatprep.mubr.bf16.mxu0 0
        %4285 = vmatmul.mubr.bf16.gmra.mxu0 %v4241
        %v4286 = vpop.f32.mrf.mxu0
        %v4287 = vpop.f32.mrf.mxu0
        %v4288 = vpop.f32.mrf.mxu0
        %v4289 = vpop.f32.mrf.mxu0
        %4290 = vmatprep.mubr.bf16.mxu0 0
        %4291 = vmatmul.mubr.bf16.gmra.mxu0 %v4244
        %v4292 = vpop.f32.mrf.mxu0
        %v4293 = vadd.f32 %v4212, %v4292
        %v4294 = vpop.f32.mrf.mxu0
        %v4295 = vpop.f32.mrf.mxu0
        %v4296 = vpop.f32.mrf.mxu0
        %4297 = vdwg.mxu0
        %v4298 = vadd.f32 %v3979, %v4293
        %v4299 = vsel %vm498, %v4298, 0.0
        %4300 = vadd.xlane.f32.xlu0 %v4299
        %v4301 = vpop.xlane.xlu0 %4300
        %v4302 = vmul.f32 %v4301, %v502
        %v4303 = vsub.f32 %v4298, %v4302
        %v4304 = vmul.f32 %v4303, %v4303
        %v4305 = vsel %vm498, %v4304, 0.0
        %4306 = vadd.xlane.f32.xlu0 %v4305
        %v4307 = vpop.xlane.xlu0 %4306
        %v4308 = vmul.f32 %v4307, %v502
        %v4309 = vadd.f32 %v4308, 1e-06
        %v4310 = vrsqrt.pop %v4309
        %v4311 = vmul.f32 %v4303, %v4310
        %v4312 = vrot.slane %v358, 2
        %v4314 = vmul.f32 %v4311, %v4312
        %v4315 = vrot.slane %v358, 3
        %v4317 = vadd.f32 %v4314, %v4315
        %v4318 = vpack.c.bf16 %v4317, %v4317
        %v4319 = vld [vmem:[%s4] sm:$0xf]
        %v4320 = vld [vmem:[%s4 + $0x4] sm:$0xf]
        %v4321 = vld [vmem:[%s4 + $0x8] sm:$0xf]
        %v4322 = vld [vmem:[%s4 + $0xc] sm:$0xf]
        %v4327 = vunpack.c.l.b16 %v4319
        %v4328 = vunpack.c.l.b16 %v4320
        %v4329 = vunpack.c.l.b16 %v4321
        %v4330 = vunpack.c.l.b16 %v4322
        %v4331 = vpack.c.b16 %v4328, %v4327
        %v4332 = vpack.c.b16 %v4330, %v4329
        %v4335 = vrot.slane %v358, 4
        %v4338 = vsel %vm485, %v4318, 0
        %4340 = vmatprep.subr.bf16.mxu0 0
        %4341 = vmatpush1.bf16.msra.mxu0 0
        %4342 = vmatprep.subr.bf16.mxu0 0
        %4343 = vmatpush1.bf16.msra.mxu0 0
        %4344 = vmatprep.subr.bf16.mxu0 0
        %4345 = vmatpush1.bf16.msra.mxu0 0
        %4346 = vmatprep.subr.bf16.mxu0 0
        %4347 = vmatpush1.bf16.msra.mxu0 0
        %4348 = vmatprep.subr.bf16.mxu0 0
        %4349 = vmatpush1.bf16.msra.mxu0 0
        %4350 = vmatprep.subr.bf16.mxu0 0
        %4351 = vmatpush1.bf16.msra.mxu0 0
        %4352 = vmatprep.subr.bf16.mxu0 0
        %4353 = vmatpush1.bf16.msra.mxu0 %v4332
        %4354 = vmatprep.subr.bf16.mxu0 0
        %4355 = vmatpush1.bf16.msra.mxu0 %v4331
        %4356 = vmatprep.subr.bf16.mxu0 0
        %4357 = vmatpush2.bf16.msra.mxu0 0
        %4358 = vmatprep.subr.bf16.mxu0 0
        %4359 = vmatpush2.bf16.msra.mxu0 0
        %4360 = vmatprep.subr.bf16.mxu0 0
        %4361 = vmatpush2.bf16.msra.mxu0 0
        %4362 = vmatprep.subr.bf16.mxu0 0
        %4363 = vmatpush2.bf16.msra.mxu0 0
        %4364 = vmatprep.subr.bf16.mxu0 0
        %4365 = vmatpush2.bf16.msra.mxu0 0
        %4366 = vmatprep.subr.bf16.mxu0 0
        %4367 = vmatpush2.bf16.msra.mxu0 0
        %4368 = vmatprep.subr.bf16.mxu0 0
        %4369 = vmatpush2.bf16.msra.mxu0 0
        %4370 = vmatprep.subr.bf16.mxu0 0
        %4371 = vmatpush2.bf16.msra.mxu0 0
        %4372 = vmatprep.mubr.bf16.mxu0 0
        %4373 = vmatmul.mubr.bf16.gmra.mxu0 %v4338
        %v4374 = vpop.f32.mrf.mxu0
        %v4375 = vadd.f32 %v4335, %v4374
        %v4376 = vpop.f32.mrf.mxu0
        %v4377 = vpop.f32.mrf.mxu0
        %v4378 = vpop.f32.mrf.mxu0
        %4379 = vdwg.mxu0
        %4380 = vst [vmem:[%s351] sm:$0x1] %v4375
        %s4381 = sand.u32 %s247, 1
        %s4382 = scalar_lea.sflag [#allocation3], %s4381
        %s4383 = sand.u32 %s247, 1
        %s4384 = scalar_lea.vmem [#allocation2], %s4383
        // Predicated region
        $region61: #{vivit_forward.1} parent=59 // pred_check
          %p4385 = pneg %p257
        $region62: #{vivit_forward.1} parent=59 // pred_check_branch
          %4387 = sbr.rel (%p4385) target = $region64
        $region63: #{vivit_forward.1} parent=59 // pred_region
          %s4389 = ssub.s32 16, 16
          %4390 = vsyncadd %s4382, %s4389
          %s4391 = smul.addr %s24, 16
          %s4392 = scalar_lea.hbm %s10, %s4391
          %s4394 = sshll.u32 %s4384, 4
          %s4395 = int_to_ptr.vmem [resolvable:$true] %s4394
          %4397 = dma.vmem_to_hbm [thread:$0]  %s4395, 16, %s4392, %s4382
        $region64: #{vivit_forward.1} parent=59 // pred_fallthru
          _
      $region60: #{vivit_forward.1} parent=5 // pred_fallthru
        _
      %p4398 = scmp.le.s32.totalorder 2, %s19
      // Predicated region
      $region65: #{vivit_forward.1} parent=5 // pred_check
        %p4399 = pneg %p4398
      $region66: #{vivit_forward.1} parent=5 // pred_check_branch
        %4401 = sbr.rel (%p4399) target = $region68
      $region67: #{vivit_forward.1} parent=5 // pred_region
        %s4402 = ssub.s32 %s19, 2
        // Predicated region
        $region69: #{vivit_forward.1} parent=67 // pred_check
          %p4403 = pneg %p263
        $region70: #{vivit_forward.1} parent=67 // pred_check_branch
          %4405 = sbr.rel (%p4403) target = $region72
        $region71: #{vivit_forward.1} parent=67 // pred_region
          %s4406 = sand.u32 %s248, 1
          %s4407 = scalar_lea.sflag [#allocation3], %s4406
          %s4408 = sand.u32 %s248, 1
          %s4409 = scalar_lea.vmem [#allocation2], %s4408
          %4410 = dma.done %s4407, 16
        $region72: #{vivit_forward.1} parent=67 // pred_fallthru
          _
      $region68: #{vivit_forward.1} parent=5 // pred_fallthru
        _
    $region6: #{vivit_forward.1} parent=1 // loop_footer
      %s23 = sadd.s32 1, %s19
    $region7: #{vivit_forward.1} parent=1 // loop_footer_branch
      %18 = sbr.rel target = $region3
    $region8: #{vivit_forward.1} parent=1 // loop_exit
      _
    %4411 = vsyncpa [#allocation3], 1
    %s4412 = scalar_lea.sflag [#allocation3], 1
    %4413 = vsyncpa %s4412, 1

</llo_original>
